<compile_context>
chip_gen: v5e
topology: v5e:2x2
jax: 0.10.0
libtpu: 0.0.40
codegen_flags: <defaults>
</compile_context>

<pallas_src>
import functools

import jax
import jax.numpy as jnp
from jax import lax
from jax.experimental import pallas as pl
from jax.experimental.pallas import tpu as pltpu

# AlexNet features[0..2] hyper-parameters (fixed by torchvision's definition).
CIN, COUT, KH, KW, STRIDE, PAD = 3, 64, 11, 11, 4, 2
POOL, PSTRIDE = 3, 2
FEATURES_LAYER = 2           # documented choice
COUT_PAD = 128               # pad output channels to a full 128-lane tile
QH = -(-KH // STRIDE)        # 3   kernel taps per stride phase (H)
QW = -(-KW // STRIDE)        # 3   kernel taps per stride phase (W)
PK = STRIDE * STRIDE * CIN   # 48  phase-folded contraction depth per tap

# TODO(synk): pretrained torchvision weights cannot be loaded here; parameters are
# initialized deterministically in-script with the same shapes.


# ---------------- Pallas kernel (fully fused hot path) ----------------

def fused_conv_relu_pool_kernel(x_ref, w_ref, b_ref, o_ref, *, oh, ow_p, ph, pw):
    """features[0..2] fused: conv(11x11,s4,p2) + bias + ReLU + maxpool(3,s2).

    x_ref : (1, TH, TW_P, PK)      bf16  stride-phase folded padded input (one image)
    w_ref : (QH*QW, PK, COUT_PAD)  bf16  per-tap weight slabs (resident across grid)
    b_ref : (1, COUT_PAD)          f32
    o_ref : (1, COUT, ph*pw)       f32   pooled activation, channel-major (NCHW order)
    """
    m = oh * ow_p

    # --- conv as 9 accumulated lane-dense MXU matmuls (bf16 x bf16 -> f32 acc) ---
    acc = None
    for q_h in range(QH):
        for q_w in range(QW):
            a = x_ref[0, q_h:q_h + oh, q_w:q_w + ow_p, :].reshape(m, PK)
            d = jnp.dot(a, w_ref[q_h * QW + q_w],
                        preferred_element_type=jnp.float32)
            acc = d if acc is None else acc + d

    # --- fused bias + ReLU epilogue ---
    conv = jnp.maximum(acc + b_ref[...], 0.0).reshape(oh, ow_p, COUT_PAD)

    # --- separable 3x3 / stride-2 max pool: 7 column maxes then 7 row maxes ---
    cols = [jnp.max(conv[:, PSTRIDE * j:PSTRIDE * j + POOL, :], axis=1)
            for j in range(pw)]
    wmax = jnp.stack(cols, axis=1)                     # (oh, pw, COUT_PAD)
    rows = [jnp.max(wmax[PSTRIDE * i:PSTRIDE * i + POOL, :, :], axis=0)
            for i in range(ph)]
    pooled = jnp.stack(rows, axis=0)                   # (ph, pw, COUT_PAD)

    # --- channel-major (= NCHW flatten order) output, transposed in-kernel ---
    o_ref[0, :, :] = pooled[:, :, :COUT].reshape(ph * pw, COUT).T


# ---------------- wrapper (cheap layout plumbing only, no im2col blowup) ----------------

def model_forward(x, w, b):
    """Equivalent of Model.forward with features_layer=2, last=Flatten."""
    n, cin, h, wd = x.shape
    assert cin == CIN

    oh = (h + 2 * PAD - KH) // STRIDE + 1          # conv output H
    ow = (wd + 2 * PAD - KW) // STRIDE + 1         # conv output W
    ph = (oh - POOL) // PSTRIDE + 1                # pool output H
    pw = (ow - POOL) // PSTRIDE + 1                # pool output W
    th = oh + QH - 1                               # phase-grid rows needed
    tw = ow + QW - 1
    ow_p = -(-ow // 8) * 8                         # pad OW so (oh, ow_p)->M reshape is aligned
    tw_p = max(tw, ow_p + QW - 1)                  # width reached by the shifted kernel views

    # ---- input: NCHW -> padded NHWC -> stride-phase folded (N, TH, TW_P, PK), bf16 ----
    hp, wp = STRIDE * th, STRIDE * tw
    xb = x.astype(jnp.bfloat16)
    x_nhwc = jnp.transpose(xb, (0, 2, 3, 1))
    x_padded = jnp.pad(x_nhwc, ((0, 0), (PAD, hp - h - PAD), (PAD, wp - wd - PAD), (0, 0)))
    x_ph = x_padded.reshape(n, th, STRIDE, tw, STRIDE, CIN)
    x_ph = x_ph.transpose(0, 1, 3, 2, 4, 5).reshape(n, th, tw, PK)
    x_ph = jnp.pad(x_ph, ((0, 0), (0, 0), (0, tw_p - tw), (0, 0)))        # (n, th, tw_p, PK)

    # ---- weights: zero-extend kernel to (QH*4, QW*4), fold phases, pad COUT to 128 ----
    w_ext = jnp.pad(w, ((0, 0), (0, 0), (0, QH * STRIDE - KH), (0, QW * STRIDE - KW)))
    w_q = w_ext.reshape(COUT, CIN, QH, STRIDE, QW, STRIDE)
    w_q = w_q.transpose(2, 4, 3, 5, 1, 0).reshape(QH * QW, PK, COUT)
    w_q = jnp.pad(w_q, ((0, 0), (0, 0), (0, COUT_PAD - COUT))).astype(jnp.bfloat16)
    b_p = jnp.pad(b, (0, COUT_PAD - COUT)).reshape(1, COUT_PAD).astype(jnp.float32)

    kernel = functools.partial(fused_conv_relu_pool_kernel,
                               oh=oh, ow_p=ow_p, ph=ph, pw=pw)
    pooled = pl.pallas_call(
        kernel,
        out_shape=jax.ShapeDtypeStruct((n, COUT, ph * pw), jnp.float32),
        grid=(n,),
        in_specs=[
            pl.BlockSpec((1, th, tw_p, PK), lambda i: (i, 0, 0, 0)),        # per-image input
            pl.BlockSpec((QH * QW, PK, COUT_PAD), lambda i: (0, 0, 0)),     # resident weights
            pl.BlockSpec((1, COUT_PAD), lambda i: (0, 0)),                  # resident bias
        ],
        out_specs=pl.BlockSpec((1, COUT, ph * pw), lambda i: (i, 0, 0)),
        compiler_params=pltpu.CompilerParams(dimension_semantics=("parallel",)),
    )(x_ph, w_q, b_p)

    # self.last(x) with last = nn.Flatten(); pooled is already in NCHW channel-major order.
    return pooled.reshape(n, -1)


# ---------------- pure-JAX reference for correctness ----------------

def reference(x, w, b):
    conv = lax.conv_general_dilated(
        x, w, window_strides=(STRIDE, STRIDE),
        padding=((PAD, PAD), (PAD, PAD)),
        dimension_numbers=("NCHW", "OIHW", "NCHW"),
        precision=lax.Precision.HIGHEST)
    conv = jnp.maximum(conv + b.reshape(1, COUT, 1, 1), 0.0)
    pooled = lax.reduce_window(conv, -jnp.inf, lax.max,
                               (1, 1, POOL, POOL),
                               (1, 1, PSTRIDE, PSTRIDE), "VALID")
    return pooled.reshape(x.shape[0], -1)


if __name__ == "__main__":
    key = jax.random.PRNGKey(0)
    kx, kw_, kb = jax.random.split(key, 3)

    # Small input consistent with AlexNet's 3-channel conv stem: N=2, C=3, H=W=63.
    x = jax.random.normal(kx, (2, CIN, 63, 63), dtype=jnp.float32)
    # Deterministic synthetic parameters with AlexNet features[0] shapes.
    w = jax.random.normal(kw_, (COUT, CIN, KH, KW), dtype=jnp.float32) * 0.05
    b = jax.random.normal(kb, (COUT,), dtype=jnp.float32) * 0.05

    out = jax.jit(model_forward)(x, w, b)
    out = jax.block_until_ready(out)

    # Reference with the same bf16 operand quantization (accumulation stays f32).
    xq = x.astype(jnp.bfloat16).astype(jnp.float32)
    wq = w.astype(jnp.bfloat16).astype(jnp.float32)
    ref = reference(xq, wq, b)

    assert out.shape == ref.shape, (out.shape, ref.shape)
    assert jnp.allclose(out, ref, atol=1e-2, rtol=1e-2), \
        float(jnp.max(jnp.abs(out - ref)))

    print("KERNEL_OK")
</pallas_src>

<mosaic_0001>
module attributes {stable_mosaic.version = 11 : i64} {
  func.func @fused_conv_relu_pool_kernel(%arg0: i32, %arg1: memref<1x17x18x48xbf16, #tpu.memory_space<vmem>>, %arg2: memref<9x48x128xbf16, #tpu.memory_space<vmem>>, %arg3: memref<1x128xf32, #tpu.memory_space<vmem>>, %arg4: memref<1x64x49xf32, #tpu.memory_space<vmem>>) attributes {dimension_semantics = [#tpu.dimension_semantics<parallel>], iteration_bounds = array<i64: 2>, scalar_prefetch = 0 : i64, scratch_operands = 0 : i64, tpu.core_type = #tpu.core_type<tc>, window_params = [{transform_indices = @transform_0, window_bounds = array<i64: 1, 17, 18, 48>}, {pipeline_mode = #tpu.pipeline_mode<synchronous>, transform_indices = @transform_1, window_bounds = array<i64: 9, 48, 128>}, {pipeline_mode = #tpu.pipeline_mode<synchronous>, transform_indices = @transform_2, window_bounds = array<i64: 1, 128>}, {transform_indices = @transform_3, window_bounds = array<i64: 1, 64, 49>}]} {
    %c0 = arith.constant 0 : index
    %c0_0 = arith.constant 0 : index
    %c0_1 = arith.constant 0 : index
    %c0_2 = arith.constant 0 : index
    %0 = vector.load %arg1[%c0, %c0_0, %c0_1, %c0_2] : memref<1x17x18x48xbf16, #tpu.memory_space<vmem>>, vector<1x15x16x48xbf16>
    %1 = vector.shape_cast %0 : vector<1x15x16x48xbf16> to vector<15x16x48xbf16>
    %2 = vector.shape_cast %1 : vector<15x16x48xbf16> to vector<240x48xbf16>
    %c0_3 = arith.constant 0 : index
    %c0_4 = arith.constant 0 : index
    %c0_5 = arith.constant 0 : index
    %3 = vector.load %arg2[%c0_3, %c0_4, %c0_5] : memref<9x48x128xbf16, #tpu.memory_space<vmem>>, vector<1x48x128xbf16>
    %4 = vector.shape_cast %3 : vector<1x48x128xbf16> to vector<48x128xbf16>
    %cst = arith.constant dense<0.000000e+00> : vector<240x128xf32>
    %5 = tpu.matmul %2, %4, %cst {dimension_numbers = #tpu.dot_dimension_numbers<[1], [0], [0], [1], [0, 0, 1, 1], [], []>} : vector<240x48xbf16>, vector<48x128xbf16>, vector<240x128xf32> -> vector<240x128xf32>
    %c0_6 = arith.constant 0 : index
    %c0_7 = arith.constant 0 : index
    %c1 = arith.constant 1 : index
    %c0_8 = arith.constant 0 : index
    %6 = vector.load %arg1[%c0_6, %c0_7, %c1, %c0_8] : memref<1x17x18x48xbf16, #tpu.memory_space<vmem>>, vector<1x15x16x48xbf16>
    %7 = vector.shape_cast %6 : vector<1x15x16x48xbf16> to vector<15x16x48xbf16>
    %8 = vector.shape_cast %7 : vector<15x16x48xbf16> to vector<240x48xbf16>
    %c1_9 = arith.constant 1 : index
    %c0_10 = arith.constant 0 : index
    %c0_11 = arith.constant 0 : index
    %9 = vector.load %arg2[%c1_9, %c0_10, %c0_11] : memref<9x48x128xbf16, #tpu.memory_space<vmem>>, vector<1x48x128xbf16>
    %10 = vector.shape_cast %9 : vector<1x48x128xbf16> to vector<48x128xbf16>
    %cst_12 = arith.constant dense<0.000000e+00> : vector<240x128xf32>
    %11 = tpu.matmul %8, %10, %cst_12 {dimension_numbers = #tpu.dot_dimension_numbers<[1], [0], [0], [1], [0, 0, 1, 1], [], []>} : vector<240x48xbf16>, vector<48x128xbf16>, vector<240x128xf32> -> vector<240x128xf32>
    %12 = arith.addf %5, %11 : vector<240x128xf32>
    %c0_13 = arith.constant 0 : index
    %c0_14 = arith.constant 0 : index
    %c2 = arith.constant 2 : index
    %c0_15 = arith.constant 0 : index
    %13 = vector.load %arg1[%c0_13, %c0_14, %c2, %c0_15] : memref<1x17x18x48xbf16, #tpu.memory_space<vmem>>, vector<1x15x16x48xbf16>
    %14 = vector.shape_cast %13 : vector<1x15x16x48xbf16> to vector<15x16x48xbf16>
    %15 = vector.shape_cast %14 : vector<15x16x48xbf16> to vector<240x48xbf16>
    %c2_16 = arith.constant 2 : index
    %c0_17 = arith.constant 0 : index
    %c0_18 = arith.constant 0 : index
    %16 = vector.load %arg2[%c2_16, %c0_17, %c0_18] : memref<9x48x128xbf16, #tpu.memory_space<vmem>>, vector<1x48x128xbf16>
    %17 = vector.shape_cast %16 : vector<1x48x128xbf16> to vector<48x128xbf16>
    %cst_19 = arith.constant dense<0.000000e+00> : vector<240x128xf32>
    %18 = tpu.matmul %15, %17, %cst_19 {dimension_numbers = #tpu.dot_dimension_numbers<[1], [0], [0], [1], [0, 0, 1, 1], [], []>} : vector<240x48xbf16>, vector<48x128xbf16>, vector<240x128xf32> -> vector<240x128xf32>
    %19 = arith.addf %12, %18 : vector<240x128xf32>
    %c0_20 = arith.constant 0 : index
    %c1_21 = arith.constant 1 : index
    %c0_22 = arith.constant 0 : index
    %c0_23 = arith.constant 0 : index
    %20 = vector.load %arg1[%c0_20, %c1_21, %c0_22, %c0_23] : memref<1x17x18x48xbf16, #tpu.memory_space<vmem>>, vector<1x15x16x48xbf16>
    %21 = vector.shape_cast %20 : vector<1x15x16x48xbf16> to vector<15x16x48xbf16>
    %22 = vector.shape_cast %21 : vector<15x16x48xbf16> to vector<240x48xbf16>
    %c3 = arith.constant 3 : index
    %c0_24 = arith.constant 0 : index
    %c0_25 = arith.constant 0 : index
    %23 = vector.load %arg2[%c3, %c0_24, %c0_25] : memref<9x48x128xbf16, #tpu.memory_space<vmem>>, vector<1x48x128xbf16>
    %24 = vector.shape_cast %23 : vector<1x48x128xbf16> to vector<48x128xbf16>
    %cst_26 = arith.constant dense<0.000000e+00> : vector<240x128xf32>
    %25 = tpu.matmul %22, %24, %cst_26 {dimension_numbers = #tpu.dot_dimension_numbers<[1], [0], [0], [1], [0, 0, 1, 1], [], []>} : vector<240x48xbf16>, vector<48x128xbf16>, vector<240x128xf32> -> vector<240x128xf32>
    %26 = arith.addf %19, %25 : vector<240x128xf32>
    %c0_27 = arith.constant 0 : index
    %c1_28 = arith.constant 1 : index
    %c1_29 = arith.constant 1 : index
    %c0_30 = arith.constant 0 : index
    %27 = vector.load %arg1[%c0_27, %c1_28, %c1_29, %c0_30] : memref<1x17x18x48xbf16, #tpu.memory_space<vmem>>, vector<1x15x16x48xbf16>
    %28 = vector.shape_cast %27 : vector<1x15x16x48xbf16> to vector<15x16x48xbf16>
    %29 = vector.shape_cast %28 : vector<15x16x48xbf16> to vector<240x48xbf16>
    %c4 = arith.constant 4 : index
    %c0_31 = arith.constant 0 : index
    %c0_32 = arith.constant 0 : index
    %30 = vector.load %arg2[%c4, %c0_31, %c0_32] : memref<9x48x128xbf16, #tpu.memory_space<vmem>>, vector<1x48x128xbf16>
    %31 = vector.shape_cast %30 : vector<1x48x128xbf16> to vector<48x128xbf16>
    %cst_33 = arith.constant dense<0.000000e+00> : vector<240x128xf32>
    %32 = tpu.matmul %29, %31, %cst_33 {dimension_numbers = #tpu.dot_dimension_numbers<[1], [0], [0], [1], [0, 0, 1, 1], [], []>} : vector<240x48xbf16>, vector<48x128xbf16>, vector<240x128xf32> -> vector<240x128xf32>
    %33 = arith.addf %26, %32 : vector<240x128xf32>
    %c0_34 = arith.constant 0 : index
    %c1_35 = arith.constant 1 : index
    %c2_36 = arith.constant 2 : index
    %c0_37 = arith.constant 0 : index
    %34 = vector.load %arg1[%c0_34, %c1_35, %c2_36, %c0_37] : memref<1x17x18x48xbf16, #tpu.memory_space<vmem>>, vector<1x15x16x48xbf16>
    %35 = vector.shape_cast %34 : vector<1x15x16x48xbf16> to vector<15x16x48xbf16>
    %36 = vector.shape_cast %35 : vector<15x16x48xbf16> to vector<240x48xbf16>
    %c5 = arith.constant 5 : index
    %c0_38 = arith.constant 0 : index
    %c0_39 = arith.constant 0 : index
    %37 = vector.load %arg2[%c5, %c0_38, %c0_39] : memref<9x48x128xbf16, #tpu.memory_space<vmem>>, vector<1x48x128xbf16>
    %38 = vector.shape_cast %37 : vector<1x48x128xbf16> to vector<48x128xbf16>
    %cst_40 = arith.constant dense<0.000000e+00> : vector<240x128xf32>
    %39 = tpu.matmul %36, %38, %cst_40 {dimension_numbers = #tpu.dot_dimension_numbers<[1], [0], [0], [1], [0, 0, 1, 1], [], []>} : vector<240x48xbf16>, vector<48x128xbf16>, vector<240x128xf32> -> vector<240x128xf32>
    %40 = arith.addf %33, %39 : vector<240x128xf32>
    %c0_41 = arith.constant 0 : index
    %c2_42 = arith.constant 2 : index
    %c0_43 = arith.constant 0 : index
    %c0_44 = arith.constant 0 : index
    %41 = vector.load %arg1[%c0_41, %c2_42, %c0_43, %c0_44] : memref<1x17x18x48xbf16, #tpu.memory_space<vmem>>, vector<1x15x16x48xbf16>
    %42 = vector.shape_cast %41 : vector<1x15x16x48xbf16> to vector<15x16x48xbf16>
    %43 = vector.shape_cast %42 : vector<15x16x48xbf16> to vector<240x48xbf16>
    %c6 = arith.constant 6 : index
    %c0_45 = arith.constant 0 : index
    %c0_46 = arith.constant 0 : index
    %44 = vector.load %arg2[%c6, %c0_45, %c0_46] : memref<9x48x128xbf16, #tpu.memory_space<vmem>>, vector<1x48x128xbf16>
    %45 = vector.shape_cast %44 : vector<1x48x128xbf16> to vector<48x128xbf16>
    %cst_47 = arith.constant dense<0.000000e+00> : vector<240x128xf32>
    %46 = tpu.matmul %43, %45, %cst_47 {dimension_numbers = #tpu.dot_dimension_numbers<[1], [0], [0], [1], [0, 0, 1, 1], [], []>} : vector<240x48xbf16>, vector<48x128xbf16>, vector<240x128xf32> -> vector<240x128xf32>
    %47 = arith.addf %40, %46 : vector<240x128xf32>
    %c0_48 = arith.constant 0 : index
    %c2_49 = arith.constant 2 : index
    %c1_50 = arith.constant 1 : index
    %c0_51 = arith.constant 0 : index
    %48 = vector.load %arg1[%c0_48, %c2_49, %c1_50, %c0_51] : memref<1x17x18x48xbf16, #tpu.memory_space<vmem>>, vector<1x15x16x48xbf16>
    %49 = vector.shape_cast %48 : vector<1x15x16x48xbf16> to vector<15x16x48xbf16>
    %50 = vector.shape_cast %49 : vector<15x16x48xbf16> to vector<240x48xbf16>
    %c7 = arith.constant 7 : index
    %c0_52 = arith.constant 0 : index
    %c0_53 = arith.constant 0 : index
    %51 = vector.load %arg2[%c7, %c0_52, %c0_53] : memref<9x48x128xbf16, #tpu.memory_space<vmem>>, vector<1x48x128xbf16>
    %52 = vector.shape_cast %51 : vector<1x48x128xbf16> to vector<48x128xbf16>
    %cst_54 = arith.constant dense<0.000000e+00> : vector<240x128xf32>
    %53 = tpu.matmul %50, %52, %cst_54 {dimension_numbers = #tpu.dot_dimension_numbers<[1], [0], [0], [1], [0, 0, 1, 1], [], []>} : vector<240x48xbf16>, vector<48x128xbf16>, vector<240x128xf32> -> vector<240x128xf32>
    %54 = arith.addf %47, %53 : vector<240x128xf32>
    %c0_55 = arith.constant 0 : index
    %c2_56 = arith.constant 2 : index
    %c2_57 = arith.constant 2 : index
    %c0_58 = arith.constant 0 : index
    %55 = vector.load %arg1[%c0_55, %c2_56, %c2_57, %c0_58] : memref<1x17x18x48xbf16, #tpu.memory_space<vmem>>, vector<1x15x16x48xbf16>
    %56 = vector.shape_cast %55 : vector<1x15x16x48xbf16> to vector<15x16x48xbf16>
    %57 = vector.shape_cast %56 : vector<15x16x48xbf16> to vector<240x48xbf16>
    %c8 = arith.constant 8 : index
    %c0_59 = arith.constant 0 : index
    %c0_60 = arith.constant 0 : index
    %58 = vector.load %arg2[%c8, %c0_59, %c0_60] : memref<9x48x128xbf16, #tpu.memory_space<vmem>>, vector<1x48x128xbf16>
    %59 = vector.shape_cast %58 : vector<1x48x128xbf16> to vector<48x128xbf16>
    %cst_61 = arith.constant dense<0.000000e+00> : vector<240x128xf32>
    %60 = tpu.matmul %57, %59, %cst_61 {dimension_numbers = #tpu.dot_dimension_numbers<[1], [0], [0], [1], [0, 0, 1, 1], [], []>} : vector<240x48xbf16>, vector<48x128xbf16>, vector<240x128xf32> -> vector<240x128xf32>
    %61 = arith.addf %54, %60 : vector<240x128xf32>
    %c0_62 = arith.constant 0 : index
    %c0_63 = arith.constant 0 : index
    %62 = vector.load %arg3[%c0_62, %c0_63] : memref<1x128xf32, #tpu.memory_space<vmem>>, vector<1x128xf32>
    %63 = vector.broadcast %62 : vector<1x128xf32> to vector<240x128xf32>
    %64 = arith.addf %61, %63 : vector<240x128xf32>
    %cst_64 = arith.constant 0.000000e+00 : f32
    %65 = vector.broadcast %cst_64 : f32 to vector<240x128xf32>
    %66 = arith.maximumf %64, %65 : vector<240x128xf32>
    %67 = vector.shape_cast %66 : vector<240x128xf32> to vector<15x16x128xf32>
    %68 = vector.extract_strided_slice %67 {offsets = [0, 0, 0], sizes = [15, 3, 128], strides = [1, 1, 1]} : vector<15x16x128xf32> to vector<15x3x128xf32>
    %cst_65 = arith.constant dense<0xFF800000> : vector<15x128xf32>
    %69 = vector.multi_reduction <maximumf>, %68, %cst_65 [1] : vector<15x3x128xf32> to vector<15x128xf32>
    %70 = vector.extract_strided_slice %67 {offsets = [0, 2, 0], sizes = [15, 3, 128], strides = [1, 1, 1]} : vector<15x16x128xf32> to vector<15x3x128xf32>
    %cst_66 = arith.constant dense<0xFF800000> : vector<15x128xf32>
    %71 = vector.multi_reduction <maximumf>, %70, %cst_66 [1] : vector<15x3x128xf32> to vector<15x128xf32>
    %72 = vector.extract_strided_slice %67 {offsets = [0, 4, 0], sizes = [15, 3, 128], strides = [1, 1, 1]} : vector<15x16x128xf32> to vector<15x3x128xf32>
    %cst_67 = arith.constant dense<0xFF800000> : vector<15x128xf32>
    %73 = vector.multi_reduction <maximumf>, %72, %cst_67 [1] : vector<15x3x128xf32> to vector<15x128xf32>
    %74 = vector.extract_strided_slice %67 {offsets = [0, 6, 0], sizes = [15, 3, 128], strides = [1, 1, 1]} : vector<15x16x128xf32> to vector<15x3x128xf32>
    %cst_68 = arith.constant dense<0xFF800000> : vector<15x128xf32>
    %75 = vector.multi_reduction <maximumf>, %74, %cst_68 [1] : vector<15x3x128xf32> to vector<15x128xf32>
    %76 = vector.extract_strided_slice %67 {offsets = [0, 8, 0], sizes = [15, 3, 128], strides = [1, 1, 1]} : vector<15x16x128xf32> to vector<15x3x128xf32>
    %cst_69 = arith.constant dense<0xFF800000> : vector<15x128xf32>
    %77 = vector.multi_reduction <maximumf>, %76, %cst_69 [1] : vector<15x3x128xf32> to vector<15x128xf32>
    %78 = vector.extract_strided_slice %67 {offsets = [0, 10, 0], sizes = [15, 3, 128], strides = [1, 1, 1]} : vector<15x16x128xf32> to vector<15x3x128xf32>
    %cst_70 = arith.constant dense<0xFF800000> : vector<15x128xf32>
    %79 = vector.multi_reduction <maximumf>, %78, %cst_70 [1] : vector<15x3x128xf32> to vector<15x128xf32>
    %80 = vector.extract_strided_slice %67 {offsets = [0, 12, 0], sizes = [15, 3, 128], strides = [1, 1, 1]} : vector<15x16x128xf32> to vector<15x3x128xf32>
    %cst_71 = arith.constant dense<0xFF800000> : vector<15x128xf32>
    %81 = vector.multi_reduction <maximumf>, %80, %cst_71 [1] : vector<15x3x128xf32> to vector<15x128xf32>
    %82 = vector.shape_cast %69 : vector<15x128xf32> to vector<15x1x128xf32>
    %83 = vector.shape_cast %71 : vector<15x128xf32> to vector<15x1x128xf32>
    %84 = vector.shape_cast %73 : vector<15x128xf32> to vector<15x1x128xf32>
    %85 = vector.shape_cast %75 : vector<15x128xf32> to vector<15x1x128xf32>
    %86 = vector.shape_cast %77 : vector<15x128xf32> to vector<15x1x128xf32>
    %87 = vector.shape_cast %79 : vector<15x128xf32> to vector<15x1x128xf32>
    %88 = vector.shape_cast %81 : vector<15x128xf32> to vector<15x1x128xf32>
    %89 = tpu.concatenate %82, %83, %84, %85, %86, %87, %88 in 1 : vector<15x1x128xf32>, vector<15x1x128xf32>, vector<15x1x128xf32>, vector<15x1x128xf32>, vector<15x1x128xf32>, vector<15x1x128xf32>, vector<15x1x128xf32> -> vector<15x7x128xf32>
    %90 = vector.extract_strided_slice %89 {offsets = [0, 0, 0], sizes = [3, 7, 128], strides = [1, 1, 1]} : vector<15x7x128xf32> to vector<3x7x128xf32>
    %cst_72 = arith.constant dense<0xFF800000> : vector<7x128xf32>
    %91 = vector.multi_reduction <maximumf>, %90, %cst_72 [0] : vector<3x7x128xf32> to vector<7x128xf32>
    %92 = vector.extract_strided_slice %89 {offsets = [2, 0, 0], sizes = [3, 7, 128], strides = [1, 1, 1]} : vector<15x7x128xf32> to vector<3x7x128xf32>
    %cst_73 = arith.constant dense<0xFF800000> : vector<7x128xf32>
    %93 = vector.multi_reduction <maximumf>, %92, %cst_73 [0] : vector<3x7x128xf32> to vector<7x128xf32>
    %94 = vector.extract_strided_slice %89 {offsets = [4, 0, 0], sizes = [3, 7, 128], strides = [1, 1, 1]} : vector<15x7x128xf32> to vector<3x7x128xf32>
    %cst_74 = arith.constant dense<0xFF800000> : vector<7x128xf32>
    %95 = vector.multi_reduction <maximumf>, %94, %cst_74 [0] : vector<3x7x128xf32> to vector<7x128xf32>
    %96 = vector.extract_strided_slice %89 {offsets = [6, 0, 0], sizes = [3, 7, 128], strides = [1, 1, 1]} : vector<15x7x128xf32> to vector<3x7x128xf32>
    %cst_75 = arith.constant dense<0xFF800000> : vector<7x128xf32>
    %97 = vector.multi_reduction <maximumf>, %96, %cst_75 [0] : vector<3x7x128xf32> to vector<7x128xf32>
    %98 = vector.extract_strided_slice %89 {offsets = [8, 0, 0], sizes = [3, 7, 128], strides = [1, 1, 1]} : vector<15x7x128xf32> to vector<3x7x128xf32>
    %cst_76 = arith.constant dense<0xFF800000> : vector<7x128xf32>
    %99 = vector.multi_reduction <maximumf>, %98, %cst_76 [0] : vector<3x7x128xf32> to vector<7x128xf32>
    %100 = vector.extract_strided_slice %89 {offsets = [10, 0, 0], sizes = [3, 7, 128], strides = [1, 1, 1]} : vector<15x7x128xf32> to vector<3x7x128xf32>
    %cst_77 = arith.constant dense<0xFF800000> : vector<7x128xf32>
    %101 = vector.multi_reduction <maximumf>, %100, %cst_77 [0] : vector<3x7x128xf32> to vector<7x128xf32>
    %102 = vector.extract_strided_slice %89 {offsets = [12, 0, 0], sizes = [3, 7, 128], strides = [1, 1, 1]} : vector<15x7x128xf32> to vector<3x7x128xf32>
    %cst_78 = arith.constant dense<0xFF800000> : vector<7x128xf32>
    %103 = vector.multi_reduction <maximumf>, %102, %cst_78 [0] : vector<3x7x128xf32> to vector<7x128xf32>
    %104 = vector.shape_cast %91 : vector<7x128xf32> to vector<1x7x128xf32>
    %105 = vector.shape_cast %93 : vector<7x128xf32> to vector<1x7x128xf32>
    %106 = vector.shape_cast %95 : vector<7x128xf32> to vector<1x7x128xf32>
    %107 = vector.shape_cast %97 : vector<7x128xf32> to vector<1x7x128xf32>
    %108 = vector.shape_cast %99 : vector<7x128xf32> to vector<1x7x128xf32>
    %109 = vector.shape_cast %101 : vector<7x128xf32> to vector<1x7x128xf32>
    %110 = vector.shape_cast %103 : vector<7x128xf32> to vector<1x7x128xf32>
    %111 = tpu.concatenate %104, %105, %106, %107, %108, %109, %110 in 0 : vector<1x7x128xf32>, vector<1x7x128xf32>, vector<1x7x128xf32>, vector<1x7x128xf32>, vector<1x7x128xf32>, vector<1x7x128xf32>, vector<1x7x128xf32> -> vector<7x7x128xf32>
    %112 = vector.extract_strided_slice %111 {offsets = [0, 0, 0], sizes = [7, 7, 64], strides = [1, 1, 1]} : vector<7x7x128xf32> to vector<7x7x64xf32>
    %113 = vector.shape_cast %112 : vector<7x7x64xf32> to vector<49x64xf32>
    %114 = tpu.transpose %113, [1, 0] : vector<49x64xf32> -> vector<64x49xf32>
    %c0_79 = arith.constant 0 : index
    %c0_80 = arith.constant 0 : index
    %c0_81 = arith.constant 0 : index
    %115 = vector.load %arg4[%c0_79, %c0_80, %c0_81] : memref<1x64x49xf32, #tpu.memory_space<vmem>>, vector<1x64x49xf32>
    %116 = vector.shape_cast %115 : vector<1x64x49xf32> to vector<64x49xf32>
    %117 = vector.shape_cast %114 : vector<64x49xf32> to vector<1x64x49xf32>
    tpu.vector_store %arg4[%c0_79, %c0_80, %c0_81], %117 {strides = array<i32>} : memref<1x64x49xf32, #tpu.memory_space<vmem>>, vector<1x64x49xf32>,
    return
  }
  func.func @transform_0(%arg0: i32) -> (i32, i32, i32, i32) {
    %c0_i32 = arith.constant 0 : i32
    %c0_i32_0 = arith.constant 0 : i32
    %c0_i32_1 = arith.constant 0 : i32
    %c0_i32_2 = arith.constant 0 : i32
    return %arg0, %c0_i32, %c0_i32_0, %c0_i32_1 : i32, i32, i32, i32
  }
  func.func @transform_1(%arg0: i32) -> (i32, i32, i32) {
    %c0_i32 = arith.constant 0 : i32
    %c0_i32_0 = arith.constant 0 : i32
    %c0_i32_1 = arith.constant 0 : i32
    %c0_i32_2 = arith.constant 0 : i32
    return %c0_i32, %c0_i32_0, %c0_i32_1 : i32, i32, i32
  }
  func.func @transform_2(%arg0: i32) -> (i32, i32) {
    %c0_i32 = arith.constant 0 : i32
    %c0_i32_0 = arith.constant 0 : i32
    %c0_i32_1 = arith.constant 0 : i32
    return %c0_i32, %c0_i32_0 : i32, i32
  }
  func.func @transform_3(%arg0: i32) -> (i32, i32, i32) {
    %c0_i32 = arith.constant 0 : i32
    %c0_i32_0 = arith.constant 0 : i32
    %c0_i32_1 = arith.constant 0 : i32
    return %arg0, %c0_i32, %c0_i32_0 : i32, i32, i32
  }
}

</mosaic_0001>

<llo_original>
// kernel: model_forward.1
$region0: #{model_forward.1}
  #allocation0 [shape = 'u32[]', space=smem, size = 0x4, offset = 0x4, fixed_abs, tag = 'smem constant byte address 0x4 - core index']
  #allocation1 [shape = 'u32[72,128]{1,0:T(1,128)}', space=vmem, size = 0x9000, scoped, tag = 'internal scratch']
  %s0 = inlined_call_operand.vmem [shape: bf16[2,17,18,48], index: 0, kind: input, shape index: {}]
  %s1 = inlined_call_operand.vmem [shape: bf16[9,48,128], index: 1, kind: input, shape index: {}]
  %s2 = inlined_call_operand.vmem [shape: f32[1,128], index: 2, kind: input, shape index: {}]
  %s3 = inlined_call_operand.vmem [shape: f32[2,64,49], index: 3, kind: output, shape index: {}]
  %s4 = sld [smem:[#allocation0]]
  $region45: #{model_forward.1} parent=0
    _
  %s6 = ssub.s32 1, %s4
  %s7 = scalar_select 0, %s6, %s4
  loop: start=0, step=1, limit=4
  $region2: #{model_forward.1} parent=0 // loop_pre_header
    _
  $region3: #{model_forward.1} parent=0 // loop_header
    %s9 = sphi 0, %s13
    %p10 = scmp.ge.s32.totalorder %s9, 4
    %s19 = sphi 0, %s21
    %s22 = sphi 0, %s19
    %s23 = sphi 0, %s22
    %s39 = sphi 0, %s23
    %s43 = sphi 0, %s43
    %s45 = sphi 0, %s43
    %s46 = sphi 0, %s45
    %s60 = sphi 0, %s46
    %s64 = sphi 0, %s64
    %s66 = sphi 0, %s64
    %s67 = sphi 0, %s66
    %s81 = sphi 0, %s67
    %s87 = sphi 0, %s89
    %s90 = sphi 0, %s87
    %s91 = sphi 0, %s90
    %s107 = sphi 0, %s91
  $region4: #{model_forward.1} parent=0 // loop_header_branch
    %12 = sbr.rel (%p10) target = $region8
  $region5: #{model_forward.1} parent=0 // loop_body
    %s14 = ssub.s32 %s9, 1
    %s15 = ssub.s32 %s9, 2
    %s16 = sadd.s32 %s9, 1
    %s17 = ssub.s32 %s9, %s16
    %p18 = scmp.eq.s32.totalorder %s17, 0
    %s20 = sadd.s32 %s19, 1
    %s21 = scalar_select %p18, %s19, %s20
    %p24 = pneg %p18
    %p25 = scmp.eq.s32.totalorder %s9, 1
    %p26 = por %p24, %p25
    %p27 = scmp.ne.s32.totalorder %s19, %s22
    %p28 = scmp.eq.s32.totalorder %s9, 0
    %p29 = por %p27, %p28
    %p30 = scmp.ne.s32.totalorder %s19, %s22
    %p31 = scmp.eq.s32.totalorder %s14, 1
    %p32 = por %p30, %p31
    %p33 = scmp.ne.s32.totalorder %s22, %s23
    %p34 = scmp.eq.s32.totalorder %s14, 0
    %p35 = por %p33, %p34
    %p36 = scmp.ne.s32.totalorder %s22, %s23
    %p37 = scmp.eq.s32.totalorder %s15, 1
    %p38 = por %p36, %p37
    %p40 = scmp.ne.s32.totalorder %s23, %s39
    %p41 = scmp.eq.s32.totalorder %s15, 0
    %p42 = por %p40, %p41
    %s44 = sadd.s32 %s43, 1
    %p47 = scmp.eq.s32.totalorder %s9, 1
    %p48 = scmp.ne.s32.totalorder %s43, %s45
    %p49 = scmp.eq.s32.totalorder %s9, 0
    %p50 = por %p48, %p49
    %p51 = scmp.ne.s32.totalorder %s43, %s45
    %p52 = scmp.eq.s32.totalorder %s14, 1
    %p53 = por %p51, %p52
    %p54 = scmp.ne.s32.totalorder %s45, %s46
    %p55 = scmp.eq.s32.totalorder %s14, 0
    %p56 = por %p54, %p55
    %p57 = scmp.ne.s32.totalorder %s45, %s46
    %p58 = scmp.eq.s32.totalorder %s15, 1
    %p59 = por %p57, %p58
    %p61 = scmp.ne.s32.totalorder %s46, %s60
    %p62 = scmp.eq.s32.totalorder %s15, 0
    %p63 = por %p61, %p62
    %s65 = sadd.s32 %s64, 1
    %p68 = scmp.eq.s32.totalorder %s9, 1
    %p69 = scmp.ne.s32.totalorder %s64, %s66
    %p70 = scmp.eq.s32.totalorder %s9, 0
    %p71 = por %p69, %p70
    %p72 = scmp.ne.s32.totalorder %s64, %s66
    %p73 = scmp.eq.s32.totalorder %s14, 1
    %p74 = por %p72, %p73
    %p75 = scmp.ne.s32.totalorder %s66, %s67
    %p76 = scmp.eq.s32.totalorder %s14, 0
    %p77 = por %p75, %p76
    %p78 = scmp.ne.s32.totalorder %s66, %s67
    %p79 = scmp.eq.s32.totalorder %s15, 1
    %p80 = por %p78, %p79
    %p82 = scmp.ne.s32.totalorder %s67, %s81
    %p83 = scmp.eq.s32.totalorder %s15, 0
    %p84 = por %p82, %p83
    %s85 = ssub.s32 %s9, %s16
    %p86 = scmp.eq.s32.totalorder %s85, 0
    %s88 = sadd.s32 %s87, 1
    %s89 = scalar_select %p86, %s87, %s88
    %p92 = pneg %p86
    %p93 = scmp.eq.s32.totalorder %s9, 1
    %p94 = por %p92, %p93
    %p95 = scmp.ne.s32.totalorder %s87, %s90
    %p96 = scmp.eq.s32.totalorder %s9, 0
    %p97 = por %p95, %p96
    %p98 = scmp.ne.s32.totalorder %s87, %s90
    %p99 = scmp.eq.s32.totalorder %s14, 1
    %p100 = por %p98, %p99
    %p101 = scmp.ne.s32.totalorder %s90, %s91
    %p102 = scmp.eq.s32.totalorder %s14, 0
    %p103 = por %p101, %p102
    %p104 = scmp.ne.s32.totalorder %s90, %s91
    %p105 = scmp.eq.s32.totalorder %s15, 1
    %p106 = por %p104, %p105
    %p108 = scmp.ne.s32.totalorder %s91, %s107
    %p109 = scmp.eq.s32.totalorder %s15, 0
    %p110 = por %p108, %p109
    %p111 = scmp.le.s32.totalorder 1, %s9
    %p112 = scmp.lt.s32.totalorder %s9, 3
    %p113 = pnand %p111, %p112
    %p114 = pneg %p113
    // Predicated region
    $region9: #{model_forward.1} parent=5 // pred_check
      _
    $region10: #{model_forward.1} parent=5 // pred_check_branch
      %116 = sbr.rel (%p113) target = $region12
    $region11: #{model_forward.1} parent=5 // pred_region
      %s117 = ssub.s32 %s9, 1
      // Predicated region
      $region13: #{model_forward.1} parent=11 // pred_check
        %p118 = pneg %p56
      $region14: #{model_forward.1} parent=11 // pred_check_branch
        %120 = sbr.rel (%p118) target = $region16
      $region15: #{model_forward.1} parent=11 // pred_region
        _
      $region16: #{model_forward.1} parent=11 // pred_fallthru
        _
      // Predicated region
      $region17: #{model_forward.1} parent=11 // pred_check
        %p121 = pneg %p77
      $region18: #{model_forward.1} parent=11 // pred_check_branch
        %123 = sbr.rel (%p121) target = $region20
      $region19: #{model_forward.1} parent=11 // pred_region
        _
      $region20: #{model_forward.1} parent=11 // pred_fallthru
        _
    $region12: #{model_forward.1} parent=5 // pred_fallthru
      _
    %p124 = scmp.lt.s32.totalorder %s9, 2
    // Predicated region
    $region21: #{model_forward.1} parent=5 // pred_check
      %p125 = pneg %p124
    $region22: #{model_forward.1} parent=5 // pred_check_branch
      %127 = sbr.rel (%p125) target = $region24
    $region23: #{model_forward.1} parent=5 // pred_region
      // Predicated region
      $region25: #{model_forward.1} parent=23 // pred_check
        %p128 = pneg %p29
      $region26: #{model_forward.1} parent=23 // pred_check_branch
        %130 = sbr.rel (%p128) target = $region28
      $region27: #{model_forward.1} parent=23 // pred_region
        %p131 = scmp.lt.s32.totalorder %s9, 1
        %s132 = scalar_select %p131, %s9, 1
        %s133 = smul.addr %s132, 51
        %s134 = smul.addr %s133, 4
        %s135 = scalar_lea.vmem %s0, %s134
      $region28: #{model_forward.1} parent=23 // pred_fallthru
        _
    $region24: #{model_forward.1} parent=5 // pred_fallthru
      _
    %p136 = scmp.le.s32.totalorder 1, %s9
    %p137 = scmp.lt.s32.totalorder %s9, 3
    %p138 = pnand %p136, %p137
    %p139 = pneg %p138
    // Predicated region
    $region29: #{model_forward.1} parent=5 // pred_check
      _
    $region30: #{model_forward.1} parent=5 // pred_check_branch
      %141 = sbr.rel (%p138) target = $region32
    $region31: #{model_forward.1} parent=5 // pred_region
      %s142 = ssub.s32 %s9, 1
      %p143 = scmp.lt.s32.totalorder %s14, 1
      %s144 = scalar_select %p143, %s14, 1
      %s145 = smul.addr %s144, 51
      %s146 = smul.addr %s145, 4
      %s147 = scalar_lea.vmem %s0, %s146
      %p148 = pneg %p35
      %p149 = pneg %p32
      %p150 = pneg %p56
      %p151 = pneg %p53
      %p152 = pneg %p77
      %p153 = pneg %p74
      %p154 = pneg %p103
      %p155 = pneg %p100
      %p156 = scmp.lt.s32.totalorder %s14, 1
      %s157 = scalar_select %p156, %s14, 1
      %s158 = smul.addr %s157, 8
      %s159 = smul.addr %s158, 8
      %s160 = scalar_lea.vmem %s3, %s159
      %p161 = scmp.lt.s32.totalorder %s14, 1
      %s162 = scalar_select %p161, %s14, 1
      %s163 = smul.addr %s162, 51
      %s164 = smul.addr %s163, 4
      %s165 = scalar_lea.vmem %s0, %s164
      %p166 = scmp.lt.s32.totalorder %s14, 1
      %s167 = scalar_select %p166, %s14, 1
      %s168 = smul.addr %s167, 8
      %s169 = smul.addr %s168, 8
      %s170 = scalar_lea.vmem %s3, %s169
      %v172 = vld [vmem:[%s165] sm:$0xf]
      %v173 = vld [vmem:[%s165 + $0x4] sm:$0xf]
      %v174 = vld [vmem:[%s165 + $0xc] sm:$0xf]
      %v175 = vld [vmem:[%s165 + $0x10] sm:$0xf]
      %v176 = vld [vmem:[%s165 + $0x18] sm:$0xf]
      %v177 = vld [vmem:[%s165 + $0x1c] sm:$0xf]
      %v178 = vld [vmem:[%s165 + $0x24] sm:$0xf]
      %v179 = vld [vmem:[%s165 + $0x28] sm:$0xf]
      %v180 = vld [vmem:[%s165 + $0x30] sm:$0xf]
      %v181 = vld [vmem:[%s165 + $0x34] sm:$0xf]
      %v182 = vld [vmem:[%s165 + $0x3c] sm:$0xf]
      %v183 = vld [vmem:[%s165 + $0x40] sm:$0xf]
      %v184 = vld [vmem:[%s165 + $0x48] sm:$0xf]
      %v185 = vld [vmem:[%s165 + $0x4c] sm:$0xf]
      %v186 = vld [vmem:[%s165 + $0x54] sm:$0xf]
      %v187 = vld [vmem:[%s165 + $0x58] sm:$0xf]
      %v188 = vld [vmem:[%s165 + $0x60] sm:$0xf]
      %v189 = vld [vmem:[%s165 + $0x64] sm:$0xf]
      %v190 = vld [vmem:[%s165 + $0x6c] sm:$0xf]
      %v191 = vld [vmem:[%s165 + $0x70] sm:$0xf]
      %v192 = vld [vmem:[%s165 + $0x78] sm:$0xf]
      %v193 = vld [vmem:[%s165 + $0x7c] sm:$0xf]
      %v194 = vld [vmem:[%s165 + $0x84] sm:$0xf]
      %v195 = vld [vmem:[%s165 + $0x88] sm:$0xf]
      %v196 = vld [vmem:[%s165 + $0x90] sm:$0xf]
      %v197 = vld [vmem:[%s165 + $0x94] sm:$0xf]
      %v198 = vld [vmem:[%s165 + $0x9c] sm:$0xf]
      %v199 = vld [vmem:[%s165 + $0xa0] sm:$0xf]
      %v200 = vld [vmem:[%s165 + $0xa8] sm:$0xf]
      %v201 = vld [vmem:[%s165 + $0xac] sm:$0xf]
      %v202 = vld [vmem:[%s1] sm:$0xf]
      %v203 = vld [vmem:[%s1 + $0x4] sm:$0xf]
      %v204 = vld [vmem:[%s1 + $0x8] sm:$0xf]
      %v205 = vld [vmem:[%s1 + $0xc] sm:$0xf]
      %v206 = vld [vmem:[%s1 + $0x10] sm:$0xf]
      %v207 = vld [vmem:[%s1 + $0x14] sm:$0xf]
      %v208 = vld [vmem:[%s165 + $0x8] sm:$0x1]
      %v209 = vld [vmem:[%s165 + $0x14] sm:$0x1]
      %v210 = vld [vmem:[%s165 + $0x20] sm:$0x1]
      %v211 = vld [vmem:[%s165 + $0x2c] sm:$0x1]
      %v212 = vld [vmem:[%s165 + $0x38] sm:$0x1]
      %v213 = vld [vmem:[%s165 + $0x44] sm:$0x1]
      %v214 = vld [vmem:[%s165 + $0x50] sm:$0x1]
      %v215 = vld [vmem:[%s165 + $0x5c] sm:$0x1]
      %v216 = vld [vmem:[%s165 + $0x68] sm:$0x1]
      %v217 = vld [vmem:[%s165 + $0x74] sm:$0x1]
      %v218 = vld [vmem:[%s165 + $0x80] sm:$0x1]
      %v219 = vld [vmem:[%s165 + $0x8c] sm:$0x1]
      %v220 = vld [vmem:[%s165 + $0x98] sm:$0x1]
      %v221 = vld [vmem:[%s165 + $0xa4] sm:$0x1]
      %v222 = vld [vmem:[%s165 + $0xb0] sm:$0x1]
      %vm223 = vsmask.f32 3328
      %vm224 = vsmask.f32 7440
      %vm225 = vmor %vm223, %vm224
      %v227 = vshrl.u32 %v172, 16
      %v229 = vrot.slane %v227, 4
      %v230 = vshll.u32 %v172, 16
      %v232 = vrot.slane %v230, 5
      %v233 = vor.u32 %v229, %v232
      %v234 = vrot.slane %v233, 4
      %v236 = vshll.u32 %v173, 16
      %v238 = vrot.slane %v236, 5
      %v239 = vsel %vm225, %v234, %v238
      %v240 = vshrl.u32 %v173, 16
      %v242 = vrot.slane %v240, 4
      %v243 = vor.u32 %v242, %v238
      %v244 = vrot.slane %v243, 4
      %v246 = vshll.u32 %v208, 16
      %v248 = vrot.slane %v246, 5
      %v249 = vsel %vm225, %v244, %v248
      %v251 = vshrl.u32 %v174, 16
      %v253 = vrot.slane %v251, 4
      %v254 = vshll.u32 %v174, 16
      %v256 = vrot.slane %v254, 5
      %v257 = vor.u32 %v253, %v256
      %v258 = vrot.slane %v257, 4
      %v260 = vshll.u32 %v175, 16
      %v262 = vrot.slane %v260, 5
      %v263 = vsel %vm225, %v258, %v262
      %v264 = vshrl.u32 %v175, 16
      %v266 = vrot.slane %v264, 4
      %v267 = vor.u32 %v266, %v262
      %v268 = vrot.slane %v267, 4
      %v270 = vshll.u32 %v209, 16
      %v272 = vrot.slane %v270, 5
      %v273 = vsel %vm225, %v268, %v272
      %v275 = vshrl.u32 %v176, 16
      %v277 = vrot.slane %v275, 4
      %v278 = vshll.u32 %v176, 16
      %v280 = vrot.slane %v278, 5
      %v281 = vor.u32 %v277, %v280
      %v282 = vrot.slane %v281, 4
      %v284 = vshll.u32 %v177, 16
      %v286 = vrot.slane %v284, 5
      %v287 = vsel %vm225, %v282, %v286
      %v288 = vshrl.u32 %v177, 16
      %v290 = vrot.slane %v288, 4
      %v291 = vor.u32 %v290, %v286
      %v292 = vrot.slane %v291, 4
      %v294 = vshll.u32 %v210, 16
      %v296 = vrot.slane %v294, 5
      %v297 = vsel %vm225, %v292, %v296
      %v299 = vshrl.u32 %v178, 16
      %v301 = vrot.slane %v299, 4
      %v302 = vshll.u32 %v178, 16
      %v304 = vrot.slane %v302, 5
      %v305 = vor.u32 %v301, %v304
      %v306 = vrot.slane %v305, 4
      %v308 = vshll.u32 %v179, 16
      %v310 = vrot.slane %v308, 5
      %v311 = vsel %vm225, %v306, %v310
      %v312 = vshrl.u32 %v179, 16
      %v314 = vrot.slane %v312, 4
      %v315 = vor.u32 %v314, %v310
      %v316 = vrot.slane %v315, 4
      %v318 = vshll.u32 %v211, 16
      %v320 = vrot.slane %v318, 5
      %v321 = vsel %vm225, %v316, %v320
      %v323 = vshrl.u32 %v180, 16
      %v325 = vrot.slane %v323, 4
      %v326 = vshll.u32 %v180, 16
      %v328 = vrot.slane %v326, 5
      %v329 = vor.u32 %v325, %v328
      %v330 = vrot.slane %v329, 4
      %v332 = vshll.u32 %v181, 16
      %v334 = vrot.slane %v332, 5
      %v335 = vsel %vm225, %v330, %v334
      %v336 = vshrl.u32 %v181, 16
      %v338 = vrot.slane %v336, 4
      %v339 = vor.u32 %v338, %v334
      %v340 = vrot.slane %v339, 4
      %v342 = vshll.u32 %v212, 16
      %v344 = vrot.slane %v342, 5
      %v345 = vsel %vm225, %v340, %v344
      %v347 = vshrl.u32 %v182, 16
      %v349 = vrot.slane %v347, 4
      %v350 = vshll.u32 %v182, 16
      %v352 = vrot.slane %v350, 5
      %v353 = vor.u32 %v349, %v352
      %v354 = vrot.slane %v353, 4
      %v356 = vshll.u32 %v183, 16
      %v358 = vrot.slane %v356, 5
      %v359 = vsel %vm225, %v354, %v358
      %v360 = vshrl.u32 %v183, 16
      %v362 = vrot.slane %v360, 4
      %v363 = vor.u32 %v362, %v358
      %v364 = vrot.slane %v363, 4
      %v366 = vshll.u32 %v213, 16
      %v368 = vrot.slane %v366, 5
      %v369 = vsel %vm225, %v364, %v368
      %v371 = vshrl.u32 %v184, 16
      %v373 = vrot.slane %v371, 4
      %v374 = vshll.u32 %v184, 16
      %v376 = vrot.slane %v374, 5
      %v377 = vor.u32 %v373, %v376
      %v378 = vrot.slane %v377, 4
      %v380 = vshll.u32 %v185, 16
      %v382 = vrot.slane %v380, 5
      %v383 = vsel %vm225, %v378, %v382
      %v384 = vshrl.u32 %v185, 16
      %v386 = vrot.slane %v384, 4
      %v387 = vor.u32 %v386, %v382
      %v388 = vrot.slane %v387, 4
      %v390 = vshll.u32 %v214, 16
      %v392 = vrot.slane %v390, 5
      %v393 = vsel %vm225, %v388, %v392
      %v395 = vshrl.u32 %v186, 16
      %v397 = vrot.slane %v395, 4
      %v398 = vshll.u32 %v186, 16
      %v400 = vrot.slane %v398, 5
      %v401 = vor.u32 %v397, %v400
      %v402 = vrot.slane %v401, 4
      %v404 = vshll.u32 %v187, 16
      %v406 = vrot.slane %v404, 5
      %v407 = vsel %vm225, %v402, %v406
      %v408 = vshrl.u32 %v187, 16
      %v410 = vrot.slane %v408, 4
      %v411 = vor.u32 %v410, %v406
      %v412 = vrot.slane %v411, 4
      %v414 = vshll.u32 %v215, 16
      %v416 = vrot.slane %v414, 5
      %v417 = vsel %vm225, %v412, %v416
      %v419 = vshrl.u32 %v188, 16
      %v421 = vrot.slane %v419, 4
      %v422 = vshll.u32 %v188, 16
      %v424 = vrot.slane %v422, 5
      %v425 = vor.u32 %v421, %v424
      %v426 = vrot.slane %v425, 4
      %v428 = vshll.u32 %v189, 16
      %v430 = vrot.slane %v428, 5
      %v431 = vsel %vm225, %v426, %v430
      %v432 = vshrl.u32 %v189, 16
      %v434 = vrot.slane %v432, 4
      %v435 = vor.u32 %v434, %v430
      %v436 = vrot.slane %v435, 4
      %v438 = vshll.u32 %v216, 16
      %v440 = vrot.slane %v438, 5
      %v441 = vsel %vm225, %v436, %v440
      %v443 = vshrl.u32 %v190, 16
      %v445 = vrot.slane %v443, 4
      %v446 = vshll.u32 %v190, 16
      %v448 = vrot.slane %v446, 5
      %v449 = vor.u32 %v445, %v448
      %v450 = vrot.slane %v449, 4
      %v452 = vshll.u32 %v191, 16
      %v454 = vrot.slane %v452, 5
      %v455 = vsel %vm225, %v450, %v454
      %v456 = vshrl.u32 %v191, 16
      %v458 = vrot.slane %v456, 4
      %v459 = vor.u32 %v458, %v454
      %v460 = vrot.slane %v459, 4
      %v462 = vshll.u32 %v217, 16
      %v464 = vrot.slane %v462, 5
      %v465 = vsel %vm225, %v460, %v464
      %v467 = vshrl.u32 %v192, 16
      %v469 = vrot.slane %v467, 4
      %v470 = vshll.u32 %v192, 16
      %v472 = vrot.slane %v470, 5
      %v473 = vor.u32 %v469, %v472
      %v474 = vrot.slane %v473, 4
      %v476 = vshll.u32 %v193, 16
      %v478 = vrot.slane %v476, 5
      %v479 = vsel %vm225, %v474, %v478
      %v480 = vshrl.u32 %v193, 16
      %v482 = vrot.slane %v480, 4
      %v483 = vor.u32 %v482, %v478
      %v484 = vrot.slane %v483, 4
      %v486 = vshll.u32 %v218, 16
      %v488 = vrot.slane %v486, 5
      %v489 = vsel %vm225, %v484, %v488
      %v491 = vshrl.u32 %v194, 16
      %v493 = vrot.slane %v491, 4
      %v494 = vshll.u32 %v194, 16
      %v496 = vrot.slane %v494, 5
      %v497 = vor.u32 %v493, %v496
      %v498 = vrot.slane %v497, 4
      %v500 = vshll.u32 %v195, 16
      %v502 = vrot.slane %v500, 5
      %v503 = vsel %vm225, %v498, %v502
      %v504 = vshrl.u32 %v195, 16
      %v506 = vrot.slane %v504, 4
      %v507 = vor.u32 %v506, %v502
      %v508 = vrot.slane %v507, 4
      %v510 = vshll.u32 %v219, 16
      %v512 = vrot.slane %v510, 5
      %v513 = vsel %vm225, %v508, %v512
      %v515 = vshrl.u32 %v196, 16
      %v517 = vrot.slane %v515, 4
      %v518 = vshll.u32 %v196, 16
      %v520 = vrot.slane %v518, 5
      %v521 = vor.u32 %v517, %v520
      %v522 = vrot.slane %v521, 4
      %v524 = vshll.u32 %v197, 16
      %v526 = vrot.slane %v524, 5
      %v527 = vsel %vm225, %v522, %v526
      %v528 = vshrl.u32 %v197, 16
      %v530 = vrot.slane %v528, 4
      %v531 = vor.u32 %v530, %v526
      %v532 = vrot.slane %v531, 4
      %v534 = vshll.u32 %v220, 16
      %v536 = vrot.slane %v534, 5
      %v537 = vsel %vm225, %v532, %v536
      %v539 = vshrl.u32 %v198, 16
      %v541 = vrot.slane %v539, 4
      %v542 = vshll.u32 %v198, 16
      %v544 = vrot.slane %v542, 5
      %v545 = vor.u32 %v541, %v544
      %v546 = vrot.slane %v545, 4
      %v548 = vshll.u32 %v199, 16
      %v550 = vrot.slane %v548, 5
      %v551 = vsel %vm225, %v546, %v550
      %v552 = vshrl.u32 %v199, 16
      %v554 = vrot.slane %v552, 4
      %v555 = vor.u32 %v554, %v550
      %v556 = vrot.slane %v555, 4
      %v558 = vshll.u32 %v221, 16
      %v560 = vrot.slane %v558, 5
      %v561 = vsel %vm225, %v556, %v560
      %v563 = vshrl.u32 %v200, 16
      %v565 = vrot.slane %v563, 4
      %v566 = vshll.u32 %v200, 16
      %v568 = vrot.slane %v566, 5
      %v569 = vor.u32 %v565, %v568
      %v570 = vrot.slane %v569, 4
      %v572 = vshll.u32 %v201, 16
      %v574 = vrot.slane %v572, 5
      %v575 = vsel %vm225, %v570, %v574
      %v576 = vshrl.u32 %v201, 16
      %v578 = vrot.slane %v576, 4
      %v579 = vor.u32 %v578, %v574
      %v580 = vrot.slane %v579, 4
      %v582 = vshll.u32 %v222, 16
      %v584 = vrot.slane %v582, 5
      %v585 = vsel %vm225, %v580, %v584
      %s586 = scalar_lea.vmem %s1, 24
      %v587 = vld [vmem:[%s586] sm:$0xf]
      %v588 = vld [vmem:[%s586 + $0x4] sm:$0xf]
      %v589 = vld [vmem:[%s586 + $0x8] sm:$0xf]
      %v590 = vld [vmem:[%s586 + $0xc] sm:$0xf]
      %v591 = vld [vmem:[%s586 + $0x10] sm:$0xf]
      %v592 = vld [vmem:[%s586 + $0x14] sm:$0xf]
      %v593 = vunpack.c.l.b16 %v239
      %v594 = vunpack.c.l.b16 %v249
      %v595 = vunpack.c.l.b16 %v263
      %v596 = vunpack.c.l.b16 %v273
      %v597 = vunpack.c.l.b16 %v287
      %v598 = vunpack.c.l.b16 %v297
      %v599 = vunpack.c.l.b16 %v311
      %v600 = vunpack.c.l.b16 %v321
      %v601 = vunpack.c.l.b16 %v335
      %v602 = vunpack.c.l.b16 %v345
      %v603 = vunpack.c.l.b16 %v359
      %v604 = vunpack.c.l.b16 %v369
      %v605 = vunpack.c.l.b16 %v383
      %v606 = vunpack.c.l.b16 %v393
      %v607 = vunpack.c.l.b16 %v407
      %v608 = vunpack.c.l.b16 %v417
      %v609 = vunpack.c.l.b16 %v431
      %v610 = vunpack.c.l.b16 %v441
      %v611 = vunpack.c.l.b16 %v455
      %v612 = vunpack.c.l.b16 %v465
      %v613 = vunpack.c.l.b16 %v479
      %v614 = vunpack.c.l.b16 %v489
      %v615 = vunpack.c.l.b16 %v503
      %v616 = vunpack.c.l.b16 %v513
      %v617 = vunpack.c.l.b16 %v527
      %v618 = vunpack.c.l.b16 %v537
      %v619 = vunpack.c.l.b16 %v551
      %v620 = vunpack.c.l.b16 %v561
      %v621 = vunpack.c.l.b16 %v575
      %v622 = vunpack.c.l.b16 %v585
      %v623 = vpack.c.b16 %v594, %v593
      %v624 = vpack.c.b16 %v596, %v595
      %v625 = vpack.c.b16 %v598, %v597
      %v626 = vpack.c.b16 %v600, %v599
      %v627 = vpack.c.b16 %v602, %v601
      %v628 = vpack.c.b16 %v604, %v603
      %v629 = vpack.c.b16 %v606, %v605
      %v630 = vpack.c.b16 %v608, %v607
      %v631 = vpack.c.b16 %v610, %v609
      %v632 = vpack.c.b16 %v612, %v611
      %v633 = vpack.c.b16 %v614, %v613
      %v634 = vpack.c.b16 %v616, %v615
      %v635 = vpack.c.b16 %v618, %v617
      %v636 = vpack.c.b16 %v620, %v619
      %v637 = vpack.c.b16 %v622, %v621
      %v644 = vunpack.c.l.b16 %v587
      %v645 = vunpack.c.l.b16 %v588
      %v646 = vunpack.c.l.b16 %v589
      %v647 = vunpack.c.l.b16 %v590
      %v648 = vunpack.c.l.b16 %v591
      %v649 = vunpack.c.l.b16 %v592
      %v650 = vpack.c.b16 %v645, %v644
      %v651 = vpack.c.b16 %v647, %v646
      %v652 = vpack.c.b16 %v649, %v648
      %vm656 = vcmask 392192
      %v658 = vsel %vm656, %v623, 0
      %v661 = vsel %vm656, %v624, 0
      %v664 = vsel %vm656, %v625, 0
      %v667 = vsel %vm656, %v626, 0
      %v670 = vsel %vm656, %v627, 0
      %v673 = vsel %vm656, %v628, 0
      %v676 = vsel %vm656, %v629, 0
      %v679 = vsel %vm656, %v630, 0
      %v682 = vsel %vm656, %v631, 0
      %v685 = vsel %vm656, %v632, 0
      %v688 = vsel %vm656, %v633, 0
      %v691 = vsel %vm656, %v634, 0
      %v694 = vsel %vm656, %v635, 0
      %v697 = vsel %vm656, %v636, 0
      %v700 = vsel %vm656, %v637, 0
      %702 = vmatpush.bf16.msra.mxu0 0
      %703 = vmatpush.bf16.msra.mxu0 0
      %704 = vmatpush.bf16.msra.mxu0 0
      %705 = vmatpush.bf16.msra.mxu0 0
      %706 = vmatpush.bf16.msra.mxu0 0
      %707 = vmatpush.bf16.msra.mxu0 %v652
      %708 = vmatpush.bf16.msra.mxu0 %v651
      %709 = vmatpush.bf16.msra.mxu0 %v650
      %710 = vmatmul.bf16.gmra.mxu0 %v658
      %v711 = vpop.f32.mrf.mxu0
      %v712 = vadd.f32 0.0, %v711
      %v713 = vpop.f32.mrf.mxu0
      %v714 = vadd.f32 0.0, %v713
      %715 = vmatmul.bf16.gmra.mxu0 %v661
      %v716 = vpop.f32.mrf.mxu0
      %v717 = vadd.f32 0.0, %v716
      %v718 = vpop.f32.mrf.mxu0
      %v719 = vadd.f32 0.0, %v718
      %720 = vmatmul.bf16.gmra.mxu0 %v664
      %v721 = vpop.f32.mrf.mxu0
      %v722 = vadd.f32 0.0, %v721
      %v723 = vpop.f32.mrf.mxu0
      %v724 = vadd.f32 0.0, %v723
      %725 = vmatmul.bf16.gmra.mxu0 %v667
      %v726 = vpop.f32.mrf.mxu0
      %v727 = vadd.f32 0.0, %v726
      %v728 = vpop.f32.mrf.mxu0
      %v729 = vadd.f32 0.0, %v728
      %730 = vmatmul.bf16.gmra.mxu0 %v670
      %v731 = vpop.f32.mrf.mxu0
      %v732 = vadd.f32 0.0, %v731
      %v733 = vpop.f32.mrf.mxu0
      %v734 = vadd.f32 0.0, %v733
      %735 = vmatmul.bf16.gmra.mxu0 %v673
      %v736 = vpop.f32.mrf.mxu0
      %v737 = vadd.f32 0.0, %v736
      %v738 = vpop.f32.mrf.mxu0
      %v739 = vadd.f32 0.0, %v738
      %740 = vmatmul.bf16.gmra.mxu0 %v676
      %v741 = vpop.f32.mrf.mxu0
      %v742 = vadd.f32 0.0, %v741
      %v743 = vpop.f32.mrf.mxu0
      %v744 = vadd.f32 0.0, %v743
      %745 = vmatmul.bf16.gmra.mxu0 %v679
      %v746 = vpop.f32.mrf.mxu0
      %v747 = vadd.f32 0.0, %v746
      %v748 = vpop.f32.mrf.mxu0
      %v749 = vadd.f32 0.0, %v748
      %750 = vmatmul.bf16.gmra.mxu0 %v682
      %v751 = vpop.f32.mrf.mxu0
      %v752 = vadd.f32 0.0, %v751
      %v753 = vpop.f32.mrf.mxu0
      %v754 = vadd.f32 0.0, %v753
      %755 = vmatmul.bf16.gmra.mxu0 %v685
      %v756 = vpop.f32.mrf.mxu0
      %v757 = vadd.f32 0.0, %v756
      %v758 = vpop.f32.mrf.mxu0
      %v759 = vadd.f32 0.0, %v758
      %760 = vmatmul.bf16.gmra.mxu0 %v688
      %v761 = vpop.f32.mrf.mxu0
      %v762 = vadd.f32 0.0, %v761
      %v763 = vpop.f32.mrf.mxu0
      %v764 = vadd.f32 0.0, %v763
      %765 = vmatmul.bf16.gmra.mxu0 %v691
      %v766 = vpop.f32.mrf.mxu0
      %v767 = vadd.f32 0.0, %v766
      %v768 = vpop.f32.mrf.mxu0
      %v769 = vadd.f32 0.0, %v768
      %770 = vmatmul.bf16.gmra.mxu0 %v694
      %v771 = vpop.f32.mrf.mxu0
      %v772 = vadd.f32 0.0, %v771
      %v773 = vpop.f32.mrf.mxu0
      %v774 = vadd.f32 0.0, %v773
      %775 = vmatmul.bf16.gmra.mxu0 %v697
      %v776 = vpop.f32.mrf.mxu0
      %v777 = vadd.f32 0.0, %v776
      %v778 = vpop.f32.mrf.mxu0
      %v779 = vadd.f32 0.0, %v778
      %780 = vmatmul.bf16.gmra.mxu0 %v700
      %v781 = vpop.f32.mrf.mxu0
      %v782 = vadd.f32 0.0, %v781
      %v783 = vpop.f32.mrf.mxu0
      %v784 = vadd.f32 0.0, %v783
      %785 = vdwg.mxu0
      %v816 = vunpack.c.l.b16 %v172
      %v817 = vunpack.c.l.b16 %v173
      %v818 = vunpack.c.l.b16 %v174
      %v819 = vunpack.c.l.b16 %v175
      %v820 = vunpack.c.l.b16 %v176
      %v821 = vunpack.c.l.b16 %v177
      %v822 = vunpack.c.l.b16 %v178
      %v823 = vunpack.c.l.b16 %v179
      %v824 = vunpack.c.l.b16 %v180
      %v825 = vunpack.c.l.b16 %v181
      %v826 = vunpack.c.l.b16 %v182
      %v827 = vunpack.c.l.b16 %v183
      %v828 = vunpack.c.l.b16 %v184
      %v829 = vunpack.c.l.b16 %v185
      %v830 = vunpack.c.l.b16 %v186
      %v831 = vunpack.c.l.b16 %v187
      %v832 = vunpack.c.l.b16 %v188
      %v833 = vunpack.c.l.b16 %v189
      %v834 = vunpack.c.l.b16 %v190
      %v835 = vunpack.c.l.b16 %v191
      %v836 = vunpack.c.l.b16 %v192
      %v837 = vunpack.c.l.b16 %v193
      %v838 = vunpack.c.l.b16 %v194
      %v839 = vunpack.c.l.b16 %v195
      %v840 = vunpack.c.l.b16 %v196
      %v841 = vunpack.c.l.b16 %v197
      %v842 = vunpack.c.l.b16 %v198
      %v843 = vunpack.c.l.b16 %v199
      %v844 = vunpack.c.l.b16 %v200
      %v845 = vunpack.c.l.b16 %v201
      %v846 = vpack.c.b16 %v817, %v816
      %v847 = vpack.c.b16 %v819, %v818
      %v848 = vpack.c.b16 %v821, %v820
      %v849 = vpack.c.b16 %v823, %v822
      %v850 = vpack.c.b16 %v825, %v824
      %v851 = vpack.c.b16 %v827, %v826
      %v852 = vpack.c.b16 %v829, %v828
      %v853 = vpack.c.b16 %v831, %v830
      %v854 = vpack.c.b16 %v833, %v832
      %v855 = vpack.c.b16 %v835, %v834
      %v856 = vpack.c.b16 %v837, %v836
      %v857 = vpack.c.b16 %v839, %v838
      %v858 = vpack.c.b16 %v841, %v840
      %v859 = vpack.c.b16 %v843, %v842
      %v860 = vpack.c.b16 %v845, %v844
      %v867 = vunpack.c.l.b16 %v202
      %v868 = vunpack.c.l.b16 %v203
      %v869 = vunpack.c.l.b16 %v204
      %v870 = vunpack.c.l.b16 %v205
      %v871 = vunpack.c.l.b16 %v206
      %v872 = vunpack.c.l.b16 %v207
      %v873 = vpack.c.b16 %v868, %v867
      %v874 = vpack.c.b16 %v870, %v869
      %v875 = vpack.c.b16 %v872, %v871
      %v880 = vsel %vm656, %v846, 0
      %v883 = vsel %vm656, %v847, 0
      %v886 = vsel %vm656, %v848, 0
      %v889 = vsel %vm656, %v849, 0
      %v892 = vsel %vm656, %v850, 0
      %v895 = vsel %vm656, %v851, 0
      %v898 = vsel %vm656, %v852, 0
      %v901 = vsel %vm656, %v853, 0
      %v904 = vsel %vm656, %v854, 0
      %v907 = vsel %vm656, %v855, 0
      %v910 = vsel %vm656, %v856, 0
      %v913 = vsel %vm656, %v857, 0
      %v916 = vsel %vm656, %v858, 0
      %v919 = vsel %vm656, %v859, 0
      %v922 = vsel %vm656, %v860, 0
      %924 = vmatpush.bf16.msra.mxu0 0
      %925 = vmatpush.bf16.msra.mxu0 0
      %926 = vmatpush.bf16.msra.mxu0 0
      %927 = vmatpush.bf16.msra.mxu0 0
      %928 = vmatpush.bf16.msra.mxu0 0
      %929 = vmatpush.bf16.msra.mxu0 %v875
      %930 = vmatpush.bf16.msra.mxu0 %v874
      %931 = vmatpush.bf16.msra.mxu0 %v873
      %932 = vmatmul.bf16.gmra.mxu0 %v880
      %v933 = vpop.f32.mrf.mxu0
      %v934 = vadd.f32 %v712, %v933
      %v935 = vpop.f32.mrf.mxu0
      %v936 = vadd.f32 %v714, %v935
      %937 = vmatmul.bf16.gmra.mxu0 %v883
      %v938 = vpop.f32.mrf.mxu0
      %v939 = vadd.f32 %v717, %v938
      %v940 = vpop.f32.mrf.mxu0
      %v941 = vadd.f32 %v719, %v940
      %942 = vmatmul.bf16.gmra.mxu0 %v886
      %v943 = vpop.f32.mrf.mxu0
      %v944 = vadd.f32 %v722, %v943
      %v945 = vpop.f32.mrf.mxu0
      %v946 = vadd.f32 %v724, %v945
      %947 = vmatmul.bf16.gmra.mxu0 %v889
      %v948 = vpop.f32.mrf.mxu0
      %v949 = vadd.f32 %v727, %v948
      %v950 = vpop.f32.mrf.mxu0
      %v951 = vadd.f32 %v729, %v950
      %952 = vmatmul.bf16.gmra.mxu0 %v892
      %v953 = vpop.f32.mrf.mxu0
      %v954 = vadd.f32 %v732, %v953
      %v955 = vpop.f32.mrf.mxu0
      %v956 = vadd.f32 %v734, %v955
      %957 = vmatmul.bf16.gmra.mxu0 %v895
      %v958 = vpop.f32.mrf.mxu0
      %v959 = vadd.f32 %v737, %v958
      %v960 = vpop.f32.mrf.mxu0
      %v961 = vadd.f32 %v739, %v960
      %962 = vmatmul.bf16.gmra.mxu0 %v898
      %v963 = vpop.f32.mrf.mxu0
      %v964 = vadd.f32 %v742, %v963
      %v965 = vpop.f32.mrf.mxu0
      %v966 = vadd.f32 %v744, %v965
      %967 = vmatmul.bf16.gmra.mxu0 %v901
      %v968 = vpop.f32.mrf.mxu0
      %v969 = vadd.f32 %v747, %v968
      %v970 = vpop.f32.mrf.mxu0
      %v971 = vadd.f32 %v749, %v970
      %972 = vmatmul.bf16.gmra.mxu0 %v904
      %v973 = vpop.f32.mrf.mxu0
      %v974 = vadd.f32 %v752, %v973
      %v975 = vpop.f32.mrf.mxu0
      %v976 = vadd.f32 %v754, %v975
      %977 = vmatmul.bf16.gmra.mxu0 %v907
      %v978 = vpop.f32.mrf.mxu0
      %v979 = vadd.f32 %v757, %v978
      %v980 = vpop.f32.mrf.mxu0
      %v981 = vadd.f32 %v759, %v980
      %982 = vmatmul.bf16.gmra.mxu0 %v910
      %v983 = vpop.f32.mrf.mxu0
      %v984 = vadd.f32 %v762, %v983
      %v985 = vpop.f32.mrf.mxu0
      %v986 = vadd.f32 %v764, %v985
      %987 = vmatmul.bf16.gmra.mxu0 %v913
      %v988 = vpop.f32.mrf.mxu0
      %v989 = vadd.f32 %v767, %v988
      %v990 = vpop.f32.mrf.mxu0
      %v991 = vadd.f32 %v769, %v990
      %992 = vmatmul.bf16.gmra.mxu0 %v916
      %v993 = vpop.f32.mrf.mxu0
      %v994 = vadd.f32 %v772, %v993
      %v995 = vpop.f32.mrf.mxu0
      %v996 = vadd.f32 %v774, %v995
      %997 = vmatmul.bf16.gmra.mxu0 %v919
      %v998 = vpop.f32.mrf.mxu0
      %v999 = vadd.f32 %v777, %v998
      %v1000 = vpop.f32.mrf.mxu0
      %v1001 = vadd.f32 %v779, %v1000
      %1002 = vmatmul.bf16.gmra.mxu0 %v922
      %v1003 = vpop.f32.mrf.mxu0
      %v1004 = vadd.f32 %v782, %v1003
      %v1005 = vpop.f32.mrf.mxu0
      %v1006 = vadd.f32 %v784, %v1005
      %1007 = vdwg.mxu0
      %v1008 = vld [vmem:[%s165] sm:$0xe]
      %v1009 = vld [vmem:[%s165 + $0xc] sm:$0xe]
      %v1010 = vld [vmem:[%s165 + $0x18] sm:$0xe]
      %v1011 = vld [vmem:[%s165 + $0x24] sm:$0xe]
      %v1012 = vld [vmem:[%s165 + $0x30] sm:$0xe]
      %v1013 = vld [vmem:[%s165 + $0x3c] sm:$0xe]
      %v1014 = vld [vmem:[%s165 + $0x48] sm:$0xe]
      %v1015 = vld [vmem:[%s165 + $0x54] sm:$0xe]
      %v1016 = vld [vmem:[%s165 + $0x60] sm:$0xe]
      %v1017 = vld [vmem:[%s165 + $0x6c] sm:$0xe]
      %v1018 = vld [vmem:[%s165 + $0x78] sm:$0xe]
      %v1019 = vld [vmem:[%s165 + $0x84] sm:$0xe]
      %v1020 = vld [vmem:[%s165 + $0x90] sm:$0xe]
      %v1021 = vld [vmem:[%s165 + $0x9c] sm:$0xe]
      %v1022 = vld [vmem:[%s165 + $0xa8] sm:$0xe]
      %vm1053 = vcmask 1042432
      %vm1054 = vcmask 1046532
      %vm1055 = vmor %vm1053, %vm1054
      %v1056 = vrot.slane %v1008, 5
      %v1057 = vrot.slane %v1056, 4
      %v1058 = vrot.slane %v173, 5
      %v1059 = vsel %vm1055, %v1057, %v1058
      %v1060 = vrot.slane %v1058, 4
      %v1061 = vrot.slane %v208, 5
      %v1062 = vsel %vm1055, %v1060, %v1061
      %v1063 = vrot.slane %v1009, 5
      %v1064 = vrot.slane %v1063, 4
      %v1065 = vrot.slane %v175, 5
      %v1066 = vsel %vm1055, %v1064, %v1065
      %v1067 = vrot.slane %v1065, 4
      %v1068 = vrot.slane %v209, 5
      %v1069 = vsel %vm1055, %v1067, %v1068
      %v1070 = vrot.slane %v1010, 5
      %v1071 = vrot.slane %v1070, 4
      %v1072 = vrot.slane %v177, 5
      %v1073 = vsel %vm1055, %v1071, %v1072
      %v1074 = vrot.slane %v1072, 4
      %v1075 = vrot.slane %v210, 5
      %v1076 = vsel %vm1055, %v1074, %v1075
      %v1077 = vrot.slane %v1011, 5
      %v1078 = vrot.slane %v1077, 4
      %v1079 = vrot.slane %v179, 5
      %v1080 = vsel %vm1055, %v1078, %v1079
      %v1081 = vrot.slane %v1079, 4
      %v1082 = vrot.slane %v211, 5
      %v1083 = vsel %vm1055, %v1081, %v1082
      %v1084 = vrot.slane %v1012, 5
      %v1085 = vrot.slane %v1084, 4
      %v1086 = vrot.slane %v181, 5
      %v1087 = vsel %vm1055, %v1085, %v1086
      %v1088 = vrot.slane %v1086, 4
      %v1089 = vrot.slane %v212, 5
      %v1090 = vsel %vm1055, %v1088, %v1089
      %v1091 = vrot.slane %v1013, 5
      %v1092 = vrot.slane %v1091, 4
      %v1093 = vrot.slane %v183, 5
      %v1094 = vsel %vm1055, %v1092, %v1093
      %v1095 = vrot.slane %v1093, 4
      %v1096 = vrot.slane %v213, 5
      %v1097 = vsel %vm1055, %v1095, %v1096
      %v1098 = vrot.slane %v1014, 5
      %v1099 = vrot.slane %v1098, 4
      %v1100 = vrot.slane %v185, 5
      %v1101 = vsel %vm1055, %v1099, %v1100
      %v1102 = vrot.slane %v1100, 4
      %v1103 = vrot.slane %v214, 5
      %v1104 = vsel %vm1055, %v1102, %v1103
      %v1105 = vrot.slane %v1015, 5
      %v1106 = vrot.slane %v1105, 4
      %v1107 = vrot.slane %v187, 5
      %v1108 = vsel %vm1055, %v1106, %v1107
      %v1109 = vrot.slane %v1107, 4
      %v1110 = vrot.slane %v215, 5
      %v1111 = vsel %vm1055, %v1109, %v1110
      %v1112 = vrot.slane %v1016, 5
      %v1113 = vrot.slane %v1112, 4
      %v1114 = vrot.slane %v189, 5
      %v1115 = vsel %vm1055, %v1113, %v1114
      %v1116 = vrot.slane %v1114, 4
      %v1117 = vrot.slane %v216, 5
      %v1118 = vsel %vm1055, %v1116, %v1117
      %v1119 = vrot.slane %v1017, 5
      %v1120 = vrot.slane %v1119, 4
      %v1121 = vrot.slane %v191, 5
      %v1122 = vsel %vm1055, %v1120, %v1121
      %v1123 = vrot.slane %v1121, 4
      %v1124 = vrot.slane %v217, 5
      %v1125 = vsel %vm1055, %v1123, %v1124
      %v1126 = vrot.slane %v1018, 5
      %v1127 = vrot.slane %v1126, 4
      %v1128 = vrot.slane %v193, 5
      %v1129 = vsel %vm1055, %v1127, %v1128
      %v1130 = vrot.slane %v1128, 4
      %v1131 = vrot.slane %v218, 5
      %v1132 = vsel %vm1055, %v1130, %v1131
      %v1133 = vrot.slane %v1019, 5
      %v1134 = vrot.slane %v1133, 4
      %v1135 = vrot.slane %v195, 5
      %v1136 = vsel %vm1055, %v1134, %v1135
      %v1137 = vrot.slane %v1135, 4
      %v1138 = vrot.slane %v219, 5
      %v1139 = vsel %vm1055, %v1137, %v1138
      %v1140 = vrot.slane %v1020, 5
      %v1141 = vrot.slane %v1140, 4
      %v1142 = vrot.slane %v197, 5
      %v1143 = vsel %vm1055, %v1141, %v1142
      %v1144 = vrot.slane %v1142, 4
      %v1145 = vrot.slane %v220, 5
      %v1146 = vsel %vm1055, %v1144, %v1145
      %v1147 = vrot.slane %v1021, 5
      %v1148 = vrot.slane %v1147, 4
      %v1149 = vrot.slane %v199, 5
      %v1150 = vsel %vm1055, %v1148, %v1149
      %v1151 = vrot.slane %v1149, 4
      %v1152 = vrot.slane %v221, 5
      %v1153 = vsel %vm1055, %v1151, %v1152
      %v1154 = vrot.slane %v1022, 5
      %v1155 = vrot.slane %v1154, 4
      %v1156 = vrot.slane %v201, 5
      %v1157 = vsel %vm1055, %v1155, %v1156
      %v1158 = vrot.slane %v1156, 4
      %v1159 = vrot.slane %v222, 5
      %v1160 = vsel %vm1055, %v1158, %v1159
      %s1161 = scalar_lea.vmem %s1, 48
      %v1162 = vld [vmem:[%s1161] sm:$0xf]
      %v1163 = vld [vmem:[%s1161 + $0x4] sm:$0xf]
      %v1164 = vld [vmem:[%s1161 + $0x8] sm:$0xf]
      %v1165 = vld [vmem:[%s1161 + $0xc] sm:$0xf]
      %v1166 = vld [vmem:[%s1161 + $0x10] sm:$0xf]
      %v1167 = vld [vmem:[%s1161 + $0x14] sm:$0xf]
      %v1168 = vunpack.c.l.b16 %v1059
      %v1169 = vunpack.c.l.b16 %v1062
      %v1170 = vunpack.c.l.b16 %v1066
      %v1171 = vunpack.c.l.b16 %v1069
      %v1172 = vunpack.c.l.b16 %v1073
      %v1173 = vunpack.c.l.b16 %v1076
      %v1174 = vunpack.c.l.b16 %v1080
      %v1175 = vunpack.c.l.b16 %v1083
      %v1176 = vunpack.c.l.b16 %v1087
      %v1177 = vunpack.c.l.b16 %v1090
      %v1178 = vunpack.c.l.b16 %v1094
      %v1179 = vunpack.c.l.b16 %v1097
      %v1180 = vunpack.c.l.b16 %v1101
      %v1181 = vunpack.c.l.b16 %v1104
      %v1182 = vunpack.c.l.b16 %v1108
      %v1183 = vunpack.c.l.b16 %v1111
      %v1184 = vunpack.c.l.b16 %v1115
      %v1185 = vunpack.c.l.b16 %v1118
      %v1186 = vunpack.c.l.b16 %v1122
      %v1187 = vunpack.c.l.b16 %v1125
      %v1188 = vunpack.c.l.b16 %v1129
      %v1189 = vunpack.c.l.b16 %v1132
      %v1190 = vunpack.c.l.b16 %v1136
      %v1191 = vunpack.c.l.b16 %v1139
      %v1192 = vunpack.c.l.b16 %v1143
      %v1193 = vunpack.c.l.b16 %v1146
      %v1194 = vunpack.c.l.b16 %v1150
      %v1195 = vunpack.c.l.b16 %v1153
      %v1196 = vunpack.c.l.b16 %v1157
      %v1197 = vunpack.c.l.b16 %v1160
      %v1198 = vpack.c.b16 %v1169, %v1168
      %v1199 = vpack.c.b16 %v1171, %v1170
      %v1200 = vpack.c.b16 %v1173, %v1172
      %v1201 = vpack.c.b16 %v1175, %v1174
      %v1202 = vpack.c.b16 %v1177, %v1176
      %v1203 = vpack.c.b16 %v1179, %v1178
      %v1204 = vpack.c.b16 %v1181, %v1180
      %v1205 = vpack.c.b16 %v1183, %v1182
      %v1206 = vpack.c.b16 %v1185, %v1184
      %v1207 = vpack.c.b16 %v1187, %v1186
      %v1208 = vpack.c.b16 %v1189, %v1188
      %v1209 = vpack.c.b16 %v1191, %v1190
      %v1210 = vpack.c.b16 %v1193, %v1192
      %v1211 = vpack.c.b16 %v1195, %v1194
      %v1212 = vpack.c.b16 %v1197, %v1196
      %v1219 = vunpack.c.l.b16 %v1162
      %v1220 = vunpack.c.l.b16 %v1163
      %v1221 = vunpack.c.l.b16 %v1164
      %v1222 = vunpack.c.l.b16 %v1165
      %v1223 = vunpack.c.l.b16 %v1166
      %v1224 = vunpack.c.l.b16 %v1167
      %v1225 = vpack.c.b16 %v1220, %v1219
      %v1226 = vpack.c.b16 %v1222, %v1221
      %v1227 = vpack.c.b16 %v1224, %v1223
      %v1232 = vsel %vm656, %v1198, 0
      %v1235 = vsel %vm656, %v1199, 0
      %v1238 = vsel %vm656, %v1200, 0
      %v1241 = vsel %vm656, %v1201, 0
      %v1244 = vsel %vm656, %v1202, 0
      %v1247 = vsel %vm656, %v1203, 0
      %v1250 = vsel %vm656, %v1204, 0
      %v1253 = vsel %vm656, %v1205, 0
      %v1256 = vsel %vm656, %v1206, 0
      %v1259 = vsel %vm656, %v1207, 0
      %v1262 = vsel %vm656, %v1208, 0
      %v1265 = vsel %vm656, %v1209, 0
      %v1268 = vsel %vm656, %v1210, 0
      %v1271 = vsel %vm656, %v1211, 0
      %v1274 = vsel %vm656, %v1212, 0
      %1276 = vmatpush.bf16.msra.mxu0 0
      %1277 = vmatpush.bf16.msra.mxu0 0
      %1278 = vmatpush.bf16.msra.mxu0 0
      %1279 = vmatpush.bf16.msra.mxu0 0
      %1280 = vmatpush.bf16.msra.mxu0 0
      %1281 = vmatpush.bf16.msra.mxu0 %v1227
      %1282 = vmatpush.bf16.msra.mxu0 %v1226
      %1283 = vmatpush.bf16.msra.mxu0 %v1225
      %1284 = vmatmul.bf16.gmra.mxu0 %v1232
      %v1285 = vpop.f32.mrf.mxu0
      %v1286 = vadd.f32 0.0, %v1285
      %v1287 = vpop.f32.mrf.mxu0
      %v1288 = vadd.f32 0.0, %v1287
      %1289 = vmatmul.bf16.gmra.mxu0 %v1235
      %v1290 = vpop.f32.mrf.mxu0
      %v1291 = vadd.f32 0.0, %v1290
      %v1292 = vpop.f32.mrf.mxu0
      %v1293 = vadd.f32 0.0, %v1292
      %1294 = vmatmul.bf16.gmra.mxu0 %v1238
      %v1295 = vpop.f32.mrf.mxu0
      %v1296 = vadd.f32 0.0, %v1295
      %v1297 = vpop.f32.mrf.mxu0
      %v1298 = vadd.f32 0.0, %v1297
      %1299 = vmatmul.bf16.gmra.mxu0 %v1241
      %v1300 = vpop.f32.mrf.mxu0
      %v1301 = vadd.f32 0.0, %v1300
      %v1302 = vpop.f32.mrf.mxu0
      %v1303 = vadd.f32 0.0, %v1302
      %1304 = vmatmul.bf16.gmra.mxu0 %v1244
      %v1305 = vpop.f32.mrf.mxu0
      %v1306 = vadd.f32 0.0, %v1305
      %v1307 = vpop.f32.mrf.mxu0
      %v1308 = vadd.f32 0.0, %v1307
      %1309 = vmatmul.bf16.gmra.mxu0 %v1247
      %v1310 = vpop.f32.mrf.mxu0
      %v1311 = vadd.f32 0.0, %v1310
      %v1312 = vpop.f32.mrf.mxu0
      %v1313 = vadd.f32 0.0, %v1312
      %1314 = vmatmul.bf16.gmra.mxu0 %v1250
      %v1315 = vpop.f32.mrf.mxu0
      %v1316 = vadd.f32 0.0, %v1315
      %v1317 = vpop.f32.mrf.mxu0
      %v1318 = vadd.f32 0.0, %v1317
      %1319 = vmatmul.bf16.gmra.mxu0 %v1253
      %v1320 = vpop.f32.mrf.mxu0
      %v1321 = vadd.f32 0.0, %v1320
      %v1322 = vpop.f32.mrf.mxu0
      %v1323 = vadd.f32 0.0, %v1322
      %1324 = vmatmul.bf16.gmra.mxu0 %v1256
      %v1325 = vpop.f32.mrf.mxu0
      %v1326 = vadd.f32 0.0, %v1325
      %v1327 = vpop.f32.mrf.mxu0
      %v1328 = vadd.f32 0.0, %v1327
      %1329 = vmatmul.bf16.gmra.mxu0 %v1259
      %v1330 = vpop.f32.mrf.mxu0
      %v1331 = vadd.f32 0.0, %v1330
      %v1332 = vpop.f32.mrf.mxu0
      %v1333 = vadd.f32 0.0, %v1332
      %1334 = vmatmul.bf16.gmra.mxu0 %v1262
      %v1335 = vpop.f32.mrf.mxu0
      %v1336 = vadd.f32 0.0, %v1335
      %v1337 = vpop.f32.mrf.mxu0
      %v1338 = vadd.f32 0.0, %v1337
      %1339 = vmatmul.bf16.gmra.mxu0 %v1265
      %v1340 = vpop.f32.mrf.mxu0
      %v1341 = vadd.f32 0.0, %v1340
      %v1342 = vpop.f32.mrf.mxu0
      %v1343 = vadd.f32 0.0, %v1342
      %1344 = vmatmul.bf16.gmra.mxu0 %v1268
      %v1345 = vpop.f32.mrf.mxu0
      %v1346 = vadd.f32 0.0, %v1345
      %v1347 = vpop.f32.mrf.mxu0
      %v1348 = vadd.f32 0.0, %v1347
      %1349 = vmatmul.bf16.gmra.mxu0 %v1271
      %v1350 = vpop.f32.mrf.mxu0
      %v1351 = vadd.f32 0.0, %v1350
      %v1352 = vpop.f32.mrf.mxu0
      %v1353 = vadd.f32 0.0, %v1352
      %1354 = vmatmul.bf16.gmra.mxu0 %v1274
      %v1355 = vpop.f32.mrf.mxu0
      %v1356 = vadd.f32 0.0, %v1355
      %v1357 = vpop.f32.mrf.mxu0
      %v1358 = vadd.f32 0.0, %v1357
      %1359 = vdwg.mxu0
      %v1360 = vadd.f32 %v934, %v1286
      %v1361 = vadd.f32 %v936, %v1288
      %v1362 = vadd.f32 %v939, %v1291
      %v1363 = vadd.f32 %v941, %v1293
      %v1364 = vadd.f32 %v944, %v1296
      %v1365 = vadd.f32 %v946, %v1298
      %v1366 = vadd.f32 %v949, %v1301
      %v1367 = vadd.f32 %v951, %v1303
      %v1368 = vadd.f32 %v954, %v1306
      %v1369 = vadd.f32 %v956, %v1308
      %v1370 = vadd.f32 %v959, %v1311
      %v1371 = vadd.f32 %v961, %v1313
      %v1372 = vadd.f32 %v964, %v1316
      %v1373 = vadd.f32 %v966, %v1318
      %v1374 = vadd.f32 %v969, %v1321
      %v1375 = vadd.f32 %v971, %v1323
      %v1376 = vadd.f32 %v974, %v1326
      %v1377 = vadd.f32 %v976, %v1328
      %v1378 = vadd.f32 %v979, %v1331
      %v1379 = vadd.f32 %v981, %v1333
      %v1380 = vadd.f32 %v984, %v1336
      %v1381 = vadd.f32 %v986, %v1338
      %v1382 = vadd.f32 %v989, %v1341
      %v1383 = vadd.f32 %v991, %v1343
      %v1384 = vadd.f32 %v994, %v1346
      %v1385 = vadd.f32 %v996, %v1348
      %v1386 = vadd.f32 %v999, %v1351
      %v1387 = vadd.f32 %v1001, %v1353
      %v1388 = vadd.f32 %v1004, %v1356
      %v1389 = vadd.f32 %v1006, %v1358
      %s1390 = scalar_lea.vmem %s165, 12
      %v1391 = vld [vmem:[%s1390] sm:$0xf]
      %v1392 = vld [vmem:[%s1390 + $0x4] sm:$0xf]
      %v1393 = vld [vmem:[%s1390 + $0xc] sm:$0xf]
      %v1394 = vld [vmem:[%s1390 + $0x10] sm:$0xf]
      %v1395 = vld [vmem:[%s1390 + $0x18] sm:$0xf]
      %v1396 = vld [vmem:[%s1390 + $0x1c] sm:$0xf]
      %v1397 = vld [vmem:[%s1390 + $0x24] sm:$0xf]
      %v1398 = vld [vmem:[%s1390 + $0x28] sm:$0xf]
      %v1399 = vld [vmem:[%s1390 + $0x30] sm:$0xf]
      %v1400 = vld [vmem:[%s1390 + $0x34] sm:$0xf]
      %v1401 = vld [vmem:[%s1390 + $0x3c] sm:$0xf]
      %v1402 = vld [vmem:[%s1390 + $0x40] sm:$0xf]
      %v1403 = vld [vmem:[%s1390 + $0x48] sm:$0xf]
      %v1404 = vld [vmem:[%s1390 + $0x4c] sm:$0xf]
      %v1405 = vld [vmem:[%s1390 + $0x54] sm:$0xf]
      %v1406 = vld [vmem:[%s1390 + $0x58] sm:$0xf]
      %v1407 = vld [vmem:[%s1390 + $0x60] sm:$0xf]
      %v1408 = vld [vmem:[%s1390 + $0x64] sm:$0xf]
      %v1409 = vld [vmem:[%s1390 + $0x6c] sm:$0xf]
      %v1410 = vld [vmem:[%s1390 + $0x70] sm:$0xf]
      %v1411 = vld [vmem:[%s1390 + $0x78] sm:$0xf]
      %v1412 = vld [vmem:[%s1390 + $0x7c] sm:$0xf]
      %v1413 = vld [vmem:[%s1390 + $0x84] sm:$0xf]
      %v1414 = vld [vmem:[%s1390 + $0x88] sm:$0xf]
      %v1415 = vld [vmem:[%s1390 + $0x90] sm:$0xf]
      %v1416 = vld [vmem:[%s1390 + $0x94] sm:$0xf]
      %v1417 = vld [vmem:[%s1390 + $0x9c] sm:$0xf]
      %v1418 = vld [vmem:[%s1390 + $0xa0] sm:$0xf]
      %v1419 = vld [vmem:[%s1390 + $0xa8] sm:$0xf]
      %v1420 = vld [vmem:[%s1390 + $0xac] sm:$0xf]
      %s1421 = scalar_lea.vmem %s1, 72
      %v1422 = vld [vmem:[%s1421] sm:$0xf]
      %v1423 = vld [vmem:[%s1421 + $0x4] sm:$0xf]
      %v1424 = vld [vmem:[%s1421 + $0x8] sm:$0xf]
      %v1425 = vld [vmem:[%s1421 + $0xc] sm:$0xf]
      %v1426 = vld [vmem:[%s1421 + $0x10] sm:$0xf]
      %v1427 = vld [vmem:[%s1421 + $0x14] sm:$0xf]
      %v1458 = vunpack.c.l.b16 %v1391
      %v1459 = vunpack.c.l.b16 %v1392
      %v1460 = vunpack.c.l.b16 %v1393
      %v1461 = vunpack.c.l.b16 %v1394
      %v1462 = vunpack.c.l.b16 %v1395
      %v1463 = vunpack.c.l.b16 %v1396
      %v1464 = vunpack.c.l.b16 %v1397
      %v1465 = vunpack.c.l.b16 %v1398
      %v1466 = vunpack.c.l.b16 %v1399
      %v1467 = vunpack.c.l.b16 %v1400
      %v1468 = vunpack.c.l.b16 %v1401
      %v1469 = vunpack.c.l.b16 %v1402
      %v1470 = vunpack.c.l.b16 %v1403
      %v1471 = vunpack.c.l.b16 %v1404
      %v1472 = vunpack.c.l.b16 %v1405
      %v1473 = vunpack.c.l.b16 %v1406
      %v1474 = vunpack.c.l.b16 %v1407
      %v1475 = vunpack.c.l.b16 %v1408
      %v1476 = vunpack.c.l.b16 %v1409
      %v1477 = vunpack.c.l.b16 %v1410
      %v1478 = vunpack.c.l.b16 %v1411
      %v1479 = vunpack.c.l.b16 %v1412
      %v1480 = vunpack.c.l.b16 %v1413
      %v1481 = vunpack.c.l.b16 %v1414
      %v1482 = vunpack.c.l.b16 %v1415
      %v1483 = vunpack.c.l.b16 %v1416
      %v1484 = vunpack.c.l.b16 %v1417
      %v1485 = vunpack.c.l.b16 %v1418
      %v1486 = vunpack.c.l.b16 %v1419
      %v1487 = vunpack.c.l.b16 %v1420
      %v1488 = vpack.c.b16 %v1459, %v1458
      %v1489 = vpack.c.b16 %v1461, %v1460
      %v1490 = vpack.c.b16 %v1463, %v1462
      %v1491 = vpack.c.b16 %v1465, %v1464
      %v1492 = vpack.c.b16 %v1467, %v1466
      %v1493 = vpack.c.b16 %v1469, %v1468
      %v1494 = vpack.c.b16 %v1471, %v1470
      %v1495 = vpack.c.b16 %v1473, %v1472
      %v1496 = vpack.c.b16 %v1475, %v1474
      %v1497 = vpack.c.b16 %v1477, %v1476
      %v1498 = vpack.c.b16 %v1479, %v1478
      %v1499 = vpack.c.b16 %v1481, %v1480
      %v1500 = vpack.c.b16 %v1483, %v1482
      %v1501 = vpack.c.b16 %v1485, %v1484
      %v1502 = vpack.c.b16 %v1487, %v1486
      %v1509 = vunpack.c.l.b16 %v1422
      %v1510 = vunpack.c.l.b16 %v1423
      %v1511 = vunpack.c.l.b16 %v1424
      %v1512 = vunpack.c.l.b16 %v1425
      %v1513 = vunpack.c.l.b16 %v1426
      %v1514 = vunpack.c.l.b16 %v1427
      %v1515 = vpack.c.b16 %v1510, %v1509
      %v1516 = vpack.c.b16 %v1512, %v1511
      %v1517 = vpack.c.b16 %v1514, %v1513
      %v1522 = vsel %vm656, %v1488, 0
      %v1525 = vsel %vm656, %v1489, 0
      %v1528 = vsel %vm656, %v1490, 0
      %v1531 = vsel %vm656, %v1491, 0
      %v1534 = vsel %vm656, %v1492, 0
      %v1537 = vsel %vm656, %v1493, 0
      %v1540 = vsel %vm656, %v1494, 0
      %v1543 = vsel %vm656, %v1495, 0
      %v1546 = vsel %vm656, %v1496, 0
      %v1549 = vsel %vm656, %v1497, 0
      %v1552 = vsel %vm656, %v1498, 0
      %v1555 = vsel %vm656, %v1499, 0
      %v1558 = vsel %vm656, %v1500, 0
      %v1561 = vsel %vm656, %v1501, 0
      %v1564 = vsel %vm656, %v1502, 0
      %1566 = vmatpush.bf16.msra.mxu0 0
      %1567 = vmatpush.bf16.msra.mxu0 0
      %1568 = vmatpush.bf16.msra.mxu0 0
      %1569 = vmatpush.bf16.msra.mxu0 0
      %1570 = vmatpush.bf16.msra.mxu0 0
      %1571 = vmatpush.bf16.msra.mxu0 %v1517
      %1572 = vmatpush.bf16.msra.mxu0 %v1516
      %1573 = vmatpush.bf16.msra.mxu0 %v1515
      %1574 = vmatmul.bf16.gmra.mxu0 %v1522
      %v1575 = vpop.f32.mrf.mxu0
      %v1576 = vadd.f32 0.0, %v1575
      %v1577 = vpop.f32.mrf.mxu0
      %v1578 = vadd.f32 0.0, %v1577
      %1579 = vmatmul.bf16.gmra.mxu0 %v1525
      %v1580 = vpop.f32.mrf.mxu0
      %v1581 = vadd.f32 0.0, %v1580
      %v1582 = vpop.f32.mrf.mxu0
      %v1583 = vadd.f32 0.0, %v1582
      %1584 = vmatmul.bf16.gmra.mxu0 %v1528
      %v1585 = vpop.f32.mrf.mxu0
      %v1586 = vadd.f32 0.0, %v1585
      %v1587 = vpop.f32.mrf.mxu0
      %v1588 = vadd.f32 0.0, %v1587
      %1589 = vmatmul.bf16.gmra.mxu0 %v1531
      %v1590 = vpop.f32.mrf.mxu0
      %v1591 = vadd.f32 0.0, %v1590
      %v1592 = vpop.f32.mrf.mxu0
      %v1593 = vadd.f32 0.0, %v1592
      %1594 = vmatmul.bf16.gmra.mxu0 %v1534
      %v1595 = vpop.f32.mrf.mxu0
      %v1596 = vadd.f32 0.0, %v1595
      %v1597 = vpop.f32.mrf.mxu0
      %v1598 = vadd.f32 0.0, %v1597
      %1599 = vmatmul.bf16.gmra.mxu0 %v1537
      %v1600 = vpop.f32.mrf.mxu0
      %v1601 = vadd.f32 0.0, %v1600
      %v1602 = vpop.f32.mrf.mxu0
      %v1603 = vadd.f32 0.0, %v1602
      %1604 = vmatmul.bf16.gmra.mxu0 %v1540
      %v1605 = vpop.f32.mrf.mxu0
      %v1606 = vadd.f32 0.0, %v1605
      %v1607 = vpop.f32.mrf.mxu0
      %v1608 = vadd.f32 0.0, %v1607
      %1609 = vmatmul.bf16.gmra.mxu0 %v1543
      %v1610 = vpop.f32.mrf.mxu0
      %v1611 = vadd.f32 0.0, %v1610
      %v1612 = vpop.f32.mrf.mxu0
      %v1613 = vadd.f32 0.0, %v1612
      %1614 = vmatmul.bf16.gmra.mxu0 %v1546
      %v1615 = vpop.f32.mrf.mxu0
      %v1616 = vadd.f32 0.0, %v1615
      %v1617 = vpop.f32.mrf.mxu0
      %v1618 = vadd.f32 0.0, %v1617
      %1619 = vmatmul.bf16.gmra.mxu0 %v1549
      %v1620 = vpop.f32.mrf.mxu0
      %v1621 = vadd.f32 0.0, %v1620
      %v1622 = vpop.f32.mrf.mxu0
      %v1623 = vadd.f32 0.0, %v1622
      %1624 = vmatmul.bf16.gmra.mxu0 %v1552
      %v1625 = vpop.f32.mrf.mxu0
      %v1626 = vadd.f32 0.0, %v1625
      %v1627 = vpop.f32.mrf.mxu0
      %v1628 = vadd.f32 0.0, %v1627
      %1629 = vmatmul.bf16.gmra.mxu0 %v1555
      %v1630 = vpop.f32.mrf.mxu0
      %v1631 = vadd.f32 0.0, %v1630
      %v1632 = vpop.f32.mrf.mxu0
      %v1633 = vadd.f32 0.0, %v1632
      %1634 = vmatmul.bf16.gmra.mxu0 %v1558
      %v1635 = vpop.f32.mrf.mxu0
      %v1636 = vadd.f32 0.0, %v1635
      %v1637 = vpop.f32.mrf.mxu0
      %v1638 = vadd.f32 0.0, %v1637
      %1639 = vmatmul.bf16.gmra.mxu0 %v1561
      %v1640 = vpop.f32.mrf.mxu0
      %v1641 = vadd.f32 0.0, %v1640
      %v1642 = vpop.f32.mrf.mxu0
      %v1643 = vadd.f32 0.0, %v1642
      %1644 = vmatmul.bf16.gmra.mxu0 %v1564
      %v1645 = vpop.f32.mrf.mxu0
      %v1646 = vadd.f32 0.0, %v1645
      %v1647 = vpop.f32.mrf.mxu0
      %v1648 = vadd.f32 0.0, %v1647
      %1649 = vdwg.mxu0
      %v1650 = vadd.f32 %v1360, %v1576
      %v1651 = vadd.f32 %v1361, %v1578
      %v1652 = vadd.f32 %v1362, %v1581
      %v1653 = vadd.f32 %v1363, %v1583
      %v1654 = vadd.f32 %v1364, %v1586
      %v1655 = vadd.f32 %v1365, %v1588
      %v1656 = vadd.f32 %v1366, %v1591
      %v1657 = vadd.f32 %v1367, %v1593
      %v1658 = vadd.f32 %v1368, %v1596
      %v1659 = vadd.f32 %v1369, %v1598
      %v1660 = vadd.f32 %v1370, %v1601
      %v1661 = vadd.f32 %v1371, %v1603
      %v1662 = vadd.f32 %v1372, %v1606
      %v1663 = vadd.f32 %v1373, %v1608
      %v1664 = vadd.f32 %v1374, %v1611
      %v1665 = vadd.f32 %v1375, %v1613
      %v1666 = vadd.f32 %v1376, %v1616
      %v1667 = vadd.f32 %v1377, %v1618
      %v1668 = vadd.f32 %v1378, %v1621
      %v1669 = vadd.f32 %v1379, %v1623
      %v1670 = vadd.f32 %v1380, %v1626
      %v1671 = vadd.f32 %v1381, %v1628
      %v1672 = vadd.f32 %v1382, %v1631
      %v1673 = vadd.f32 %v1383, %v1633
      %v1674 = vadd.f32 %v1384, %v1636
      %v1675 = vadd.f32 %v1385, %v1638
      %v1676 = vadd.f32 %v1386, %v1641
      %v1677 = vadd.f32 %v1387, %v1643
      %v1678 = vadd.f32 %v1388, %v1646
      %v1679 = vadd.f32 %v1389, %v1648
      %v1680 = vld [vmem:[%s1390] sm:$0xf]
      %v1681 = vld [vmem:[%s1390 + $0x4] sm:$0xf]
      %v1682 = vld [vmem:[%s1390 + $0x8] sm:$0x1]
      %v1683 = vld [vmem:[%s1390 + $0xc] sm:$0xf]
      %v1684 = vld [vmem:[%s1390 + $0x10] sm:$0xf]
      %v1685 = vld [vmem:[%s1390 + $0x14] sm:$0x1]
      %v1686 = vld [vmem:[%s1390 + $0x18] sm:$0xf]
      %v1687 = vld [vmem:[%s1390 + $0x1c] sm:$0xf]
      %v1688 = vld [vmem:[%s1390 + $0x20] sm:$0x1]
      %v1689 = vld [vmem:[%s1390 + $0x24] sm:$0xf]
      %v1690 = vld [vmem:[%s1390 + $0x28] sm:$0xf]
      %v1691 = vld [vmem:[%s1390 + $0x2c] sm:$0x1]
      %v1692 = vld [vmem:[%s1390 + $0x30] sm:$0xf]
      %v1693 = vld [vmem:[%s1390 + $0x34] sm:$0xf]
      %v1694 = vld [vmem:[%s1390 + $0x38] sm:$0x1]
      %v1695 = vld [vmem:[%s1390 + $0x3c] sm:$0xf]
      %v1696 = vld [vmem:[%s1390 + $0x40] sm:$0xf]
      %v1697 = vld [vmem:[%s1390 + $0x44] sm:$0x1]
      %v1698 = vld [vmem:[%s1390 + $0x48] sm:$0xf]
      %v1699 = vld [vmem:[%s1390 + $0x4c] sm:$0xf]
      %v1700 = vld [vmem:[%s1390 + $0x50] sm:$0x1]
      %v1701 = vld [vmem:[%s1390 + $0x54] sm:$0xf]
      %v1702 = vld [vmem:[%s1390 + $0x58] sm:$0xf]
      %v1703 = vld [vmem:[%s1390 + $0x5c] sm:$0x1]
      %v1704 = vld [vmem:[%s1390 + $0x60] sm:$0xf]
      %v1705 = vld [vmem:[%s1390 + $0x64] sm:$0xf]
      %v1706 = vld [vmem:[%s1390 + $0x68] sm:$0x1]
      %v1707 = vld [vmem:[%s1390 + $0x6c] sm:$0xf]
      %v1708 = vld [vmem:[%s1390 + $0x70] sm:$0xf]
      %v1709 = vld [vmem:[%s1390 + $0x74] sm:$0x1]
      %v1710 = vld [vmem:[%s1390 + $0x78] sm:$0xf]
      %v1711 = vld [vmem:[%s1390 + $0x7c] sm:$0xf]
      %v1712 = vld [vmem:[%s1390 + $0x80] sm:$0x1]
      %v1713 = vld [vmem:[%s1390 + $0x84] sm:$0xf]
      %v1714 = vld [vmem:[%s1390 + $0x88] sm:$0xf]
      %v1715 = vld [vmem:[%s1390 + $0x8c] sm:$0x1]
      %v1716 = vld [vmem:[%s1390 + $0x90] sm:$0xf]
      %v1717 = vld [vmem:[%s1390 + $0x94] sm:$0xf]
      %v1718 = vld [vmem:[%s1390 + $0x98] sm:$0x1]
      %v1719 = vld [vmem:[%s1390 + $0x9c] sm:$0xf]
      %v1720 = vld [vmem:[%s1390 + $0xa0] sm:$0xf]
      %v1721 = vld [vmem:[%s1390 + $0xa4] sm:$0x1]
      %v1722 = vld [vmem:[%s1390 + $0xa8] sm:$0xf]
      %v1723 = vld [vmem:[%s1390 + $0xac] sm:$0xf]
      %v1724 = vld [vmem:[%s1390 + $0xb0] sm:$0x1]
      %v1726 = vshrl.u32 %v1680, 16
      %v1728 = vrot.slane %v1726, 4
      %v1729 = vshll.u32 %v1680, 16
      %v1731 = vrot.slane %v1729, 5
      %v1732 = vor.u32 %v1728, %v1731
      %v1733 = vrot.slane %v1732, 4
      %v1735 = vshll.u32 %v1681, 16
      %v1737 = vrot.slane %v1735, 5
      %v1738 = vsel %vm225, %v1733, %v1737
      %v1739 = vshrl.u32 %v1681, 16
      %v1741 = vrot.slane %v1739, 4
      %v1742 = vor.u32 %v1741, %v1737
      %v1743 = vrot.slane %v1742, 4
      %v1745 = vshll.u32 %v1682, 16
      %v1747 = vrot.slane %v1745, 5
      %v1748 = vsel %vm225, %v1743, %v1747
      %v1750 = vshrl.u32 %v1683, 16
      %v1752 = vrot.slane %v1750, 4
      %v1753 = vshll.u32 %v1683, 16
      %v1755 = vrot.slane %v1753, 5
      %v1756 = vor.u32 %v1752, %v1755
      %v1757 = vrot.slane %v1756, 4
      %v1759 = vshll.u32 %v1684, 16
      %v1761 = vrot.slane %v1759, 5
      %v1762 = vsel %vm225, %v1757, %v1761
      %v1763 = vshrl.u32 %v1684, 16
      %v1765 = vrot.slane %v1763, 4
      %v1766 = vor.u32 %v1765, %v1761
      %v1767 = vrot.slane %v1766, 4
      %v1769 = vshll.u32 %v1685, 16
      %v1771 = vrot.slane %v1769, 5
      %v1772 = vsel %vm225, %v1767, %v1771
      %v1774 = vshrl.u32 %v1686, 16
      %v1776 = vrot.slane %v1774, 4
      %v1777 = vshll.u32 %v1686, 16
      %v1779 = vrot.slane %v1777, 5
      %v1780 = vor.u32 %v1776, %v1779
      %v1781 = vrot.slane %v1780, 4
      %v1783 = vshll.u32 %v1687, 16
      %v1785 = vrot.slane %v1783, 5
      %v1786 = vsel %vm225, %v1781, %v1785
      %v1787 = vshrl.u32 %v1687, 16
      %v1789 = vrot.slane %v1787, 4
      %v1790 = vor.u32 %v1789, %v1785
      %v1791 = vrot.slane %v1790, 4
      %v1793 = vshll.u32 %v1688, 16
      %v1795 = vrot.slane %v1793, 5
      %v1796 = vsel %vm225, %v1791, %v1795
      %v1798 = vshrl.u32 %v1689, 16
      %v1800 = vrot.slane %v1798, 4
      %v1801 = vshll.u32 %v1689, 16
      %v1803 = vrot.slane %v1801, 5
      %v1804 = vor.u32 %v1800, %v1803
      %v1805 = vrot.slane %v1804, 4
      %v1807 = vshll.u32 %v1690, 16
      %v1809 = vrot.slane %v1807, 5
      %v1810 = vsel %vm225, %v1805, %v1809
      %v1811 = vshrl.u32 %v1690, 16
      %v1813 = vrot.slane %v1811, 4
      %v1814 = vor.u32 %v1813, %v1809
      %v1815 = vrot.slane %v1814, 4
      %v1817 = vshll.u32 %v1691, 16
      %v1819 = vrot.slane %v1817, 5
      %v1820 = vsel %vm225, %v1815, %v1819
      %v1822 = vshrl.u32 %v1692, 16
      %v1824 = vrot.slane %v1822, 4
      %v1825 = vshll.u32 %v1692, 16
      %v1827 = vrot.slane %v1825, 5
      %v1828 = vor.u32 %v1824, %v1827
      %v1829 = vrot.slane %v1828, 4
      %v1831 = vshll.u32 %v1693, 16
      %v1833 = vrot.slane %v1831, 5
      %v1834 = vsel %vm225, %v1829, %v1833
      %v1835 = vshrl.u32 %v1693, 16
      %v1837 = vrot.slane %v1835, 4
      %v1838 = vor.u32 %v1837, %v1833
      %v1839 = vrot.slane %v1838, 4
      %v1841 = vshll.u32 %v1694, 16
      %v1843 = vrot.slane %v1841, 5
      %v1844 = vsel %vm225, %v1839, %v1843
      %v1846 = vshrl.u32 %v1695, 16
      %v1848 = vrot.slane %v1846, 4
      %v1849 = vshll.u32 %v1695, 16
      %v1851 = vrot.slane %v1849, 5
      %v1852 = vor.u32 %v1848, %v1851
      %v1853 = vrot.slane %v1852, 4
      %v1855 = vshll.u32 %v1696, 16
      %v1857 = vrot.slane %v1855, 5
      %v1858 = vsel %vm225, %v1853, %v1857
      %v1859 = vshrl.u32 %v1696, 16
      %v1861 = vrot.slane %v1859, 4
      %v1862 = vor.u32 %v1861, %v1857
      %v1863 = vrot.slane %v1862, 4
      %v1865 = vshll.u32 %v1697, 16
      %v1867 = vrot.slane %v1865, 5
      %v1868 = vsel %vm225, %v1863, %v1867
      %v1870 = vshrl.u32 %v1698, 16
      %v1872 = vrot.slane %v1870, 4
      %v1873 = vshll.u32 %v1698, 16
      %v1875 = vrot.slane %v1873, 5
      %v1876 = vor.u32 %v1872, %v1875
      %v1877 = vrot.slane %v1876, 4
      %v1879 = vshll.u32 %v1699, 16
      %v1881 = vrot.slane %v1879, 5
      %v1882 = vsel %vm225, %v1877, %v1881
      %v1883 = vshrl.u32 %v1699, 16
      %v1885 = vrot.slane %v1883, 4
      %v1886 = vor.u32 %v1885, %v1881
      %v1887 = vrot.slane %v1886, 4
      %v1889 = vshll.u32 %v1700, 16
      %v1891 = vrot.slane %v1889, 5
      %v1892 = vsel %vm225, %v1887, %v1891
      %v1894 = vshrl.u32 %v1701, 16
      %v1896 = vrot.slane %v1894, 4
      %v1897 = vshll.u32 %v1701, 16
      %v1899 = vrot.slane %v1897, 5
      %v1900 = vor.u32 %v1896, %v1899
      %v1901 = vrot.slane %v1900, 4
      %v1903 = vshll.u32 %v1702, 16
      %v1905 = vrot.slane %v1903, 5
      %v1906 = vsel %vm225, %v1901, %v1905
      %v1907 = vshrl.u32 %v1702, 16
      %v1909 = vrot.slane %v1907, 4
      %v1910 = vor.u32 %v1909, %v1905
      %v1911 = vrot.slane %v1910, 4
      %v1913 = vshll.u32 %v1703, 16
      %v1915 = vrot.slane %v1913, 5
      %v1916 = vsel %vm225, %v1911, %v1915
      %v1918 = vshrl.u32 %v1704, 16
      %v1920 = vrot.slane %v1918, 4
      %v1921 = vshll.u32 %v1704, 16
      %v1923 = vrot.slane %v1921, 5
      %v1924 = vor.u32 %v1920, %v1923
      %v1925 = vrot.slane %v1924, 4
      %v1927 = vshll.u32 %v1705, 16
      %v1929 = vrot.slane %v1927, 5
      %v1930 = vsel %vm225, %v1925, %v1929
      %v1931 = vshrl.u32 %v1705, 16
      %v1933 = vrot.slane %v1931, 4
      %v1934 = vor.u32 %v1933, %v1929
      %v1935 = vrot.slane %v1934, 4
      %v1937 = vshll.u32 %v1706, 16
      %v1939 = vrot.slane %v1937, 5
      %v1940 = vsel %vm225, %v1935, %v1939
      %v1942 = vshrl.u32 %v1707, 16
      %v1944 = vrot.slane %v1942, 4
      %v1945 = vshll.u32 %v1707, 16
      %v1947 = vrot.slane %v1945, 5
      %v1948 = vor.u32 %v1944, %v1947
      %v1949 = vrot.slane %v1948, 4
      %v1951 = vshll.u32 %v1708, 16
      %v1953 = vrot.slane %v1951, 5
      %v1954 = vsel %vm225, %v1949, %v1953
      %v1955 = vshrl.u32 %v1708, 16
      %v1957 = vrot.slane %v1955, 4
      %v1958 = vor.u32 %v1957, %v1953
      %v1959 = vrot.slane %v1958, 4
      %v1961 = vshll.u32 %v1709, 16
      %v1963 = vrot.slane %v1961, 5
      %v1964 = vsel %vm225, %v1959, %v1963
      %v1966 = vshrl.u32 %v1710, 16
      %v1968 = vrot.slane %v1966, 4
      %v1969 = vshll.u32 %v1710, 16
      %v1971 = vrot.slane %v1969, 5
      %v1972 = vor.u32 %v1968, %v1971
      %v1973 = vrot.slane %v1972, 4
      %v1975 = vshll.u32 %v1711, 16
      %v1977 = vrot.slane %v1975, 5
      %v1978 = vsel %vm225, %v1973, %v1977
      %v1979 = vshrl.u32 %v1711, 16
      %v1981 = vrot.slane %v1979, 4
      %v1982 = vor.u32 %v1981, %v1977
      %v1983 = vrot.slane %v1982, 4
      %v1985 = vshll.u32 %v1712, 16
      %v1987 = vrot.slane %v1985, 5
      %v1988 = vsel %vm225, %v1983, %v1987
      %v1990 = vshrl.u32 %v1713, 16
      %v1992 = vrot.slane %v1990, 4
      %v1993 = vshll.u32 %v1713, 16
      %v1995 = vrot.slane %v1993, 5
      %v1996 = vor.u32 %v1992, %v1995
      %v1997 = vrot.slane %v1996, 4
      %v1999 = vshll.u32 %v1714, 16
      %v2001 = vrot.slane %v1999, 5
      %v2002 = vsel %vm225, %v1997, %v2001
      %v2003 = vshrl.u32 %v1714, 16
      %v2005 = vrot.slane %v2003, 4
      %v2006 = vor.u32 %v2005, %v2001
      %v2007 = vrot.slane %v2006, 4
      %v2009 = vshll.u32 %v1715, 16
      %v2011 = vrot.slane %v2009, 5
      %v2012 = vsel %vm225, %v2007, %v2011
      %v2014 = vshrl.u32 %v1716, 16
      %v2016 = vrot.slane %v2014, 4
      %v2017 = vshll.u32 %v1716, 16
      %v2019 = vrot.slane %v2017, 5
      %v2020 = vor.u32 %v2016, %v2019
      %v2021 = vrot.slane %v2020, 4
      %v2023 = vshll.u32 %v1717, 16
      %v2025 = vrot.slane %v2023, 5
      %v2026 = vsel %vm225, %v2021, %v2025
      %v2027 = vshrl.u32 %v1717, 16
      %v2029 = vrot.slane %v2027, 4
      %v2030 = vor.u32 %v2029, %v2025
      %v2031 = vrot.slane %v2030, 4
      %v2033 = vshll.u32 %v1718, 16
      %v2035 = vrot.slane %v2033, 5
      %v2036 = vsel %vm225, %v2031, %v2035
      %v2038 = vshrl.u32 %v1719, 16
      %v2040 = vrot.slane %v2038, 4
      %v2041 = vshll.u32 %v1719, 16
      %v2043 = vrot.slane %v2041, 5
      %v2044 = vor.u32 %v2040, %v2043
      %v2045 = vrot.slane %v2044, 4
      %v2047 = vshll.u32 %v1720, 16
      %v2049 = vrot.slane %v2047, 5
      %v2050 = vsel %vm225, %v2045, %v2049
      %v2051 = vshrl.u32 %v1720, 16
      %v2053 = vrot.slane %v2051, 4
      %v2054 = vor.u32 %v2053, %v2049
      %v2055 = vrot.slane %v2054, 4
      %v2057 = vshll.u32 %v1721, 16
      %v2059 = vrot.slane %v2057, 5
      %v2060 = vsel %vm225, %v2055, %v2059
      %v2062 = vshrl.u32 %v1722, 16
      %v2064 = vrot.slane %v2062, 4
      %v2065 = vshll.u32 %v1722, 16
      %v2067 = vrot.slane %v2065, 5
      %v2068 = vor.u32 %v2064, %v2067
      %v2069 = vrot.slane %v2068, 4
      %v2071 = vshll.u32 %v1723, 16
      %v2073 = vrot.slane %v2071, 5
      %v2074 = vsel %vm225, %v2069, %v2073
      %v2075 = vshrl.u32 %v1723, 16
      %v2077 = vrot.slane %v2075, 4
      %v2078 = vor.u32 %v2077, %v2073
      %v2079 = vrot.slane %v2078, 4
      %v2081 = vshll.u32 %v1724, 16
      %v2083 = vrot.slane %v2081, 5
      %v2084 = vsel %vm225, %v2079, %v2083
      %s2085 = scalar_lea.vmem %s1, 96
      %v2086 = vld [vmem:[%s2085] sm:$0xf]
      %v2087 = vld [vmem:[%s2085 + $0x4] sm:$0xf]
      %v2088 = vld [vmem:[%s2085 + $0x8] sm:$0xf]
      %v2089 = vld [vmem:[%s2085 + $0xc] sm:$0xf]
      %v2090 = vld [vmem:[%s2085 + $0x10] sm:$0xf]
      %v2091 = vld [vmem:[%s2085 + $0x14] sm:$0xf]
      %v2092 = vunpack.c.l.b16 %v1738
      %v2093 = vunpack.c.l.b16 %v1748
      %v2094 = vunpack.c.l.b16 %v1762
      %v2095 = vunpack.c.l.b16 %v1772
      %v2096 = vunpack.c.l.b16 %v1786
      %v2097 = vunpack.c.l.b16 %v1796
      %v2098 = vunpack.c.l.b16 %v1810
      %v2099 = vunpack.c.l.b16 %v1820
      %v2100 = vunpack.c.l.b16 %v1834
      %v2101 = vunpack.c.l.b16 %v1844
      %v2102 = vunpack.c.l.b16 %v1858
      %v2103 = vunpack.c.l.b16 %v1868
      %v2104 = vunpack.c.l.b16 %v1882
      %v2105 = vunpack.c.l.b16 %v1892
      %v2106 = vunpack.c.l.b16 %v1906
      %v2107 = vunpack.c.l.b16 %v1916
      %v2108 = vunpack.c.l.b16 %v1930
      %v2109 = vunpack.c.l.b16 %v1940
      %v2110 = vunpack.c.l.b16 %v1954
      %v2111 = vunpack.c.l.b16 %v1964
      %v2112 = vunpack.c.l.b16 %v1978
      %v2113 = vunpack.c.l.b16 %v1988
      %v2114 = vunpack.c.l.b16 %v2002
      %v2115 = vunpack.c.l.b16 %v2012
      %v2116 = vunpack.c.l.b16 %v2026
      %v2117 = vunpack.c.l.b16 %v2036
      %v2118 = vunpack.c.l.b16 %v2050
      %v2119 = vunpack.c.l.b16 %v2060
      %v2120 = vunpack.c.l.b16 %v2074
      %v2121 = vunpack.c.l.b16 %v2084
      %v2122 = vpack.c.b16 %v2093, %v2092
      %v2123 = vpack.c.b16 %v2095, %v2094
      %v2124 = vpack.c.b16 %v2097, %v2096
      %v2125 = vpack.c.b16 %v2099, %v2098
      %v2126 = vpack.c.b16 %v2101, %v2100
      %v2127 = vpack.c.b16 %v2103, %v2102
      %v2128 = vpack.c.b16 %v2105, %v2104
      %v2129 = vpack.c.b16 %v2107, %v2106
      %v2130 = vpack.c.b16 %v2109, %v2108
      %v2131 = vpack.c.b16 %v2111, %v2110
      %v2132 = vpack.c.b16 %v2113, %v2112
      %v2133 = vpack.c.b16 %v2115, %v2114
      %v2134 = vpack.c.b16 %v2117, %v2116
      %v2135 = vpack.c.b16 %v2119, %v2118
      %v2136 = vpack.c.b16 %v2121, %v2120
      %v2143 = vunpack.c.l.b16 %v2086
      %v2144 = vunpack.c.l.b16 %v2087
      %v2145 = vunpack.c.l.b16 %v2088
      %v2146 = vunpack.c.l.b16 %v2089
      %v2147 = vunpack.c.l.b16 %v2090
      %v2148 = vunpack.c.l.b16 %v2091
      %v2149 = vpack.c.b16 %v2144, %v2143
      %v2150 = vpack.c.b16 %v2146, %v2145
      %v2151 = vpack.c.b16 %v2148, %v2147
      %v2156 = vsel %vm656, %v2122, 0
      %v2159 = vsel %vm656, %v2123, 0
      %v2162 = vsel %vm656, %v2124, 0
      %v2165 = vsel %vm656, %v2125, 0
      %v2168 = vsel %vm656, %v2126, 0
      %v2171 = vsel %vm656, %v2127, 0
      %v2174 = vsel %vm656, %v2128, 0
      %v2177 = vsel %vm656, %v2129, 0
      %v2180 = vsel %vm656, %v2130, 0
      %v2183 = vsel %vm656, %v2131, 0
      %v2186 = vsel %vm656, %v2132, 0
      %v2189 = vsel %vm656, %v2133, 0
      %v2192 = vsel %vm656, %v2134, 0
      %v2195 = vsel %vm656, %v2135, 0
      %v2198 = vsel %vm656, %v2136, 0
      %2200 = vmatpush.bf16.msra.mxu0 0
      %2201 = vmatpush.bf16.msra.mxu0 0
      %2202 = vmatpush.bf16.msra.mxu0 0
      %2203 = vmatpush.bf16.msra.mxu0 0
      %2204 = vmatpush.bf16.msra.mxu0 0
      %2205 = vmatpush.bf16.msra.mxu0 %v2151
      %2206 = vmatpush.bf16.msra.mxu0 %v2150
      %2207 = vmatpush.bf16.msra.mxu0 %v2149
      %2208 = vmatmul.bf16.gmra.mxu0 %v2156
      %v2209 = vpop.f32.mrf.mxu0
      %v2210 = vadd.f32 0.0, %v2209
      %v2211 = vpop.f32.mrf.mxu0
      %v2212 = vadd.f32 0.0, %v2211
      %2213 = vmatmul.bf16.gmra.mxu0 %v2159
      %v2214 = vpop.f32.mrf.mxu0
      %v2215 = vadd.f32 0.0, %v2214
      %v2216 = vpop.f32.mrf.mxu0
      %v2217 = vadd.f32 0.0, %v2216
      %2218 = vmatmul.bf16.gmra.mxu0 %v2162
      %v2219 = vpop.f32.mrf.mxu0
      %v2220 = vadd.f32 0.0, %v2219
      %v2221 = vpop.f32.mrf.mxu0
      %v2222 = vadd.f32 0.0, %v2221
      %2223 = vmatmul.bf16.gmra.mxu0 %v2165
      %v2224 = vpop.f32.mrf.mxu0
      %v2225 = vadd.f32 0.0, %v2224
      %v2226 = vpop.f32.mrf.mxu0
      %v2227 = vadd.f32 0.0, %v2226
      %2228 = vmatmul.bf16.gmra.mxu0 %v2168
      %v2229 = vpop.f32.mrf.mxu0
      %v2230 = vadd.f32 0.0, %v2229
      %v2231 = vpop.f32.mrf.mxu0
      %v2232 = vadd.f32 0.0, %v2231
      %2233 = vmatmul.bf16.gmra.mxu0 %v2171
      %v2234 = vpop.f32.mrf.mxu0
      %v2235 = vadd.f32 0.0, %v2234
      %v2236 = vpop.f32.mrf.mxu0
      %v2237 = vadd.f32 0.0, %v2236
      %2238 = vmatmul.bf16.gmra.mxu0 %v2174
      %v2239 = vpop.f32.mrf.mxu0
      %v2240 = vadd.f32 0.0, %v2239
      %v2241 = vpop.f32.mrf.mxu0
      %v2242 = vadd.f32 0.0, %v2241
      %2243 = vmatmul.bf16.gmra.mxu0 %v2177
      %v2244 = vpop.f32.mrf.mxu0
      %v2245 = vadd.f32 0.0, %v2244
      %v2246 = vpop.f32.mrf.mxu0
      %v2247 = vadd.f32 0.0, %v2246
      %2248 = vmatmul.bf16.gmra.mxu0 %v2180
      %v2249 = vpop.f32.mrf.mxu0
      %v2250 = vadd.f32 0.0, %v2249
      %v2251 = vpop.f32.mrf.mxu0
      %v2252 = vadd.f32 0.0, %v2251
      %2253 = vmatmul.bf16.gmra.mxu0 %v2183
      %v2254 = vpop.f32.mrf.mxu0
      %v2255 = vadd.f32 0.0, %v2254
      %v2256 = vpop.f32.mrf.mxu0
      %v2257 = vadd.f32 0.0, %v2256
      %2258 = vmatmul.bf16.gmra.mxu0 %v2186
      %v2259 = vpop.f32.mrf.mxu0
      %v2260 = vadd.f32 0.0, %v2259
      %v2261 = vpop.f32.mrf.mxu0
      %v2262 = vadd.f32 0.0, %v2261
      %2263 = vmatmul.bf16.gmra.mxu0 %v2189
      %v2264 = vpop.f32.mrf.mxu0
      %v2265 = vadd.f32 0.0, %v2264
      %v2266 = vpop.f32.mrf.mxu0
      %v2267 = vadd.f32 0.0, %v2266
      %2268 = vmatmul.bf16.gmra.mxu0 %v2192
      %v2269 = vpop.f32.mrf.mxu0
      %v2270 = vadd.f32 0.0, %v2269
      %v2271 = vpop.f32.mrf.mxu0
      %v2272 = vadd.f32 0.0, %v2271
      %2273 = vmatmul.bf16.gmra.mxu0 %v2195
      %v2274 = vpop.f32.mrf.mxu0
      %v2275 = vadd.f32 0.0, %v2274
      %v2276 = vpop.f32.mrf.mxu0
      %v2277 = vadd.f32 0.0, %v2276
      %2278 = vmatmul.bf16.gmra.mxu0 %v2198
      %v2279 = vpop.f32.mrf.mxu0
      %v2280 = vadd.f32 0.0, %v2279
      %v2281 = vpop.f32.mrf.mxu0
      %v2282 = vadd.f32 0.0, %v2281
      %2283 = vdwg.mxu0
      %v2284 = vadd.f32 %v1650, %v2210
      %v2285 = vadd.f32 %v1651, %v2212
      %v2286 = vadd.f32 %v1652, %v2215
      %v2287 = vadd.f32 %v1653, %v2217
      %v2288 = vadd.f32 %v1654, %v2220
      %v2289 = vadd.f32 %v1655, %v2222
      %v2290 = vadd.f32 %v1656, %v2225
      %v2291 = vadd.f32 %v1657, %v2227
      %v2292 = vadd.f32 %v1658, %v2230
      %v2293 = vadd.f32 %v1659, %v2232
      %v2294 = vadd.f32 %v1660, %v2235
      %v2295 = vadd.f32 %v1661, %v2237
      %v2296 = vadd.f32 %v1662, %v2240
      %v2297 = vadd.f32 %v1663, %v2242
      %v2298 = vadd.f32 %v1664, %v2245
      %v2299 = vadd.f32 %v1665, %v2247
      %v2300 = vadd.f32 %v1666, %v2250
      %v2301 = vadd.f32 %v1667, %v2252
      %v2302 = vadd.f32 %v1668, %v2255
      %v2303 = vadd.f32 %v1669, %v2257
      %v2304 = vadd.f32 %v1670, %v2260
      %v2305 = vadd.f32 %v1671, %v2262
      %v2306 = vadd.f32 %v1672, %v2265
      %v2307 = vadd.f32 %v1673, %v2267
      %v2308 = vadd.f32 %v1674, %v2270
      %v2309 = vadd.f32 %v1675, %v2272
      %v2310 = vadd.f32 %v1676, %v2275
      %v2311 = vadd.f32 %v1677, %v2277
      %v2312 = vadd.f32 %v1678, %v2280
      %v2313 = vadd.f32 %v1679, %v2282
      %v2314 = vld [vmem:[%s1390] sm:$0xe]
      %v2315 = vld [vmem:[%s1390 + $0xc] sm:$0xe]
      %v2316 = vld [vmem:[%s1390 + $0x18] sm:$0xe]
      %v2317 = vld [vmem:[%s1390 + $0x24] sm:$0xe]
      %v2318 = vld [vmem:[%s1390 + $0x30] sm:$0xe]
      %v2319 = vld [vmem:[%s1390 + $0x3c] sm:$0xe]
      %v2320 = vld [vmem:[%s1390 + $0x48] sm:$0xe]
      %v2321 = vld [vmem:[%s1390 + $0x54] sm:$0xe]
      %v2322 = vld [vmem:[%s1390 + $0x60] sm:$0xe]
      %v2323 = vld [vmem:[%s1390 + $0x6c] sm:$0xe]
      %v2324 = vld [vmem:[%s1390 + $0x78] sm:$0xe]
      %v2325 = vld [vmem:[%s1390 + $0x84] sm:$0xe]
      %v2326 = vld [vmem:[%s1390 + $0x90] sm:$0xe]
      %v2327 = vld [vmem:[%s1390 + $0x9c] sm:$0xe]
      %v2328 = vld [vmem:[%s1390 + $0xa8] sm:$0xe]
      %v2374 = vrot.slane %v2314, 5
      %v2375 = vrot.slane %v2374, 4
      %v2376 = vrot.slane %v1681, 5
      %v2377 = vsel %vm1055, %v2375, %v2376
      %v2378 = vrot.slane %v2376, 4
      %v2379 = vrot.slane %v1682, 5
      %v2380 = vsel %vm1055, %v2378, %v2379
      %v2381 = vrot.slane %v2315, 5
      %v2382 = vrot.slane %v2381, 4
      %v2383 = vrot.slane %v1684, 5
      %v2384 = vsel %vm1055, %v2382, %v2383
      %v2385 = vrot.slane %v2383, 4
      %v2386 = vrot.slane %v1685, 5
      %v2387 = vsel %vm1055, %v2385, %v2386
      %v2388 = vrot.slane %v2316, 5
      %v2389 = vrot.slane %v2388, 4
      %v2390 = vrot.slane %v1687, 5
      %v2391 = vsel %vm1055, %v2389, %v2390
      %v2392 = vrot.slane %v2390, 4
      %v2393 = vrot.slane %v1688, 5
      %v2394 = vsel %vm1055, %v2392, %v2393
      %v2395 = vrot.slane %v2317, 5
      %v2396 = vrot.slane %v2395, 4
      %v2397 = vrot.slane %v1690, 5
      %v2398 = vsel %vm1055, %v2396, %v2397
      %v2399 = vrot.slane %v2397, 4
      %v2400 = vrot.slane %v1691, 5
      %v2401 = vsel %vm1055, %v2399, %v2400
      %v2402 = vrot.slane %v2318, 5
      %v2403 = vrot.slane %v2402, 4
      %v2404 = vrot.slane %v1693, 5
      %v2405 = vsel %vm1055, %v2403, %v2404
      %v2406 = vrot.slane %v2404, 4
      %v2407 = vrot.slane %v1694, 5
      %v2408 = vsel %vm1055, %v2406, %v2407
      %v2409 = vrot.slane %v2319, 5
      %v2410 = vrot.slane %v2409, 4
      %v2411 = vrot.slane %v1696, 5
      %v2412 = vsel %vm1055, %v2410, %v2411
      %v2413 = vrot.slane %v2411, 4
      %v2414 = vrot.slane %v1697, 5
      %v2415 = vsel %vm1055, %v2413, %v2414
      %v2416 = vrot.slane %v2320, 5
      %v2417 = vrot.slane %v2416, 4
      %v2418 = vrot.slane %v1699, 5
      %v2419 = vsel %vm1055, %v2417, %v2418
      %v2420 = vrot.slane %v2418, 4
      %v2421 = vrot.slane %v1700, 5
      %v2422 = vsel %vm1055, %v2420, %v2421
      %v2423 = vrot.slane %v2321, 5
      %v2424 = vrot.slane %v2423, 4
      %v2425 = vrot.slane %v1702, 5
      %v2426 = vsel %vm1055, %v2424, %v2425
      %v2427 = vrot.slane %v2425, 4
      %v2428 = vrot.slane %v1703, 5
      %v2429 = vsel %vm1055, %v2427, %v2428
      %v2430 = vrot.slane %v2322, 5
      %v2431 = vrot.slane %v2430, 4
      %v2432 = vrot.slane %v1705, 5
      %v2433 = vsel %vm1055, %v2431, %v2432
      %v2434 = vrot.slane %v2432, 4
      %v2435 = vrot.slane %v1706, 5
      %v2436 = vsel %vm1055, %v2434, %v2435
      %v2437 = vrot.slane %v2323, 5
      %v2438 = vrot.slane %v2437, 4
      %v2439 = vrot.slane %v1708, 5
      %v2440 = vsel %vm1055, %v2438, %v2439
      %v2441 = vrot.slane %v2439, 4
      %v2442 = vrot.slane %v1709, 5
      %v2443 = vsel %vm1055, %v2441, %v2442
      %v2444 = vrot.slane %v2324, 5
      %v2445 = vrot.slane %v2444, 4
      %v2446 = vrot.slane %v1711, 5
      %v2447 = vsel %vm1055, %v2445, %v2446
      %v2448 = vrot.slane %v2446, 4
      %v2449 = vrot.slane %v1712, 5
      %v2450 = vsel %vm1055, %v2448, %v2449
      %v2451 = vrot.slane %v2325, 5
      %v2452 = vrot.slane %v2451, 4
      %v2453 = vrot.slane %v1714, 5
      %v2454 = vsel %vm1055, %v2452, %v2453
      %v2455 = vrot.slane %v2453, 4
      %v2456 = vrot.slane %v1715, 5
      %v2457 = vsel %vm1055, %v2455, %v2456
      %v2458 = vrot.slane %v2326, 5
      %v2459 = vrot.slane %v2458, 4
      %v2460 = vrot.slane %v1717, 5
      %v2461 = vsel %vm1055, %v2459, %v2460
      %v2462 = vrot.slane %v2460, 4
      %v2463 = vrot.slane %v1718, 5
      %v2464 = vsel %vm1055, %v2462, %v2463
      %v2465 = vrot.slane %v2327, 5
      %v2466 = vrot.slane %v2465, 4
      %v2467 = vrot.slane %v1720, 5
      %v2468 = vsel %vm1055, %v2466, %v2467
      %v2469 = vrot.slane %v2467, 4
      %v2470 = vrot.slane %v1721, 5
      %v2471 = vsel %vm1055, %v2469, %v2470
      %v2472 = vrot.slane %v2328, 5
      %v2473 = vrot.slane %v2472, 4
      %v2474 = vrot.slane %v1723, 5
      %v2475 = vsel %vm1055, %v2473, %v2474
      %v2476 = vrot.slane %v2474, 4
      %v2477 = vrot.slane %v1724, 5
      %v2478 = vsel %vm1055, %v2476, %v2477
      %s2479 = scalar_lea.vmem %s1, 120
      %v2480 = vld [vmem:[%s2479] sm:$0xf]
      %v2481 = vld [vmem:[%s2479 + $0x4] sm:$0xf]
      %v2482 = vld [vmem:[%s2479 + $0x8] sm:$0xf]
      %v2483 = vld [vmem:[%s2479 + $0xc] sm:$0xf]
      %v2484 = vld [vmem:[%s2479 + $0x10] sm:$0xf]
      %v2485 = vld [vmem:[%s2479 + $0x14] sm:$0xf]
      %v2486 = vunpack.c.l.b16 %v2377
      %v2487 = vunpack.c.l.b16 %v2380
      %v2488 = vunpack.c.l.b16 %v2384
      %v2489 = vunpack.c.l.b16 %v2387
      %v2490 = vunpack.c.l.b16 %v2391
      %v2491 = vunpack.c.l.b16 %v2394
      %v2492 = vunpack.c.l.b16 %v2398
      %v2493 = vunpack.c.l.b16 %v2401
      %v2494 = vunpack.c.l.b16 %v2405
      %v2495 = vunpack.c.l.b16 %v2408
      %v2496 = vunpack.c.l.b16 %v2412
      %v2497 = vunpack.c.l.b16 %v2415
      %v2498 = vunpack.c.l.b16 %v2419
      %v2499 = vunpack.c.l.b16 %v2422
      %v2500 = vunpack.c.l.b16 %v2426
      %v2501 = vunpack.c.l.b16 %v2429
      %v2502 = vunpack.c.l.b16 %v2433
      %v2503 = vunpack.c.l.b16 %v2436
      %v2504 = vunpack.c.l.b16 %v2440
      %v2505 = vunpack.c.l.b16 %v2443
      %v2506 = vunpack.c.l.b16 %v2447
      %v2507 = vunpack.c.l.b16 %v2450
      %v2508 = vunpack.c.l.b16 %v2454
      %v2509 = vunpack.c.l.b16 %v2457
      %v2510 = vunpack.c.l.b16 %v2461
      %v2511 = vunpack.c.l.b16 %v2464
      %v2512 = vunpack.c.l.b16 %v2468
      %v2513 = vunpack.c.l.b16 %v2471
      %v2514 = vunpack.c.l.b16 %v2475
      %v2515 = vunpack.c.l.b16 %v2478
      %v2516 = vpack.c.b16 %v2487, %v2486
      %v2517 = vpack.c.b16 %v2489, %v2488
      %v2518 = vpack.c.b16 %v2491, %v2490
      %v2519 = vpack.c.b16 %v2493, %v2492
      %v2520 = vpack.c.b16 %v2495, %v2494
      %v2521 = vpack.c.b16 %v2497, %v2496
      %v2522 = vpack.c.b16 %v2499, %v2498
      %v2523 = vpack.c.b16 %v2501, %v2500
      %v2524 = vpack.c.b16 %v2503, %v2502
      %v2525 = vpack.c.b16 %v2505, %v2504
      %v2526 = vpack.c.b16 %v2507, %v2506
      %v2527 = vpack.c.b16 %v2509, %v2508
      %v2528 = vpack.c.b16 %v2511, %v2510
      %v2529 = vpack.c.b16 %v2513, %v2512
      %v2530 = vpack.c.b16 %v2515, %v2514
      %v2537 = vunpack.c.l.b16 %v2480
      %v2538 = vunpack.c.l.b16 %v2481
      %v2539 = vunpack.c.l.b16 %v2482
      %v2540 = vunpack.c.l.b16 %v2483
      %v2541 = vunpack.c.l.b16 %v2484
      %v2542 = vunpack.c.l.b16 %v2485
      %v2543 = vpack.c.b16 %v2538, %v2537
      %v2544 = vpack.c.b16 %v2540, %v2539
      %v2545 = vpack.c.b16 %v2542, %v2541
      %v2550 = vsel %vm656, %v2516, 0
      %v2553 = vsel %vm656, %v2517, 0
      %v2556 = vsel %vm656, %v2518, 0
      %v2559 = vsel %vm656, %v2519, 0
      %v2562 = vsel %vm656, %v2520, 0
      %v2565 = vsel %vm656, %v2521, 0
      %v2568 = vsel %vm656, %v2522, 0
      %v2571 = vsel %vm656, %v2523, 0
      %v2574 = vsel %vm656, %v2524, 0
      %v2577 = vsel %vm656, %v2525, 0
      %v2580 = vsel %vm656, %v2526, 0
      %v2583 = vsel %vm656, %v2527, 0
      %v2586 = vsel %vm656, %v2528, 0
      %v2589 = vsel %vm656, %v2529, 0
      %v2592 = vsel %vm656, %v2530, 0
      %2594 = vmatpush.bf16.msra.mxu0 0
      %2595 = vmatpush.bf16.msra.mxu0 0
      %2596 = vmatpush.bf16.msra.mxu0 0
      %2597 = vmatpush.bf16.msra.mxu0 0
      %2598 = vmatpush.bf16.msra.mxu0 0
      %2599 = vmatpush.bf16.msra.mxu0 %v2545
      %2600 = vmatpush.bf16.msra.mxu0 %v2544
      %2601 = vmatpush.bf16.msra.mxu0 %v2543
      %2602 = vmatmul.bf16.gmra.mxu0 %v2550
      %v2603 = vpop.f32.mrf.mxu0
      %v2604 = vadd.f32 0.0, %v2603
      %v2605 = vpop.f32.mrf.mxu0
      %v2606 = vadd.f32 0.0, %v2605
      %2607 = vmatmul.bf16.gmra.mxu0 %v2553
      %v2608 = vpop.f32.mrf.mxu0
      %v2609 = vadd.f32 0.0, %v2608
      %v2610 = vpop.f32.mrf.mxu0
      %v2611 = vadd.f32 0.0, %v2610
      %2612 = vmatmul.bf16.gmra.mxu0 %v2556
      %v2613 = vpop.f32.mrf.mxu0
      %v2614 = vadd.f32 0.0, %v2613
      %v2615 = vpop.f32.mrf.mxu0
      %v2616 = vadd.f32 0.0, %v2615
      %2617 = vmatmul.bf16.gmra.mxu0 %v2559
      %v2618 = vpop.f32.mrf.mxu0
      %v2619 = vadd.f32 0.0, %v2618
      %v2620 = vpop.f32.mrf.mxu0
      %v2621 = vadd.f32 0.0, %v2620
      %2622 = vmatmul.bf16.gmra.mxu0 %v2562
      %v2623 = vpop.f32.mrf.mxu0
      %v2624 = vadd.f32 0.0, %v2623
      %v2625 = vpop.f32.mrf.mxu0
      %v2626 = vadd.f32 0.0, %v2625
      %2627 = vmatmul.bf16.gmra.mxu0 %v2565
      %v2628 = vpop.f32.mrf.mxu0
      %v2629 = vadd.f32 0.0, %v2628
      %v2630 = vpop.f32.mrf.mxu0
      %v2631 = vadd.f32 0.0, %v2630
      %2632 = vmatmul.bf16.gmra.mxu0 %v2568
      %v2633 = vpop.f32.mrf.mxu0
      %v2634 = vadd.f32 0.0, %v2633
      %v2635 = vpop.f32.mrf.mxu0
      %v2636 = vadd.f32 0.0, %v2635
      %2637 = vmatmul.bf16.gmra.mxu0 %v2571
      %v2638 = vpop.f32.mrf.mxu0
      %v2639 = vadd.f32 0.0, %v2638
      %v2640 = vpop.f32.mrf.mxu0
      %v2641 = vadd.f32 0.0, %v2640
      %2642 = vmatmul.bf16.gmra.mxu0 %v2574
      %v2643 = vpop.f32.mrf.mxu0
      %v2644 = vadd.f32 0.0, %v2643
      %v2645 = vpop.f32.mrf.mxu0
      %v2646 = vadd.f32 0.0, %v2645
      %2647 = vmatmul.bf16.gmra.mxu0 %v2577
      %v2648 = vpop.f32.mrf.mxu0
      %v2649 = vadd.f32 0.0, %v2648
      %v2650 = vpop.f32.mrf.mxu0
      %v2651 = vadd.f32 0.0, %v2650
      %2652 = vmatmul.bf16.gmra.mxu0 %v2580
      %v2653 = vpop.f32.mrf.mxu0
      %v2654 = vadd.f32 0.0, %v2653
      %v2655 = vpop.f32.mrf.mxu0
      %v2656 = vadd.f32 0.0, %v2655
      %2657 = vmatmul.bf16.gmra.mxu0 %v2583
      %v2658 = vpop.f32.mrf.mxu0
      %v2659 = vadd.f32 0.0, %v2658
      %v2660 = vpop.f32.mrf.mxu0
      %v2661 = vadd.f32 0.0, %v2660
      %2662 = vmatmul.bf16.gmra.mxu0 %v2586
      %v2663 = vpop.f32.mrf.mxu0
      %v2664 = vadd.f32 0.0, %v2663
      %v2665 = vpop.f32.mrf.mxu0
      %v2666 = vadd.f32 0.0, %v2665
      %2667 = vmatmul.bf16.gmra.mxu0 %v2589
      %v2668 = vpop.f32.mrf.mxu0
      %v2669 = vadd.f32 0.0, %v2668
      %v2670 = vpop.f32.mrf.mxu0
      %v2671 = vadd.f32 0.0, %v2670
      %2672 = vmatmul.bf16.gmra.mxu0 %v2592
      %v2673 = vpop.f32.mrf.mxu0
      %v2674 = vadd.f32 0.0, %v2673
      %v2675 = vpop.f32.mrf.mxu0
      %v2676 = vadd.f32 0.0, %v2675
      %2677 = vdwg.mxu0
      %v2678 = vadd.f32 %v2284, %v2604
      %v2679 = vadd.f32 %v2285, %v2606
      %v2680 = vadd.f32 %v2286, %v2609
      %v2681 = vadd.f32 %v2287, %v2611
      %v2682 = vadd.f32 %v2288, %v2614
      %v2683 = vadd.f32 %v2289, %v2616
      %v2684 = vadd.f32 %v2290, %v2619
      %v2685 = vadd.f32 %v2291, %v2621
      %v2686 = vadd.f32 %v2292, %v2624
      %v2687 = vadd.f32 %v2293, %v2626
      %v2688 = vadd.f32 %v2294, %v2629
      %v2689 = vadd.f32 %v2295, %v2631
      %v2690 = vadd.f32 %v2296, %v2634
      %v2691 = vadd.f32 %v2297, %v2636
      %v2692 = vadd.f32 %v2298, %v2639
      %v2693 = vadd.f32 %v2299, %v2641
      %v2694 = vadd.f32 %v2300, %v2644
      %v2695 = vadd.f32 %v2301, %v2646
      %v2696 = vadd.f32 %v2302, %v2649
      %v2697 = vadd.f32 %v2303, %v2651
      %v2698 = vadd.f32 %v2304, %v2654
      %v2699 = vadd.f32 %v2305, %v2656
      %v2700 = vadd.f32 %v2306, %v2659
      %v2701 = vadd.f32 %v2307, %v2661
      %v2702 = vadd.f32 %v2308, %v2664
      %v2703 = vadd.f32 %v2309, %v2666
      %v2704 = vadd.f32 %v2310, %v2669
      %v2705 = vadd.f32 %v2311, %v2671
      %v2706 = vadd.f32 %v2312, %v2674
      %v2707 = vadd.f32 %v2313, %v2676
      %s2708 = scalar_lea.vmem %s165, 24
      %v2709 = vld [vmem:[%s2708] sm:$0xf]
      %v2710 = vld [vmem:[%s2708 + $0x4] sm:$0xf]
      %v2711 = vld [vmem:[%s2708 + $0xc] sm:$0xf]
      %v2712 = vld [vmem:[%s2708 + $0x10] sm:$0xf]
      %v2713 = vld [vmem:[%s2708 + $0x18] sm:$0xf]
      %v2714 = vld [vmem:[%s2708 + $0x1c] sm:$0xf]
      %v2715 = vld [vmem:[%s2708 + $0x24] sm:$0xf]
      %v2716 = vld [vmem:[%s2708 + $0x28] sm:$0xf]
      %v2717 = vld [vmem:[%s2708 + $0x30] sm:$0xf]
      %v2718 = vld [vmem:[%s2708 + $0x34] sm:$0xf]
      %v2719 = vld [vmem:[%s2708 + $0x3c] sm:$0xf]
      %v2720 = vld [vmem:[%s2708 + $0x40] sm:$0xf]
      %v2721 = vld [vmem:[%s2708 + $0x48] sm:$0xf]
      %v2722 = vld [vmem:[%s2708 + $0x4c] sm:$0xf]
      %v2723 = vld [vmem:[%s2708 + $0x54] sm:$0xf]
      %v2724 = vld [vmem:[%s2708 + $0x58] sm:$0xf]
      %v2725 = vld [vmem:[%s2708 + $0x60] sm:$0xf]
      %v2726 = vld [vmem:[%s2708 + $0x64] sm:$0xf]
      %v2727 = vld [vmem:[%s2708 + $0x6c] sm:$0xf]
      %v2728 = vld [vmem:[%s2708 + $0x70] sm:$0xf]
      %v2729 = vld [vmem:[%s2708 + $0x78] sm:$0xf]
      %v2730 = vld [vmem:[%s2708 + $0x7c] sm:$0xf]
      %v2731 = vld [vmem:[%s2708 + $0x84] sm:$0xf]
      %v2732 = vld [vmem:[%s2708 + $0x88] sm:$0xf]
      %v2733 = vld [vmem:[%s2708 + $0x90] sm:$0xf]
      %v2734 = vld [vmem:[%s2708 + $0x94] sm:$0xf]
      %v2735 = vld [vmem:[%s2708 + $0x9c] sm:$0xf]
      %v2736 = vld [vmem:[%s2708 + $0xa0] sm:$0xf]
      %v2737 = vld [vmem:[%s2708 + $0xa8] sm:$0xf]
      %v2738 = vld [vmem:[%s2708 + $0xac] sm:$0xf]
      %s2739 = scalar_lea.vmem %s1, 144
      %v2740 = vld [vmem:[%s2739] sm:$0xf]
      %v2741 = vld [vmem:[%s2739 + $0x4] sm:$0xf]
      %v2742 = vld [vmem:[%s2739 + $0x8] sm:$0xf]
      %v2743 = vld [vmem:[%s2739 + $0xc] sm:$0xf]
      %v2744 = vld [vmem:[%s2739 + $0x10] sm:$0xf]
      %v2745 = vld [vmem:[%s2739 + $0x14] sm:$0xf]
      %v2776 = vunpack.c.l.b16 %v2709
      %v2777 = vunpack.c.l.b16 %v2710
      %v2778 = vunpack.c.l.b16 %v2711
      %v2779 = vunpack.c.l.b16 %v2712
      %v2780 = vunpack.c.l.b16 %v2713
      %v2781 = vunpack.c.l.b16 %v2714
      %v2782 = vunpack.c.l.b16 %v2715
      %v2783 = vunpack.c.l.b16 %v2716
      %v2784 = vunpack.c.l.b16 %v2717
      %v2785 = vunpack.c.l.b16 %v2718
      %v2786 = vunpack.c.l.b16 %v2719
      %v2787 = vunpack.c.l.b16 %v2720
      %v2788 = vunpack.c.l.b16 %v2721
      %v2789 = vunpack.c.l.b16 %v2722
      %v2790 = vunpack.c.l.b16 %v2723
      %v2791 = vunpack.c.l.b16 %v2724
      %v2792 = vunpack.c.l.b16 %v2725
      %v2793 = vunpack.c.l.b16 %v2726
      %v2794 = vunpack.c.l.b16 %v2727
      %v2795 = vunpack.c.l.b16 %v2728
      %v2796 = vunpack.c.l.b16 %v2729
      %v2797 = vunpack.c.l.b16 %v2730
      %v2798 = vunpack.c.l.b16 %v2731
      %v2799 = vunpack.c.l.b16 %v2732
      %v2800 = vunpack.c.l.b16 %v2733
      %v2801 = vunpack.c.l.b16 %v2734
      %v2802 = vunpack.c.l.b16 %v2735
      %v2803 = vunpack.c.l.b16 %v2736
      %v2804 = vunpack.c.l.b16 %v2737
      %v2805 = vunpack.c.l.b16 %v2738
      %v2806 = vpack.c.b16 %v2777, %v2776
      %v2807 = vpack.c.b16 %v2779, %v2778
      %v2808 = vpack.c.b16 %v2781, %v2780
      %v2809 = vpack.c.b16 %v2783, %v2782
      %v2810 = vpack.c.b16 %v2785, %v2784
      %v2811 = vpack.c.b16 %v2787, %v2786
      %v2812 = vpack.c.b16 %v2789, %v2788
      %v2813 = vpack.c.b16 %v2791, %v2790
      %v2814 = vpack.c.b16 %v2793, %v2792
      %v2815 = vpack.c.b16 %v2795, %v2794
      %v2816 = vpack.c.b16 %v2797, %v2796
      %v2817 = vpack.c.b16 %v2799, %v2798
      %v2818 = vpack.c.b16 %v2801, %v2800
      %v2819 = vpack.c.b16 %v2803, %v2802
      %v2820 = vpack.c.b16 %v2805, %v2804
      %v2827 = vunpack.c.l.b16 %v2740
      %v2828 = vunpack.c.l.b16 %v2741
      %v2829 = vunpack.c.l.b16 %v2742
      %v2830 = vunpack.c.l.b16 %v2743
      %v2831 = vunpack.c.l.b16 %v2744
      %v2832 = vunpack.c.l.b16 %v2745
      %v2833 = vpack.c.b16 %v2828, %v2827
      %v2834 = vpack.c.b16 %v2830, %v2829
      %v2835 = vpack.c.b16 %v2832, %v2831
      %v2840 = vsel %vm656, %v2806, 0
      %v2843 = vsel %vm656, %v2807, 0
      %v2846 = vsel %vm656, %v2808, 0
      %v2849 = vsel %vm656, %v2809, 0
      %v2852 = vsel %vm656, %v2810, 0
      %v2855 = vsel %vm656, %v2811, 0
      %v2858 = vsel %vm656, %v2812, 0
      %v2861 = vsel %vm656, %v2813, 0
      %v2864 = vsel %vm656, %v2814, 0
      %v2867 = vsel %vm656, %v2815, 0
      %v2870 = vsel %vm656, %v2816, 0
      %v2873 = vsel %vm656, %v2817, 0
      %v2876 = vsel %vm656, %v2818, 0
      %v2879 = vsel %vm656, %v2819, 0
      %v2882 = vsel %vm656, %v2820, 0
      %2884 = vmatpush.bf16.msra.mxu0 0
      %2885 = vmatpush.bf16.msra.mxu0 0
      %2886 = vmatpush.bf16.msra.mxu0 0
      %2887 = vmatpush.bf16.msra.mxu0 0
      %2888 = vmatpush.bf16.msra.mxu0 0
      %2889 = vmatpush.bf16.msra.mxu0 %v2835
      %2890 = vmatpush.bf16.msra.mxu0 %v2834
      %2891 = vmatpush.bf16.msra.mxu0 %v2833
      %2892 = vmatmul.bf16.gmra.mxu0 %v2840
      %v2893 = vpop.f32.mrf.mxu0
      %v2894 = vadd.f32 0.0, %v2893
      %v2895 = vpop.f32.mrf.mxu0
      %v2896 = vadd.f32 0.0, %v2895
      %2897 = vmatmul.bf16.gmra.mxu0 %v2843
      %v2898 = vpop.f32.mrf.mxu0
      %v2899 = vadd.f32 0.0, %v2898
      %v2900 = vpop.f32.mrf.mxu0
      %v2901 = vadd.f32 0.0, %v2900
      %2902 = vmatmul.bf16.gmra.mxu0 %v2846
      %v2903 = vpop.f32.mrf.mxu0
      %v2904 = vadd.f32 0.0, %v2903
      %v2905 = vpop.f32.mrf.mxu0
      %v2906 = vadd.f32 0.0, %v2905
      %2907 = vmatmul.bf16.gmra.mxu0 %v2849
      %v2908 = vpop.f32.mrf.mxu0
      %v2909 = vadd.f32 0.0, %v2908
      %v2910 = vpop.f32.mrf.mxu0
      %v2911 = vadd.f32 0.0, %v2910
      %2912 = vmatmul.bf16.gmra.mxu0 %v2852
      %v2913 = vpop.f32.mrf.mxu0
      %v2914 = vadd.f32 0.0, %v2913
      %v2915 = vpop.f32.mrf.mxu0
      %v2916 = vadd.f32 0.0, %v2915
      %2917 = vmatmul.bf16.gmra.mxu0 %v2855
      %v2918 = vpop.f32.mrf.mxu0
      %v2919 = vadd.f32 0.0, %v2918
      %v2920 = vpop.f32.mrf.mxu0
      %v2921 = vadd.f32 0.0, %v2920
      %2922 = vmatmul.bf16.gmra.mxu0 %v2858
      %v2923 = vpop.f32.mrf.mxu0
      %v2924 = vadd.f32 0.0, %v2923
      %v2925 = vpop.f32.mrf.mxu0
      %v2926 = vadd.f32 0.0, %v2925
      %2927 = vmatmul.bf16.gmra.mxu0 %v2861
      %v2928 = vpop.f32.mrf.mxu0
      %v2929 = vadd.f32 0.0, %v2928
      %v2930 = vpop.f32.mrf.mxu0
      %v2931 = vadd.f32 0.0, %v2930
      %2932 = vmatmul.bf16.gmra.mxu0 %v2864
      %v2933 = vpop.f32.mrf.mxu0
      %v2934 = vadd.f32 0.0, %v2933
      %v2935 = vpop.f32.mrf.mxu0
      %v2936 = vadd.f32 0.0, %v2935
      %2937 = vmatmul.bf16.gmra.mxu0 %v2867
      %v2938 = vpop.f32.mrf.mxu0
      %v2939 = vadd.f32 0.0, %v2938
      %v2940 = vpop.f32.mrf.mxu0
      %v2941 = vadd.f32 0.0, %v2940
      %2942 = vmatmul.bf16.gmra.mxu0 %v2870
      %v2943 = vpop.f32.mrf.mxu0
      %v2944 = vadd.f32 0.0, %v2943
      %v2945 = vpop.f32.mrf.mxu0
      %v2946 = vadd.f32 0.0, %v2945
      %2947 = vmatmul.bf16.gmra.mxu0 %v2873
      %v2948 = vpop.f32.mrf.mxu0
      %v2949 = vadd.f32 0.0, %v2948
      %v2950 = vpop.f32.mrf.mxu0
      %v2951 = vadd.f32 0.0, %v2950
      %2952 = vmatmul.bf16.gmra.mxu0 %v2876
      %v2953 = vpop.f32.mrf.mxu0
      %v2954 = vadd.f32 0.0, %v2953
      %v2955 = vpop.f32.mrf.mxu0
      %v2956 = vadd.f32 0.0, %v2955
      %2957 = vmatmul.bf16.gmra.mxu0 %v2879
      %v2958 = vpop.f32.mrf.mxu0
      %v2959 = vadd.f32 0.0, %v2958
      %v2960 = vpop.f32.mrf.mxu0
      %v2961 = vadd.f32 0.0, %v2960
      %2962 = vmatmul.bf16.gmra.mxu0 %v2882
      %v2963 = vpop.f32.mrf.mxu0
      %v2964 = vadd.f32 0.0, %v2963
      %v2965 = vpop.f32.mrf.mxu0
      %v2966 = vadd.f32 0.0, %v2965
      %2967 = vdwg.mxu0
      %v2968 = vadd.f32 %v2678, %v2894
      %v2969 = vadd.f32 %v2679, %v2896
      %v2970 = vadd.f32 %v2680, %v2899
      %v2971 = vadd.f32 %v2681, %v2901
      %v2972 = vadd.f32 %v2682, %v2904
      %v2973 = vadd.f32 %v2683, %v2906
      %v2974 = vadd.f32 %v2684, %v2909
      %v2975 = vadd.f32 %v2685, %v2911
      %v2976 = vadd.f32 %v2686, %v2914
      %v2977 = vadd.f32 %v2687, %v2916
      %v2978 = vadd.f32 %v2688, %v2919
      %v2979 = vadd.f32 %v2689, %v2921
      %v2980 = vadd.f32 %v2690, %v2924
      %v2981 = vadd.f32 %v2691, %v2926
      %v2982 = vadd.f32 %v2692, %v2929
      %v2983 = vadd.f32 %v2693, %v2931
      %v2984 = vadd.f32 %v2694, %v2934
      %v2985 = vadd.f32 %v2695, %v2936
      %v2986 = vadd.f32 %v2696, %v2939
      %v2987 = vadd.f32 %v2697, %v2941
      %v2988 = vadd.f32 %v2698, %v2944
      %v2989 = vadd.f32 %v2699, %v2946
      %v2990 = vadd.f32 %v2700, %v2949
      %v2991 = vadd.f32 %v2701, %v2951
      %v2992 = vadd.f32 %v2702, %v2954
      %v2993 = vadd.f32 %v2703, %v2956
      %v2994 = vadd.f32 %v2704, %v2959
      %v2995 = vadd.f32 %v2705, %v2961
      %v2996 = vadd.f32 %v2706, %v2964
      %v2997 = vadd.f32 %v2707, %v2966
      %v2998 = vld [vmem:[%s2708] sm:$0xf]
      %v2999 = vld [vmem:[%s2708 + $0x4] sm:$0xf]
      %v3000 = vld [vmem:[%s2708 + $0x8] sm:$0x1]
      %v3001 = vld [vmem:[%s2708 + $0xc] sm:$0xf]
      %v3002 = vld [vmem:[%s2708 + $0x10] sm:$0xf]
      %v3003 = vld [vmem:[%s2708 + $0x14] sm:$0x1]
      %v3004 = vld [vmem:[%s2708 + $0x18] sm:$0xf]
      %v3005 = vld [vmem:[%s2708 + $0x1c] sm:$0xf]
      %v3006 = vld [vmem:[%s2708 + $0x20] sm:$0x1]
      %v3007 = vld [vmem:[%s2708 + $0x24] sm:$0xf]
      %v3008 = vld [vmem:[%s2708 + $0x28] sm:$0xf]
      %v3009 = vld [vmem:[%s2708 + $0x2c] sm:$0x1]
      %v3010 = vld [vmem:[%s2708 + $0x30] sm:$0xf]
      %v3011 = vld [vmem:[%s2708 + $0x34] sm:$0xf]
      %v3012 = vld [vmem:[%s2708 + $0x38] sm:$0x1]
      %v3013 = vld [vmem:[%s2708 + $0x3c] sm:$0xf]
      %v3014 = vld [vmem:[%s2708 + $0x40] sm:$0xf]
      %v3015 = vld [vmem:[%s2708 + $0x44] sm:$0x1]
      %v3016 = vld [vmem:[%s2708 + $0x48] sm:$0xf]
      %v3017 = vld [vmem:[%s2708 + $0x4c] sm:$0xf]
      %v3018 = vld [vmem:[%s2708 + $0x50] sm:$0x1]
      %v3019 = vld [vmem:[%s2708 + $0x54] sm:$0xf]
      %v3020 = vld [vmem:[%s2708 + $0x58] sm:$0xf]
      %v3021 = vld [vmem:[%s2708 + $0x5c] sm:$0x1]
      %v3022 = vld [vmem:[%s2708 + $0x60] sm:$0xf]
      %v3023 = vld [vmem:[%s2708 + $0x64] sm:$0xf]
      %v3024 = vld [vmem:[%s2708 + $0x68] sm:$0x1]
      %v3025 = vld [vmem:[%s2708 + $0x6c] sm:$0xf]
      %v3026 = vld [vmem:[%s2708 + $0x70] sm:$0xf]
      %v3027 = vld [vmem:[%s2708 + $0x74] sm:$0x1]
      %v3028 = vld [vmem:[%s2708 + $0x78] sm:$0xf]
      %v3029 = vld [vmem:[%s2708 + $0x7c] sm:$0xf]
      %v3030 = vld [vmem:[%s2708 + $0x80] sm:$0x1]
      %v3031 = vld [vmem:[%s2708 + $0x84] sm:$0xf]
      %v3032 = vld [vmem:[%s2708 + $0x88] sm:$0xf]
      %v3033 = vld [vmem:[%s2708 + $0x8c] sm:$0x1]
      %v3034 = vld [vmem:[%s2708 + $0x90] sm:$0xf]
      %v3035 = vld [vmem:[%s2708 + $0x94] sm:$0xf]
      %v3036 = vld [vmem:[%s2708 + $0x98] sm:$0x1]
      %v3037 = vld [vmem:[%s2708 + $0x9c] sm:$0xf]
      %v3038 = vld [vmem:[%s2708 + $0xa0] sm:$0xf]
      %v3039 = vld [vmem:[%s2708 + $0xa4] sm:$0x1]
      %v3040 = vld [vmem:[%s2708 + $0xa8] sm:$0xf]
      %v3041 = vld [vmem:[%s2708 + $0xac] sm:$0xf]
      %v3042 = vld [vmem:[%s2708 + $0xb0] sm:$0x1]
      %v3044 = vshrl.u32 %v2998, 16
      %v3046 = vrot.slane %v3044, 4
      %v3047 = vshll.u32 %v2998, 16
      %v3049 = vrot.slane %v3047, 5
      %v3050 = vor.u32 %v3046, %v3049
      %v3051 = vrot.slane %v3050, 4
      %v3053 = vshll.u32 %v2999, 16
      %v3055 = vrot.slane %v3053, 5
      %v3056 = vsel %vm225, %v3051, %v3055
      %v3057 = vshrl.u32 %v2999, 16
      %v3059 = vrot.slane %v3057, 4
      %v3060 = vor.u32 %v3059, %v3055
      %v3061 = vrot.slane %v3060, 4
      %v3063 = vshll.u32 %v3000, 16
      %v3065 = vrot.slane %v3063, 5
      %v3066 = vsel %vm225, %v3061, %v3065
      %v3068 = vshrl.u32 %v3001, 16
      %v3070 = vrot.slane %v3068, 4
      %v3071 = vshll.u32 %v3001, 16
      %v3073 = vrot.slane %v3071, 5
      %v3074 = vor.u32 %v3070, %v3073
      %v3075 = vrot.slane %v3074, 4
      %v3077 = vshll.u32 %v3002, 16
      %v3079 = vrot.slane %v3077, 5
      %v3080 = vsel %vm225, %v3075, %v3079
      %v3081 = vshrl.u32 %v3002, 16
      %v3083 = vrot.slane %v3081, 4
      %v3084 = vor.u32 %v3083, %v3079
      %v3085 = vrot.slane %v3084, 4
      %v3087 = vshll.u32 %v3003, 16
      %v3089 = vrot.slane %v3087, 5
      %v3090 = vsel %vm225, %v3085, %v3089
      %v3092 = vshrl.u32 %v3004, 16
      %v3094 = vrot.slane %v3092, 4
      %v3095 = vshll.u32 %v3004, 16
      %v3097 = vrot.slane %v3095, 5
      %v3098 = vor.u32 %v3094, %v3097
      %v3099 = vrot.slane %v3098, 4
      %v3101 = vshll.u32 %v3005, 16
      %v3103 = vrot.slane %v3101, 5
      %v3104 = vsel %vm225, %v3099, %v3103
      %v3105 = vshrl.u32 %v3005, 16
      %v3107 = vrot.slane %v3105, 4
      %v3108 = vor.u32 %v3107, %v3103
      %v3109 = vrot.slane %v3108, 4
      %v3111 = vshll.u32 %v3006, 16
      %v3113 = vrot.slane %v3111, 5
      %v3114 = vsel %vm225, %v3109, %v3113
      %v3116 = vshrl.u32 %v3007, 16
      %v3118 = vrot.slane %v3116, 4
      %v3119 = vshll.u32 %v3007, 16
      %v3121 = vrot.slane %v3119, 5
      %v3122 = vor.u32 %v3118, %v3121
      %v3123 = vrot.slane %v3122, 4
      %v3125 = vshll.u32 %v3008, 16
      %v3127 = vrot.slane %v3125, 5
      %v3128 = vsel %vm225, %v3123, %v3127
      %v3129 = vshrl.u32 %v3008, 16
      %v3131 = vrot.slane %v3129, 4
      %v3132 = vor.u32 %v3131, %v3127
      %v3133 = vrot.slane %v3132, 4
      %v3135 = vshll.u32 %v3009, 16
      %v3137 = vrot.slane %v3135, 5
      %v3138 = vsel %vm225, %v3133, %v3137
      %v3140 = vshrl.u32 %v3010, 16
      %v3142 = vrot.slane %v3140, 4
      %v3143 = vshll.u32 %v3010, 16
      %v3145 = vrot.slane %v3143, 5
      %v3146 = vor.u32 %v3142, %v3145
      %v3147 = vrot.slane %v3146, 4
      %v3149 = vshll.u32 %v3011, 16
      %v3151 = vrot.slane %v3149, 5
      %v3152 = vsel %vm225, %v3147, %v3151
      %v3153 = vshrl.u32 %v3011, 16
      %v3155 = vrot.slane %v3153, 4
      %v3156 = vor.u32 %v3155, %v3151
      %v3157 = vrot.slane %v3156, 4
      %v3159 = vshll.u32 %v3012, 16
      %v3161 = vrot.slane %v3159, 5
      %v3162 = vsel %vm225, %v3157, %v3161
      %v3164 = vshrl.u32 %v3013, 16
      %v3166 = vrot.slane %v3164, 4
      %v3167 = vshll.u32 %v3013, 16
      %v3169 = vrot.slane %v3167, 5
      %v3170 = vor.u32 %v3166, %v3169
      %v3171 = vrot.slane %v3170, 4
      %v3173 = vshll.u32 %v3014, 16
      %v3175 = vrot.slane %v3173, 5
      %v3176 = vsel %vm225, %v3171, %v3175
      %v3177 = vshrl.u32 %v3014, 16
      %v3179 = vrot.slane %v3177, 4
      %v3180 = vor.u32 %v3179, %v3175
      %v3181 = vrot.slane %v3180, 4
      %v3183 = vshll.u32 %v3015, 16
      %v3185 = vrot.slane %v3183, 5
      %v3186 = vsel %vm225, %v3181, %v3185
      %v3188 = vshrl.u32 %v3016, 16
      %v3190 = vrot.slane %v3188, 4
      %v3191 = vshll.u32 %v3016, 16
      %v3193 = vrot.slane %v3191, 5
      %v3194 = vor.u32 %v3190, %v3193
      %v3195 = vrot.slane %v3194, 4
      %v3197 = vshll.u32 %v3017, 16
      %v3199 = vrot.slane %v3197, 5
      %v3200 = vsel %vm225, %v3195, %v3199
      %v3201 = vshrl.u32 %v3017, 16
      %v3203 = vrot.slane %v3201, 4
      %v3204 = vor.u32 %v3203, %v3199
      %v3205 = vrot.slane %v3204, 4
      %v3207 = vshll.u32 %v3018, 16
      %v3209 = vrot.slane %v3207, 5
      %v3210 = vsel %vm225, %v3205, %v3209
      %v3212 = vshrl.u32 %v3019, 16
      %v3214 = vrot.slane %v3212, 4
      %v3215 = vshll.u32 %v3019, 16
      %v3217 = vrot.slane %v3215, 5
      %v3218 = vor.u32 %v3214, %v3217
      %v3219 = vrot.slane %v3218, 4
      %v3221 = vshll.u32 %v3020, 16
      %v3223 = vrot.slane %v3221, 5
      %v3224 = vsel %vm225, %v3219, %v3223
      %v3225 = vshrl.u32 %v3020, 16
      %v3227 = vrot.slane %v3225, 4
      %v3228 = vor.u32 %v3227, %v3223
      %v3229 = vrot.slane %v3228, 4
      %v3231 = vshll.u32 %v3021, 16
      %v3233 = vrot.slane %v3231, 5
      %v3234 = vsel %vm225, %v3229, %v3233
      %v3236 = vshrl.u32 %v3022, 16
      %v3238 = vrot.slane %v3236, 4
      %v3239 = vshll.u32 %v3022, 16
      %v3241 = vrot.slane %v3239, 5
      %v3242 = vor.u32 %v3238, %v3241
      %v3243 = vrot.slane %v3242, 4
      %v3245 = vshll.u32 %v3023, 16
      %v3247 = vrot.slane %v3245, 5
      %v3248 = vsel %vm225, %v3243, %v3247
      %v3249 = vshrl.u32 %v3023, 16
      %v3251 = vrot.slane %v3249, 4
      %v3252 = vor.u32 %v3251, %v3247
      %v3253 = vrot.slane %v3252, 4
      %v3255 = vshll.u32 %v3024, 16
      %v3257 = vrot.slane %v3255, 5
      %v3258 = vsel %vm225, %v3253, %v3257
      %v3260 = vshrl.u32 %v3025, 16
      %v3262 = vrot.slane %v3260, 4
      %v3263 = vshll.u32 %v3025, 16
      %v3265 = vrot.slane %v3263, 5
      %v3266 = vor.u32 %v3262, %v3265
      %v3267 = vrot.slane %v3266, 4
      %v3269 = vshll.u32 %v3026, 16
      %v3271 = vrot.slane %v3269, 5
      %v3272 = vsel %vm225, %v3267, %v3271
      %v3273 = vshrl.u32 %v3026, 16
      %v3275 = vrot.slane %v3273, 4
      %v3276 = vor.u32 %v3275, %v3271
      %v3277 = vrot.slane %v3276, 4
      %v3279 = vshll.u32 %v3027, 16
      %v3281 = vrot.slane %v3279, 5
      %v3282 = vsel %vm225, %v3277, %v3281
      %v3284 = vshrl.u32 %v3028, 16
      %v3286 = vrot.slane %v3284, 4
      %v3287 = vshll.u32 %v3028, 16
      %v3289 = vrot.slane %v3287, 5
      %v3290 = vor.u32 %v3286, %v3289
      %v3291 = vrot.slane %v3290, 4
      %v3293 = vshll.u32 %v3029, 16
      %v3295 = vrot.slane %v3293, 5
      %v3296 = vsel %vm225, %v3291, %v3295
      %v3297 = vshrl.u32 %v3029, 16
      %v3299 = vrot.slane %v3297, 4
      %v3300 = vor.u32 %v3299, %v3295
      %v3301 = vrot.slane %v3300, 4
      %v3303 = vshll.u32 %v3030, 16
      %v3305 = vrot.slane %v3303, 5
      %v3306 = vsel %vm225, %v3301, %v3305
      %v3308 = vshrl.u32 %v3031, 16
      %v3310 = vrot.slane %v3308, 4
      %v3311 = vshll.u32 %v3031, 16
      %v3313 = vrot.slane %v3311, 5
      %v3314 = vor.u32 %v3310, %v3313
      %v3315 = vrot.slane %v3314, 4
      %v3317 = vshll.u32 %v3032, 16
      %v3319 = vrot.slane %v3317, 5
      %v3320 = vsel %vm225, %v3315, %v3319
      %v3321 = vshrl.u32 %v3032, 16
      %v3323 = vrot.slane %v3321, 4
      %v3324 = vor.u32 %v3323, %v3319
      %v3325 = vrot.slane %v3324, 4
      %v3327 = vshll.u32 %v3033, 16
      %v3329 = vrot.slane %v3327, 5
      %v3330 = vsel %vm225, %v3325, %v3329
      %v3332 = vshrl.u32 %v3034, 16
      %v3334 = vrot.slane %v3332, 4
      %v3335 = vshll.u32 %v3034, 16
      %v3337 = vrot.slane %v3335, 5
      %v3338 = vor.u32 %v3334, %v3337
      %v3339 = vrot.slane %v3338, 4
      %v3341 = vshll.u32 %v3035, 16
      %v3343 = vrot.slane %v3341, 5
      %v3344 = vsel %vm225, %v3339, %v3343
      %v3345 = vshrl.u32 %v3035, 16
      %v3347 = vrot.slane %v3345, 4
      %v3348 = vor.u32 %v3347, %v3343
      %v3349 = vrot.slane %v3348, 4
      %v3351 = vshll.u32 %v3036, 16
      %v3353 = vrot.slane %v3351, 5
      %v3354 = vsel %vm225, %v3349, %v3353
      %v3356 = vshrl.u32 %v3037, 16
      %v3358 = vrot.slane %v3356, 4
      %v3359 = vshll.u32 %v3037, 16
      %v3361 = vrot.slane %v3359, 5
      %v3362 = vor.u32 %v3358, %v3361
      %v3363 = vrot.slane %v3362, 4
      %v3365 = vshll.u32 %v3038, 16
      %v3367 = vrot.slane %v3365, 5
      %v3368 = vsel %vm225, %v3363, %v3367
      %v3369 = vshrl.u32 %v3038, 16
      %v3371 = vrot.slane %v3369, 4
      %v3372 = vor.u32 %v3371, %v3367
      %v3373 = vrot.slane %v3372, 4
      %v3375 = vshll.u32 %v3039, 16
      %v3377 = vrot.slane %v3375, 5
      %v3378 = vsel %vm225, %v3373, %v3377
      %v3380 = vshrl.u32 %v3040, 16
      %v3382 = vrot.slane %v3380, 4
      %v3383 = vshll.u32 %v3040, 16
      %v3385 = vrot.slane %v3383, 5
      %v3386 = vor.u32 %v3382, %v3385
      %v3387 = vrot.slane %v3386, 4
      %v3389 = vshll.u32 %v3041, 16
      %v3391 = vrot.slane %v3389, 5
      %v3392 = vsel %vm225, %v3387, %v3391
      %v3393 = vshrl.u32 %v3041, 16
      %v3395 = vrot.slane %v3393, 4
      %v3396 = vor.u32 %v3395, %v3391
      %v3397 = vrot.slane %v3396, 4
      %v3399 = vshll.u32 %v3042, 16
      %v3401 = vrot.slane %v3399, 5
      %v3402 = vsel %vm225, %v3397, %v3401
      %s3403 = scalar_lea.vmem %s1, 168
      %v3404 = vld [vmem:[%s3403] sm:$0xf]
      %v3405 = vld [vmem:[%s3403 + $0x4] sm:$0xf]
      %v3406 = vld [vmem:[%s3403 + $0x8] sm:$0xf]
      %v3407 = vld [vmem:[%s3403 + $0xc] sm:$0xf]
      %v3408 = vld [vmem:[%s3403 + $0x10] sm:$0xf]
      %v3409 = vld [vmem:[%s3403 + $0x14] sm:$0xf]
      %v3410 = vunpack.c.l.b16 %v3056
      %v3411 = vunpack.c.l.b16 %v3066
      %v3412 = vunpack.c.l.b16 %v3080
      %v3413 = vunpack.c.l.b16 %v3090
      %v3414 = vunpack.c.l.b16 %v3104
      %v3415 = vunpack.c.l.b16 %v3114
      %v3416 = vunpack.c.l.b16 %v3128
      %v3417 = vunpack.c.l.b16 %v3138
      %v3418 = vunpack.c.l.b16 %v3152
      %v3419 = vunpack.c.l.b16 %v3162
      %v3420 = vunpack.c.l.b16 %v3176
      %v3421 = vunpack.c.l.b16 %v3186
      %v3422 = vunpack.c.l.b16 %v3200
      %v3423 = vunpack.c.l.b16 %v3210
      %v3424 = vunpack.c.l.b16 %v3224
      %v3425 = vunpack.c.l.b16 %v3234
      %v3426 = vunpack.c.l.b16 %v3248
      %v3427 = vunpack.c.l.b16 %v3258
      %v3428 = vunpack.c.l.b16 %v3272
      %v3429 = vunpack.c.l.b16 %v3282
      %v3430 = vunpack.c.l.b16 %v3296
      %v3431 = vunpack.c.l.b16 %v3306
      %v3432 = vunpack.c.l.b16 %v3320
      %v3433 = vunpack.c.l.b16 %v3330
      %v3434 = vunpack.c.l.b16 %v3344
      %v3435 = vunpack.c.l.b16 %v3354
      %v3436 = vunpack.c.l.b16 %v3368
      %v3437 = vunpack.c.l.b16 %v3378
      %v3438 = vunpack.c.l.b16 %v3392
      %v3439 = vunpack.c.l.b16 %v3402
      %v3440 = vpack.c.b16 %v3411, %v3410
      %v3441 = vpack.c.b16 %v3413, %v3412
      %v3442 = vpack.c.b16 %v3415, %v3414
      %v3443 = vpack.c.b16 %v3417, %v3416
      %v3444 = vpack.c.b16 %v3419, %v3418
      %v3445 = vpack.c.b16 %v3421, %v3420
      %v3446 = vpack.c.b16 %v3423, %v3422
      %v3447 = vpack.c.b16 %v3425, %v3424
      %v3448 = vpack.c.b16 %v3427, %v3426
      %v3449 = vpack.c.b16 %v3429, %v3428
      %v3450 = vpack.c.b16 %v3431, %v3430
      %v3451 = vpack.c.b16 %v3433, %v3432
      %v3452 = vpack.c.b16 %v3435, %v3434
      %v3453 = vpack.c.b16 %v3437, %v3436
      %v3454 = vpack.c.b16 %v3439, %v3438
      %v3461 = vunpack.c.l.b16 %v3404
      %v3462 = vunpack.c.l.b16 %v3405
      %v3463 = vunpack.c.l.b16 %v3406
      %v3464 = vunpack.c.l.b16 %v3407
      %v3465 = vunpack.c.l.b16 %v3408
      %v3466 = vunpack.c.l.b16 %v3409
      %v3467 = vpack.c.b16 %v3462, %v3461
      %v3468 = vpack.c.b16 %v3464, %v3463
      %v3469 = vpack.c.b16 %v3466, %v3465
      %v3474 = vsel %vm656, %v3440, 0
      %v3477 = vsel %vm656, %v3441, 0
      %v3480 = vsel %vm656, %v3442, 0
      %v3483 = vsel %vm656, %v3443, 0
      %v3486 = vsel %vm656, %v3444, 0
      %v3489 = vsel %vm656, %v3445, 0
      %v3492 = vsel %vm656, %v3446, 0
      %v3495 = vsel %vm656, %v3447, 0
      %v3498 = vsel %vm656, %v3448, 0
      %v3501 = vsel %vm656, %v3449, 0
      %v3504 = vsel %vm656, %v3450, 0
      %v3507 = vsel %vm656, %v3451, 0
      %v3510 = vsel %vm656, %v3452, 0
      %v3513 = vsel %vm656, %v3453, 0
      %v3516 = vsel %vm656, %v3454, 0
      %3518 = vmatpush.bf16.msra.mxu0 0
      %3519 = vmatpush.bf16.msra.mxu0 0
      %3520 = vmatpush.bf16.msra.mxu0 0
      %3521 = vmatpush.bf16.msra.mxu0 0
      %3522 = vmatpush.bf16.msra.mxu0 0
      %3523 = vmatpush.bf16.msra.mxu0 %v3469
      %3524 = vmatpush.bf16.msra.mxu0 %v3468
      %3525 = vmatpush.bf16.msra.mxu0 %v3467
      %3526 = vmatmul.bf16.gmra.mxu0 %v3474
      %v3527 = vpop.f32.mrf.mxu0
      %v3528 = vadd.f32 0.0, %v3527
      %v3529 = vpop.f32.mrf.mxu0
      %v3530 = vadd.f32 0.0, %v3529
      %3531 = vmatmul.bf16.gmra.mxu0 %v3477
      %v3532 = vpop.f32.mrf.mxu0
      %v3533 = vadd.f32 0.0, %v3532
      %v3534 = vpop.f32.mrf.mxu0
      %v3535 = vadd.f32 0.0, %v3534
      %3536 = vmatmul.bf16.gmra.mxu0 %v3480
      %v3537 = vpop.f32.mrf.mxu0
      %v3538 = vadd.f32 0.0, %v3537
      %v3539 = vpop.f32.mrf.mxu0
      %v3540 = vadd.f32 0.0, %v3539
      %3541 = vmatmul.bf16.gmra.mxu0 %v3483
      %v3542 = vpop.f32.mrf.mxu0
      %v3543 = vadd.f32 0.0, %v3542
      %v3544 = vpop.f32.mrf.mxu0
      %v3545 = vadd.f32 0.0, %v3544
      %3546 = vmatmul.bf16.gmra.mxu0 %v3486
      %v3547 = vpop.f32.mrf.mxu0
      %v3548 = vadd.f32 0.0, %v3547
      %v3549 = vpop.f32.mrf.mxu0
      %v3550 = vadd.f32 0.0, %v3549
      %3551 = vmatmul.bf16.gmra.mxu0 %v3489
      %v3552 = vpop.f32.mrf.mxu0
      %v3553 = vadd.f32 0.0, %v3552
      %v3554 = vpop.f32.mrf.mxu0
      %v3555 = vadd.f32 0.0, %v3554
      %3556 = vmatmul.bf16.gmra.mxu0 %v3492
      %v3557 = vpop.f32.mrf.mxu0
      %v3558 = vadd.f32 0.0, %v3557
      %v3559 = vpop.f32.mrf.mxu0
      %v3560 = vadd.f32 0.0, %v3559
      %3561 = vmatmul.bf16.gmra.mxu0 %v3495
      %v3562 = vpop.f32.mrf.mxu0
      %v3563 = vadd.f32 0.0, %v3562
      %v3564 = vpop.f32.mrf.mxu0
      %v3565 = vadd.f32 0.0, %v3564
      %3566 = vmatmul.bf16.gmra.mxu0 %v3498
      %v3567 = vpop.f32.mrf.mxu0
      %v3568 = vadd.f32 0.0, %v3567
      %v3569 = vpop.f32.mrf.mxu0
      %v3570 = vadd.f32 0.0, %v3569
      %3571 = vmatmul.bf16.gmra.mxu0 %v3501
      %v3572 = vpop.f32.mrf.mxu0
      %v3573 = vadd.f32 0.0, %v3572
      %v3574 = vpop.f32.mrf.mxu0
      %v3575 = vadd.f32 0.0, %v3574
      %3576 = vmatmul.bf16.gmra.mxu0 %v3504
      %v3577 = vpop.f32.mrf.mxu0
      %v3578 = vadd.f32 0.0, %v3577
      %v3579 = vpop.f32.mrf.mxu0
      %v3580 = vadd.f32 0.0, %v3579
      %3581 = vmatmul.bf16.gmra.mxu0 %v3507
      %v3582 = vpop.f32.mrf.mxu0
      %v3583 = vadd.f32 0.0, %v3582
      %v3584 = vpop.f32.mrf.mxu0
      %v3585 = vadd.f32 0.0, %v3584
      %3586 = vmatmul.bf16.gmra.mxu0 %v3510
      %v3587 = vpop.f32.mrf.mxu0
      %v3588 = vadd.f32 0.0, %v3587
      %v3589 = vpop.f32.mrf.mxu0
      %v3590 = vadd.f32 0.0, %v3589
      %3591 = vmatmul.bf16.gmra.mxu0 %v3513
      %v3592 = vpop.f32.mrf.mxu0
      %v3593 = vadd.f32 0.0, %v3592
      %v3594 = vpop.f32.mrf.mxu0
      %v3595 = vadd.f32 0.0, %v3594
      %3596 = vmatmul.bf16.gmra.mxu0 %v3516
      %v3597 = vpop.f32.mrf.mxu0
      %v3598 = vadd.f32 0.0, %v3597
      %v3599 = vpop.f32.mrf.mxu0
      %v3600 = vadd.f32 0.0, %v3599
      %3601 = vdwg.mxu0
      %v3602 = vadd.f32 %v2968, %v3528
      %v3603 = vadd.f32 %v2969, %v3530
      %v3604 = vadd.f32 %v2970, %v3533
      %v3605 = vadd.f32 %v2971, %v3535
      %v3606 = vadd.f32 %v2972, %v3538
      %v3607 = vadd.f32 %v2973, %v3540
      %v3608 = vadd.f32 %v2974, %v3543
      %v3609 = vadd.f32 %v2975, %v3545
      %v3610 = vadd.f32 %v2976, %v3548
      %v3611 = vadd.f32 %v2977, %v3550
      %v3612 = vadd.f32 %v2978, %v3553
      %v3613 = vadd.f32 %v2979, %v3555
      %v3614 = vadd.f32 %v2980, %v3558
      %v3615 = vadd.f32 %v2981, %v3560
      %v3616 = vadd.f32 %v2982, %v3563
      %v3617 = vadd.f32 %v2983, %v3565
      %v3618 = vadd.f32 %v2984, %v3568
      %v3619 = vadd.f32 %v2985, %v3570
      %v3620 = vadd.f32 %v2986, %v3573
      %v3621 = vadd.f32 %v2987, %v3575
      %v3622 = vadd.f32 %v2988, %v3578
      %v3623 = vadd.f32 %v2989, %v3580
      %v3624 = vadd.f32 %v2990, %v3583
      %v3625 = vadd.f32 %v2991, %v3585
      %v3626 = vadd.f32 %v2992, %v3588
      %v3627 = vadd.f32 %v2993, %v3590
      %v3628 = vadd.f32 %v2994, %v3593
      %v3629 = vadd.f32 %v2995, %v3595
      %v3630 = vadd.f32 %v2996, %v3598
      %v3631 = vadd.f32 %v2997, %v3600
      %v3632 = vld [vmem:[%s2708] sm:$0xe]
      %v3633 = vld [vmem:[%s2708 + $0xc] sm:$0xe]
      %v3634 = vld [vmem:[%s2708 + $0x18] sm:$0xe]
      %v3635 = vld [vmem:[%s2708 + $0x24] sm:$0xe]
      %v3636 = vld [vmem:[%s2708 + $0x30] sm:$0xe]
      %v3637 = vld [vmem:[%s2708 + $0x3c] sm:$0xe]
      %v3638 = vld [vmem:[%s2708 + $0x48] sm:$0xe]
      %v3639 = vld [vmem:[%s2708 + $0x54] sm:$0xe]
      %v3640 = vld [vmem:[%s2708 + $0x60] sm:$0xe]
      %v3641 = vld [vmem:[%s2708 + $0x6c] sm:$0xe]
      %v3642 = vld [vmem:[%s2708 + $0x78] sm:$0xe]
      %v3643 = vld [vmem:[%s2708 + $0x84] sm:$0xe]
      %v3644 = vld [vmem:[%s2708 + $0x90] sm:$0xe]
      %v3645 = vld [vmem:[%s2708 + $0x9c] sm:$0xe]
      %v3646 = vld [vmem:[%s2708 + $0xa8] sm:$0xe]
      %v3692 = vrot.slane %v3632, 5
      %v3693 = vrot.slane %v3692, 4
      %v3694 = vrot.slane %v2999, 5
      %v3695 = vsel %vm1055, %v3693, %v3694
      %v3696 = vrot.slane %v3694, 4
      %v3697 = vrot.slane %v3000, 5
      %v3698 = vsel %vm1055, %v3696, %v3697
      %v3699 = vrot.slane %v3633, 5
      %v3700 = vrot.slane %v3699, 4
      %v3701 = vrot.slane %v3002, 5
      %v3702 = vsel %vm1055, %v3700, %v3701
      %v3703 = vrot.slane %v3701, 4
      %v3704 = vrot.slane %v3003, 5
      %v3705 = vsel %vm1055, %v3703, %v3704
      %v3706 = vrot.slane %v3634, 5
      %v3707 = vrot.slane %v3706, 4
      %v3708 = vrot.slane %v3005, 5
      %v3709 = vsel %vm1055, %v3707, %v3708
      %v3710 = vrot.slane %v3708, 4
      %v3711 = vrot.slane %v3006, 5
      %v3712 = vsel %vm1055, %v3710, %v3711
      %v3713 = vrot.slane %v3635, 5
      %v3714 = vrot.slane %v3713, 4
      %v3715 = vrot.slane %v3008, 5
      %v3716 = vsel %vm1055, %v3714, %v3715
      %v3717 = vrot.slane %v3715, 4
      %v3718 = vrot.slane %v3009, 5
      %v3719 = vsel %vm1055, %v3717, %v3718
      %v3720 = vrot.slane %v3636, 5
      %v3721 = vrot.slane %v3720, 4
      %v3722 = vrot.slane %v3011, 5
      %v3723 = vsel %vm1055, %v3721, %v3722
      %v3724 = vrot.slane %v3722, 4
      %v3725 = vrot.slane %v3012, 5
      %v3726 = vsel %vm1055, %v3724, %v3725
      %v3727 = vrot.slane %v3637, 5
      %v3728 = vrot.slane %v3727, 4
      %v3729 = vrot.slane %v3014, 5
      %v3730 = vsel %vm1055, %v3728, %v3729
      %v3731 = vrot.slane %v3729, 4
      %v3732 = vrot.slane %v3015, 5
      %v3733 = vsel %vm1055, %v3731, %v3732
      %v3734 = vrot.slane %v3638, 5
      %v3735 = vrot.slane %v3734, 4
      %v3736 = vrot.slane %v3017, 5
      %v3737 = vsel %vm1055, %v3735, %v3736
      %v3738 = vrot.slane %v3736, 4
      %v3739 = vrot.slane %v3018, 5
      %v3740 = vsel %vm1055, %v3738, %v3739
      %v3741 = vrot.slane %v3639, 5
      %v3742 = vrot.slane %v3741, 4
      %v3743 = vrot.slane %v3020, 5
      %v3744 = vsel %vm1055, %v3742, %v3743
      %v3745 = vrot.slane %v3743, 4
      %v3746 = vrot.slane %v3021, 5
      %v3747 = vsel %vm1055, %v3745, %v3746
      %v3748 = vrot.slane %v3640, 5
      %v3749 = vrot.slane %v3748, 4
      %v3750 = vrot.slane %v3023, 5
      %v3751 = vsel %vm1055, %v3749, %v3750
      %v3752 = vrot.slane %v3750, 4
      %v3753 = vrot.slane %v3024, 5
      %v3754 = vsel %vm1055, %v3752, %v3753
      %v3755 = vrot.slane %v3641, 5
      %v3756 = vrot.slane %v3755, 4
      %v3757 = vrot.slane %v3026, 5
      %v3758 = vsel %vm1055, %v3756, %v3757
      %v3759 = vrot.slane %v3757, 4
      %v3760 = vrot.slane %v3027, 5
      %v3761 = vsel %vm1055, %v3759, %v3760
      %v3762 = vrot.slane %v3642, 5
      %v3763 = vrot.slane %v3762, 4
      %v3764 = vrot.slane %v3029, 5
      %v3765 = vsel %vm1055, %v3763, %v3764
      %v3766 = vrot.slane %v3764, 4
      %v3767 = vrot.slane %v3030, 5
      %v3768 = vsel %vm1055, %v3766, %v3767
      %v3769 = vrot.slane %v3643, 5
      %v3770 = vrot.slane %v3769, 4
      %v3771 = vrot.slane %v3032, 5
      %v3772 = vsel %vm1055, %v3770, %v3771
      %v3773 = vrot.slane %v3771, 4
      %v3774 = vrot.slane %v3033, 5
      %v3775 = vsel %vm1055, %v3773, %v3774
      %v3776 = vrot.slane %v3644, 5
      %v3777 = vrot.slane %v3776, 4
      %v3778 = vrot.slane %v3035, 5
      %v3779 = vsel %vm1055, %v3777, %v3778
      %v3780 = vrot.slane %v3778, 4
      %v3781 = vrot.slane %v3036, 5
      %v3782 = vsel %vm1055, %v3780, %v3781
      %v3783 = vrot.slane %v3645, 5
      %v3784 = vrot.slane %v3783, 4
      %v3785 = vrot.slane %v3038, 5
      %v3786 = vsel %vm1055, %v3784, %v3785
      %v3787 = vrot.slane %v3785, 4
      %v3788 = vrot.slane %v3039, 5
      %v3789 = vsel %vm1055, %v3787, %v3788
      %v3790 = vrot.slane %v3646, 5
      %v3791 = vrot.slane %v3790, 4
      %v3792 = vrot.slane %v3041, 5
      %v3793 = vsel %vm1055, %v3791, %v3792
      %v3794 = vrot.slane %v3792, 4
      %v3795 = vrot.slane %v3042, 5
      %v3796 = vsel %vm1055, %v3794, %v3795
      %s3797 = scalar_lea.vmem %s1, 192
      %v3798 = vld [vmem:[%s3797] sm:$0xf]
      %v3799 = vld [vmem:[%s3797 + $0x4] sm:$0xf]
      %v3800 = vld [vmem:[%s3797 + $0x8] sm:$0xf]
      %v3801 = vld [vmem:[%s3797 + $0xc] sm:$0xf]
      %v3802 = vld [vmem:[%s3797 + $0x10] sm:$0xf]
      %v3803 = vld [vmem:[%s3797 + $0x14] sm:$0xf]
      %v3804 = vunpack.c.l.b16 %v3695
      %v3805 = vunpack.c.l.b16 %v3698
      %v3806 = vunpack.c.l.b16 %v3702
      %v3807 = vunpack.c.l.b16 %v3705
      %v3808 = vunpack.c.l.b16 %v3709
      %v3809 = vunpack.c.l.b16 %v3712
      %v3810 = vunpack.c.l.b16 %v3716
      %v3811 = vunpack.c.l.b16 %v3719
      %v3812 = vunpack.c.l.b16 %v3723
      %v3813 = vunpack.c.l.b16 %v3726
      %v3814 = vunpack.c.l.b16 %v3730
      %v3815 = vunpack.c.l.b16 %v3733
      %v3816 = vunpack.c.l.b16 %v3737
      %v3817 = vunpack.c.l.b16 %v3740
      %v3818 = vunpack.c.l.b16 %v3744
      %v3819 = vunpack.c.l.b16 %v3747
      %v3820 = vunpack.c.l.b16 %v3751
      %v3821 = vunpack.c.l.b16 %v3754
      %v3822 = vunpack.c.l.b16 %v3758
      %v3823 = vunpack.c.l.b16 %v3761
      %v3824 = vunpack.c.l.b16 %v3765
      %v3825 = vunpack.c.l.b16 %v3768
      %v3826 = vunpack.c.l.b16 %v3772
      %v3827 = vunpack.c.l.b16 %v3775
      %v3828 = vunpack.c.l.b16 %v3779
      %v3829 = vunpack.c.l.b16 %v3782
      %v3830 = vunpack.c.l.b16 %v3786
      %v3831 = vunpack.c.l.b16 %v3789
      %v3832 = vunpack.c.l.b16 %v3793
      %v3833 = vunpack.c.l.b16 %v3796
      %v3834 = vpack.c.b16 %v3805, %v3804
      %v3835 = vpack.c.b16 %v3807, %v3806
      %v3836 = vpack.c.b16 %v3809, %v3808
      %v3837 = vpack.c.b16 %v3811, %v3810
      %v3838 = vpack.c.b16 %v3813, %v3812
      %v3839 = vpack.c.b16 %v3815, %v3814
      %v3840 = vpack.c.b16 %v3817, %v3816
      %v3841 = vpack.c.b16 %v3819, %v3818
      %v3842 = vpack.c.b16 %v3821, %v3820
      %v3843 = vpack.c.b16 %v3823, %v3822
      %v3844 = vpack.c.b16 %v3825, %v3824
      %v3845 = vpack.c.b16 %v3827, %v3826
      %v3846 = vpack.c.b16 %v3829, %v3828
      %v3847 = vpack.c.b16 %v3831, %v3830
      %v3848 = vpack.c.b16 %v3833, %v3832
      %v3855 = vunpack.c.l.b16 %v3798
      %v3856 = vunpack.c.l.b16 %v3799
      %v3857 = vunpack.c.l.b16 %v3800
      %v3858 = vunpack.c.l.b16 %v3801
      %v3859 = vunpack.c.l.b16 %v3802
      %v3860 = vunpack.c.l.b16 %v3803
      %v3861 = vpack.c.b16 %v3856, %v3855
      %v3862 = vpack.c.b16 %v3858, %v3857
      %v3863 = vpack.c.b16 %v3860, %v3859
      %v3868 = vsel %vm656, %v3834, 0
      %v3871 = vsel %vm656, %v3835, 0
      %v3874 = vsel %vm656, %v3836, 0
      %v3877 = vsel %vm656, %v3837, 0
      %v3880 = vsel %vm656, %v3838, 0
      %v3883 = vsel %vm656, %v3839, 0
      %v3886 = vsel %vm656, %v3840, 0
      %v3889 = vsel %vm656, %v3841, 0
      %v3892 = vsel %vm656, %v3842, 0
      %v3895 = vsel %vm656, %v3843, 0
      %v3898 = vsel %vm656, %v3844, 0
      %v3901 = vsel %vm656, %v3845, 0
      %v3904 = vsel %vm656, %v3846, 0
      %v3907 = vsel %vm656, %v3847, 0
      %v3910 = vsel %vm656, %v3848, 0
      %3912 = vmatpush.bf16.msra.mxu0 0
      %3913 = vmatpush.bf16.msra.mxu0 0
      %3914 = vmatpush.bf16.msra.mxu0 0
      %3915 = vmatpush.bf16.msra.mxu0 0
      %3916 = vmatpush.bf16.msra.mxu0 0
      %3917 = vmatpush.bf16.msra.mxu0 %v3863
      %3918 = vmatpush.bf16.msra.mxu0 %v3862
      %3919 = vmatpush.bf16.msra.mxu0 %v3861
      %3920 = vmatmul.bf16.gmra.mxu0 %v3868
      %v3921 = vpop.f32.mrf.mxu0
      %v3922 = vadd.f32 0.0, %v3921
      %v3923 = vpop.f32.mrf.mxu0
      %v3924 = vadd.f32 0.0, %v3923
      %3925 = vmatmul.bf16.gmra.mxu0 %v3871
      %v3926 = vpop.f32.mrf.mxu0
      %v3927 = vadd.f32 0.0, %v3926
      %v3928 = vpop.f32.mrf.mxu0
      %v3929 = vadd.f32 0.0, %v3928
      %3930 = vmatmul.bf16.gmra.mxu0 %v3874
      %v3931 = vpop.f32.mrf.mxu0
      %v3932 = vadd.f32 0.0, %v3931
      %v3933 = vpop.f32.mrf.mxu0
      %v3934 = vadd.f32 0.0, %v3933
      %3935 = vmatmul.bf16.gmra.mxu0 %v3877
      %v3936 = vpop.f32.mrf.mxu0
      %v3937 = vadd.f32 0.0, %v3936
      %v3938 = vpop.f32.mrf.mxu0
      %v3939 = vadd.f32 0.0, %v3938
      %3940 = vmatmul.bf16.gmra.mxu0 %v3880
      %v3941 = vpop.f32.mrf.mxu0
      %v3942 = vadd.f32 0.0, %v3941
      %v3943 = vpop.f32.mrf.mxu0
      %v3944 = vadd.f32 0.0, %v3943
      %3945 = vmatmul.bf16.gmra.mxu0 %v3883
      %v3946 = vpop.f32.mrf.mxu0
      %v3947 = vadd.f32 0.0, %v3946
      %v3948 = vpop.f32.mrf.mxu0
      %v3949 = vadd.f32 0.0, %v3948
      %3950 = vmatmul.bf16.gmra.mxu0 %v3886
      %v3951 = vpop.f32.mrf.mxu0
      %v3952 = vadd.f32 0.0, %v3951
      %v3953 = vpop.f32.mrf.mxu0
      %v3954 = vadd.f32 0.0, %v3953
      %3955 = vmatmul.bf16.gmra.mxu0 %v3889
      %v3956 = vpop.f32.mrf.mxu0
      %v3957 = vadd.f32 0.0, %v3956
      %v3958 = vpop.f32.mrf.mxu0
      %v3959 = vadd.f32 0.0, %v3958
      %3960 = vmatmul.bf16.gmra.mxu0 %v3892
      %v3961 = vpop.f32.mrf.mxu0
      %v3962 = vadd.f32 0.0, %v3961
      %v3963 = vpop.f32.mrf.mxu0
      %v3964 = vadd.f32 0.0, %v3963
      %3965 = vmatmul.bf16.gmra.mxu0 %v3895
      %v3966 = vpop.f32.mrf.mxu0
      %v3967 = vadd.f32 0.0, %v3966
      %v3968 = vpop.f32.mrf.mxu0
      %v3969 = vadd.f32 0.0, %v3968
      %3970 = vmatmul.bf16.gmra.mxu0 %v3898
      %v3971 = vpop.f32.mrf.mxu0
      %v3972 = vadd.f32 0.0, %v3971
      %v3973 = vpop.f32.mrf.mxu0
      %v3974 = vadd.f32 0.0, %v3973
      %3975 = vmatmul.bf16.gmra.mxu0 %v3901
      %v3976 = vpop.f32.mrf.mxu0
      %v3977 = vadd.f32 0.0, %v3976
      %v3978 = vpop.f32.mrf.mxu0
      %v3979 = vadd.f32 0.0, %v3978
      %3980 = vmatmul.bf16.gmra.mxu0 %v3904
      %v3981 = vpop.f32.mrf.mxu0
      %v3982 = vadd.f32 0.0, %v3981
      %v3983 = vpop.f32.mrf.mxu0
      %v3984 = vadd.f32 0.0, %v3983
      %3985 = vmatmul.bf16.gmra.mxu0 %v3907
      %v3986 = vpop.f32.mrf.mxu0
      %v3987 = vadd.f32 0.0, %v3986
      %v3988 = vpop.f32.mrf.mxu0
      %v3989 = vadd.f32 0.0, %v3988
      %3990 = vmatmul.bf16.gmra.mxu0 %v3910
      %v3991 = vpop.f32.mrf.mxu0
      %v3992 = vadd.f32 0.0, %v3991
      %v3993 = vpop.f32.mrf.mxu0
      %v3994 = vadd.f32 0.0, %v3993
      %3995 = vdwg.mxu0
      %v3996 = vadd.f32 %v3602, %v3922
      %v3997 = vadd.f32 %v3603, %v3924
      %v3998 = vadd.f32 %v3604, %v3927
      %v3999 = vadd.f32 %v3605, %v3929
      %v4000 = vadd.f32 %v3606, %v3932
      %v4001 = vadd.f32 %v3607, %v3934
      %v4002 = vadd.f32 %v3608, %v3937
      %v4003 = vadd.f32 %v3609, %v3939
      %v4004 = vadd.f32 %v3610, %v3942
      %v4005 = vadd.f32 %v3611, %v3944
      %v4006 = vadd.f32 %v3612, %v3947
      %v4007 = vadd.f32 %v3613, %v3949
      %v4008 = vadd.f32 %v3614, %v3952
      %v4009 = vadd.f32 %v3615, %v3954
      %v4010 = vadd.f32 %v3616, %v3957
      %v4011 = vadd.f32 %v3617, %v3959
      %v4012 = vadd.f32 %v3618, %v3962
      %v4013 = vadd.f32 %v3619, %v3964
      %v4014 = vadd.f32 %v3620, %v3967
      %v4015 = vadd.f32 %v3621, %v3969
      %v4016 = vadd.f32 %v3622, %v3972
      %v4017 = vadd.f32 %v3623, %v3974
      %v4018 = vadd.f32 %v3624, %v3977
      %v4019 = vadd.f32 %v3625, %v3979
      %v4020 = vadd.f32 %v3626, %v3982
      %v4021 = vadd.f32 %v3627, %v3984
      %v4022 = vadd.f32 %v3628, %v3987
      %v4023 = vadd.f32 %v3629, %v3989
      %v4024 = vadd.f32 %v3630, %v3992
      %v4025 = vadd.f32 %v3631, %v3994
      %v4026 = vld [vmem:[%s2] sm:$0x1]
      %v4028 = vperm.slane %v4026, 0
      %v4030 = vadd.f32 %v3996, %v4028
      %v4031 = vadd.f32 %v3997, %v4028
      %v4032 = vadd.f32 %v3998, %v4028
      %v4033 = vadd.f32 %v3999, %v4028
      %v4034 = vadd.f32 %v4000, %v4028
      %v4035 = vadd.f32 %v4001, %v4028
      %v4036 = vadd.f32 %v4002, %v4028
      %v4037 = vadd.f32 %v4003, %v4028
      %v4038 = vadd.f32 %v4004, %v4028
      %v4039 = vadd.f32 %v4005, %v4028
      %v4040 = vadd.f32 %v4006, %v4028
      %v4041 = vadd.f32 %v4007, %v4028
      %v4042 = vadd.f32 %v4008, %v4028
      %v4043 = vadd.f32 %v4009, %v4028
      %v4044 = vadd.f32 %v4010, %v4028
      %v4045 = vadd.f32 %v4011, %v4028
      %v4046 = vadd.f32 %v4012, %v4028
      %v4047 = vadd.f32 %v4013, %v4028
      %v4048 = vadd.f32 %v4014, %v4028
      %v4049 = vadd.f32 %v4015, %v4028
      %v4050 = vadd.f32 %v4016, %v4028
      %v4051 = vadd.f32 %v4017, %v4028
      %v4052 = vadd.f32 %v4018, %v4028
      %v4053 = vadd.f32 %v4019, %v4028
      %v4054 = vadd.f32 %v4020, %v4028
      %v4055 = vadd.f32 %v4021, %v4028
      %v4056 = vadd.f32 %v4022, %v4028
      %v4057 = vadd.f32 %v4023, %v4028
      %v4058 = vadd.f32 %v4024, %v4028
      %v4059 = vadd.f32 %v4025, %v4028
      %v4060 = vmax.f32 %v4030, 0.0
      %v4061 = vmax.f32 %v4031, 0.0
      %v4062 = vmax.f32 %v4032, 0.0
      %v4063 = vmax.f32 %v4033, 0.0
      %v4064 = vmax.f32 %v4034, 0.0
      %v4065 = vmax.f32 %v4035, 0.0
      %v4066 = vmax.f32 %v4036, 0.0
      %v4067 = vmax.f32 %v4037, 0.0
      %v4068 = vmax.f32 %v4038, 0.0
      %v4069 = vmax.f32 %v4039, 0.0
      %v4070 = vmax.f32 %v4040, 0.0
      %v4071 = vmax.f32 %v4041, 0.0
      %v4072 = vmax.f32 %v4042, 0.0
      %v4073 = vmax.f32 %v4043, 0.0
      %v4074 = vmax.f32 %v4044, 0.0
      %v4075 = vmax.f32 %v4045, 0.0
      %v4076 = vmax.f32 %v4046, 0.0
      %v4077 = vmax.f32 %v4047, 0.0
      %v4078 = vmax.f32 %v4048, 0.0
      %v4079 = vmax.f32 %v4049, 0.0
      %v4080 = vmax.f32 %v4050, 0.0
      %v4081 = vmax.f32 %v4051, 0.0
      %v4082 = vmax.f32 %v4052, 0.0
      %v4083 = vmax.f32 %v4053, 0.0
      %v4084 = vmax.f32 %v4054, 0.0
      %v4085 = vmax.f32 %v4055, 0.0
      %v4086 = vmax.f32 %v4056, 0.0
      %v4087 = vmax.f32 %v4057, 0.0
      %v4088 = vmax.f32 %v4058, 0.0
      %v4089 = vmax.f32 %v4059, 0.0
      %vm4090 = vcmask 1042432
      %v4091 = vsel %vm4090, %v4060, -inf
      %v4092 = vrot.slane %v4091, 4
      %v4093 = vmax.f32 %v4091, %v4092
      %v4094 = vrot.slane %v4093, 2
      %v4095 = vmax.f32 %v4093, %v4094
      %v4096 = vrot.slane %v4095, 1
      %v4097 = vmax.f32 %v4095, %v4096
      %v4098 = vsel %vm4090, %v4062, -inf
      %v4099 = vrot.slane %v4098, 4
      %v4100 = vmax.f32 %v4098, %v4099
      %v4101 = vrot.slane %v4100, 2
      %v4102 = vmax.f32 %v4100, %v4101
      %v4103 = vrot.slane %v4102, 1
      %v4104 = vmax.f32 %v4102, %v4103
      %v4105 = vsel %vm4090, %v4064, -inf
      %v4106 = vrot.slane %v4105, 4
      %v4107 = vmax.f32 %v4105, %v4106
      %v4108 = vrot.slane %v4107, 2
      %v4109 = vmax.f32 %v4107, %v4108
      %v4110 = vrot.slane %v4109, 1
      %v4111 = vmax.f32 %v4109, %v4110
      %v4112 = vsel %vm4090, %v4066, -inf
      %v4113 = vrot.slane %v4112, 4
      %v4114 = vmax.f32 %v4112, %v4113
      %v4115 = vrot.slane %v4114, 2
      %v4116 = vmax.f32 %v4114, %v4115
      %v4117 = vrot.slane %v4116, 1
      %v4118 = vmax.f32 %v4116, %v4117
      %v4119 = vsel %vm4090, %v4068, -inf
      %v4120 = vrot.slane %v4119, 4
      %v4121 = vmax.f32 %v4119, %v4120
      %v4122 = vrot.slane %v4121, 2
      %v4123 = vmax.f32 %v4121, %v4122
      %v4124 = vrot.slane %v4123, 1
      %v4125 = vmax.f32 %v4123, %v4124
      %v4126 = vsel %vm4090, %v4070, -inf
      %v4127 = vrot.slane %v4126, 4
      %v4128 = vmax.f32 %v4126, %v4127
      %v4129 = vrot.slane %v4128, 2
      %v4130 = vmax.f32 %v4128, %v4129
      %v4131 = vrot.slane %v4130, 1
      %v4132 = vmax.f32 %v4130, %v4131
      %v4133 = vsel %vm4090, %v4072, -inf
      %v4134 = vrot.slane %v4133, 4
      %v4135 = vmax.f32 %v4133, %v4134
      %v4136 = vrot.slane %v4135, 2
      %v4137 = vmax.f32 %v4135, %v4136
      %v4138 = vrot.slane %v4137, 1
      %v4139 = vmax.f32 %v4137, %v4138
      %v4140 = vsel %vm4090, %v4074, -inf
      %v4141 = vrot.slane %v4140, 4
      %v4142 = vmax.f32 %v4140, %v4141
      %v4143 = vrot.slane %v4142, 2
      %v4144 = vmax.f32 %v4142, %v4143
      %v4145 = vrot.slane %v4144, 1
      %v4146 = vmax.f32 %v4144, %v4145
      %v4147 = vsel %vm4090, %v4076, -inf
      %v4148 = vrot.slane %v4147, 4
      %v4149 = vmax.f32 %v4147, %v4148
      %v4150 = vrot.slane %v4149, 2
      %v4151 = vmax.f32 %v4149, %v4150
      %v4152 = vrot.slane %v4151, 1
      %v4153 = vmax.f32 %v4151, %v4152
      %v4154 = vsel %vm4090, %v4078, -inf
      %v4155 = vrot.slane %v4154, 4
      %v4156 = vmax.f32 %v4154, %v4155
      %v4157 = vrot.slane %v4156, 2
      %v4158 = vmax.f32 %v4156, %v4157
      %v4159 = vrot.slane %v4158, 1
      %v4160 = vmax.f32 %v4158, %v4159
      %v4161 = vsel %vm4090, %v4080, -inf
      %v4162 = vrot.slane %v4161, 4
      %v4163 = vmax.f32 %v4161, %v4162
      %v4164 = vrot.slane %v4163, 2
      %v4165 = vmax.f32 %v4163, %v4164
      %v4166 = vrot.slane %v4165, 1
      %v4167 = vmax.f32 %v4165, %v4166
      %v4168 = vsel %vm4090, %v4082, -inf
      %v4169 = vrot.slane %v4168, 4
      %v4170 = vmax.f32 %v4168, %v4169
      %v4171 = vrot.slane %v4170, 2
      %v4172 = vmax.f32 %v4170, %v4171
      %v4173 = vrot.slane %v4172, 1
      %v4174 = vmax.f32 %v4172, %v4173
      %v4175 = vsel %vm4090, %v4084, -inf
      %v4176 = vrot.slane %v4175, 4
      %v4177 = vmax.f32 %v4175, %v4176
      %v4178 = vrot.slane %v4177, 2
      %v4179 = vmax.f32 %v4177, %v4178
      %v4180 = vrot.slane %v4179, 1
      %v4181 = vmax.f32 %v4179, %v4180
      %v4182 = vsel %vm4090, %v4086, -inf
      %v4183 = vrot.slane %v4182, 4
      %v4184 = vmax.f32 %v4182, %v4183
      %v4185 = vrot.slane %v4184, 2
      %v4186 = vmax.f32 %v4184, %v4185
      %v4187 = vrot.slane %v4186, 1
      %v4188 = vmax.f32 %v4186, %v4187
      %v4189 = vsel %vm4090, %v4088, -inf
      %v4190 = vrot.slane %v4189, 4
      %v4191 = vmax.f32 %v4189, %v4190
      %v4192 = vrot.slane %v4191, 2
      %v4193 = vmax.f32 %v4191, %v4192
      %v4194 = vrot.slane %v4193, 1
      %v4195 = vmax.f32 %v4193, %v4194
      %vm4196 = vcmask 1044482
      %v4197 = vsel %vm4196, %v4060, -inf
      %v4198 = vrot.slane %v4197, 4
      %v4199 = vmax.f32 %v4197, %v4198
      %v4200 = vrot.slane %v4199, 2
      %v4201 = vmax.f32 %v4199, %v4200
      %v4202 = vrot.slane %v4201, 1
      %v4203 = vmax.f32 %v4201, %v4202
      %v4204 = vsel %vm4196, %v4062, -inf
      %v4205 = vrot.slane %v4204, 4
      %v4206 = vmax.f32 %v4204, %v4205
      %v4207 = vrot.slane %v4206, 2
      %v4208 = vmax.f32 %v4206, %v4207
      %v4209 = vrot.slane %v4208, 1
      %v4210 = vmax.f32 %v4208, %v4209
      %v4211 = vsel %vm4196, %v4064, -inf
      %v4212 = vrot.slane %v4211, 4
      %v4213 = vmax.f32 %v4211, %v4212
      %v4214 = vrot.slane %v4213, 2
      %v4215 = vmax.f32 %v4213, %v4214
      %v4216 = vrot.slane %v4215, 1
      %v4217 = vmax.f32 %v4215, %v4216
      %v4218 = vsel %vm4196, %v4066, -inf
      %v4219 = vrot.slane %v4218, 4
      %v4220 = vmax.f32 %v4218, %v4219
      %v4221 = vrot.slane %v4220, 2
      %v4222 = vmax.f32 %v4220, %v4221
      %v4223 = vrot.slane %v4222, 1
      %v4224 = vmax.f32 %v4222, %v4223
      %v4225 = vsel %vm4196, %v4068, -inf
      %v4226 = vrot.slane %v4225, 4
      %v4227 = vmax.f32 %v4225, %v4226
      %v4228 = vrot.slane %v4227, 2
      %v4229 = vmax.f32 %v4227, %v4228
      %v4230 = vrot.slane %v4229, 1
      %v4231 = vmax.f32 %v4229, %v4230
      %v4232 = vsel %vm4196, %v4070, -inf
      %v4233 = vrot.slane %v4232, 4
      %v4234 = vmax.f32 %v4232, %v4233
      %v4235 = vrot.slane %v4234, 2
      %v4236 = vmax.f32 %v4234, %v4235
      %v4237 = vrot.slane %v4236, 1
      %v4238 = vmax.f32 %v4236, %v4237
      %v4239 = vsel %vm4196, %v4072, -inf
      %v4240 = vrot.slane %v4239, 4
      %v4241 = vmax.f32 %v4239, %v4240
      %v4242 = vrot.slane %v4241, 2
      %v4243 = vmax.f32 %v4241, %v4242
      %v4244 = vrot.slane %v4243, 1
      %v4245 = vmax.f32 %v4243, %v4244
      %v4246 = vsel %vm4196, %v4074, -inf
      %v4247 = vrot.slane %v4246, 4
      %v4248 = vmax.f32 %v4246, %v4247
      %v4249 = vrot.slane %v4248, 2
      %v4250 = vmax.f32 %v4248, %v4249
      %v4251 = vrot.slane %v4250, 1
      %v4252 = vmax.f32 %v4250, %v4251
      %v4253 = vsel %vm4196, %v4076, -inf
      %v4254 = vrot.slane %v4253, 4
      %v4255 = vmax.f32 %v4253, %v4254
      %v4256 = vrot.slane %v4255, 2
      %v4257 = vmax.f32 %v4255, %v4256
      %v4258 = vrot.slane %v4257, 1
      %v4259 = vmax.f32 %v4257, %v4258
      %v4260 = vsel %vm4196, %v4078, -inf
      %v4261 = vrot.slane %v4260, 4
      %v4262 = vmax.f32 %v4260, %v4261
      %v4263 = vrot.slane %v4262, 2
      %v4264 = vmax.f32 %v4262, %v4263
      %v4265 = vrot.slane %v4264, 1
      %v4266 = vmax.f32 %v4264, %v4265
      %v4267 = vsel %vm4196, %v4080, -inf
      %v4268 = vrot.slane %v4267, 4
      %v4269 = vmax.f32 %v4267, %v4268
      %v4270 = vrot.slane %v4269, 2
      %v4271 = vmax.f32 %v4269, %v4270
      %v4272 = vrot.slane %v4271, 1
      %v4273 = vmax.f32 %v4271, %v4272
      %v4274 = vsel %vm4196, %v4082, -inf
      %v4275 = vrot.slane %v4274, 4
      %v4276 = vmax.f32 %v4274, %v4275
      %v4277 = vrot.slane %v4276, 2
      %v4278 = vmax.f32 %v4276, %v4277
      %v4279 = vrot.slane %v4278, 1
      %v4280 = vmax.f32 %v4278, %v4279
      %v4281 = vsel %vm4196, %v4084, -inf
      %v4282 = vrot.slane %v4281, 4
      %v4283 = vmax.f32 %v4281, %v4282
      %v4284 = vrot.slane %v4283, 2
      %v4285 = vmax.f32 %v4283, %v4284
      %v4286 = vrot.slane %v4285, 1
      %v4287 = vmax.f32 %v4285, %v4286
      %v4288 = vsel %vm4196, %v4086, -inf
      %v4289 = vrot.slane %v4288, 4
      %v4290 = vmax.f32 %v4288, %v4289
      %v4291 = vrot.slane %v4290, 2
      %v4292 = vmax.f32 %v4290, %v4291
      %v4293 = vrot.slane %v4292, 1
      %v4294 = vmax.f32 %v4292, %v4293
      %v4295 = vsel %vm4196, %v4088, -inf
      %v4296 = vrot.slane %v4295, 4
      %v4297 = vmax.f32 %v4295, %v4296
      %v4298 = vrot.slane %v4297, 2
      %v4299 = vmax.f32 %v4297, %v4298
      %v4300 = vrot.slane %v4299, 1
      %v4301 = vmax.f32 %v4299, %v4300
      %vm4302 = vcmask 1046532
      %v4303 = vsel %vm4302, %v4060, -inf
      %v4304 = vrot.slane %v4303, 4
      %v4305 = vmax.f32 %v4303, %v4304
      %v4306 = vrot.slane %v4305, 2
      %v4307 = vmax.f32 %v4305, %v4306
      %v4308 = vrot.slane %v4307, 1
      %v4309 = vmax.f32 %v4307, %v4308
      %v4310 = vsel %vm4302, %v4062, -inf
      %v4311 = vrot.slane %v4310, 4
      %v4312 = vmax.f32 %v4310, %v4311
      %v4313 = vrot.slane %v4312, 2
      %v4314 = vmax.f32 %v4312, %v4313
      %v4315 = vrot.slane %v4314, 1
      %v4316 = vmax.f32 %v4314, %v4315
      %v4317 = vsel %vm4302, %v4064, -inf
      %v4318 = vrot.slane %v4317, 4
      %v4319 = vmax.f32 %v4317, %v4318
      %v4320 = vrot.slane %v4319, 2
      %v4321 = vmax.f32 %v4319, %v4320
      %v4322 = vrot.slane %v4321, 1
      %v4323 = vmax.f32 %v4321, %v4322
      %v4324 = vsel %vm4302, %v4066, -inf
      %v4325 = vrot.slane %v4324, 4
      %v4326 = vmax.f32 %v4324, %v4325
      %v4327 = vrot.slane %v4326, 2
      %v4328 = vmax.f32 %v4326, %v4327
      %v4329 = vrot.slane %v4328, 1
      %v4330 = vmax.f32 %v4328, %v4329
      %v4331 = vsel %vm4302, %v4068, -inf
      %v4332 = vrot.slane %v4331, 4
      %v4333 = vmax.f32 %v4331, %v4332
      %v4334 = vrot.slane %v4333, 2
      %v4335 = vmax.f32 %v4333, %v4334
      %v4336 = vrot.slane %v4335, 1
      %v4337 = vmax.f32 %v4335, %v4336
      %v4338 = vsel %vm4302, %v4070, -inf
      %v4339 = vrot.slane %v4338, 4
      %v4340 = vmax.f32 %v4338, %v4339
      %v4341 = vrot.slane %v4340, 2
      %v4342 = vmax.f32 %v4340, %v4341
      %v4343 = vrot.slane %v4342, 1
      %v4344 = vmax.f32 %v4342, %v4343
      %v4345 = vsel %vm4302, %v4072, -inf
      %v4346 = vrot.slane %v4345, 4
      %v4347 = vmax.f32 %v4345, %v4346
      %v4348 = vrot.slane %v4347, 2
      %v4349 = vmax.f32 %v4347, %v4348
      %v4350 = vrot.slane %v4349, 1
      %v4351 = vmax.f32 %v4349, %v4350
      %v4352 = vsel %vm4302, %v4074, -inf
      %v4353 = vrot.slane %v4352, 4
      %v4354 = vmax.f32 %v4352, %v4353
      %v4355 = vrot.slane %v4354, 2
      %v4356 = vmax.f32 %v4354, %v4355
      %v4357 = vrot.slane %v4356, 1
      %v4358 = vmax.f32 %v4356, %v4357
      %v4359 = vsel %vm4302, %v4076, -inf
      %v4360 = vrot.slane %v4359, 4
      %v4361 = vmax.f32 %v4359, %v4360
      %v4362 = vrot.slane %v4361, 2
      %v4363 = vmax.f32 %v4361, %v4362
      %v4364 = vrot.slane %v4363, 1
      %v4365 = vmax.f32 %v4363, %v4364
      %v4366 = vsel %vm4302, %v4078, -inf
      %v4367 = vrot.slane %v4366, 4
      %v4368 = vmax.f32 %v4366, %v4367
      %v4369 = vrot.slane %v4368, 2
      %v4370 = vmax.f32 %v4368, %v4369
      %v4371 = vrot.slane %v4370, 1
      %v4372 = vmax.f32 %v4370, %v4371
      %v4373 = vsel %vm4302, %v4080, -inf
      %v4374 = vrot.slane %v4373, 4
      %v4375 = vmax.f32 %v4373, %v4374
      %v4376 = vrot.slane %v4375, 2
      %v4377 = vmax.f32 %v4375, %v4376
      %v4378 = vrot.slane %v4377, 1
      %v4379 = vmax.f32 %v4377, %v4378
      %v4380 = vsel %vm4302, %v4082, -inf
      %v4381 = vrot.slane %v4380, 4
      %v4382 = vmax.f32 %v4380, %v4381
      %v4383 = vrot.slane %v4382, 2
      %v4384 = vmax.f32 %v4382, %v4383
      %v4385 = vrot.slane %v4384, 1
      %v4386 = vmax.f32 %v4384, %v4385
      %v4387 = vsel %vm4302, %v4084, -inf
      %v4388 = vrot.slane %v4387, 4
      %v4389 = vmax.f32 %v4387, %v4388
      %v4390 = vrot.slane %v4389, 2
      %v4391 = vmax.f32 %v4389, %v4390
      %v4392 = vrot.slane %v4391, 1
      %v4393 = vmax.f32 %v4391, %v4392
      %v4394 = vsel %vm4302, %v4086, -inf
      %v4395 = vrot.slane %v4394, 4
      %v4396 = vmax.f32 %v4394, %v4395
      %v4397 = vrot.slane %v4396, 2
      %v4398 = vmax.f32 %v4396, %v4397
      %v4399 = vrot.slane %v4398, 1
      %v4400 = vmax.f32 %v4398, %v4399
      %v4401 = vsel %vm4302, %v4088, -inf
      %v4402 = vrot.slane %v4401, 4
      %v4403 = vmax.f32 %v4401, %v4402
      %v4404 = vrot.slane %v4403, 2
      %v4405 = vmax.f32 %v4403, %v4404
      %v4406 = vrot.slane %v4405, 1
      %v4407 = vmax.f32 %v4405, %v4406
      %vm4408 = vcmask 1047558
      %v4409 = vsel %vm4408, %v4060, -inf
      %vm4410 = vcmask 1040384
      %v4411 = vsel %vm4410, %v4061, -inf
      %v4412 = vmax.f32 %v4409, %v4411
      %v4413 = vrot.slane %v4412, 4
      %v4414 = vmax.f32 %v4412, %v4413
      %v4415 = vrot.slane %v4414, 2
      %v4416 = vmax.f32 %v4414, %v4415
      %v4417 = vrot.slane %v4416, 1
      %v4418 = vmax.f32 %v4416, %v4417
      %v4419 = vsel %vm4408, %v4062, -inf
      %v4420 = vsel %vm4410, %v4063, -inf
      %v4421 = vmax.f32 %v4419, %v4420
      %v4422 = vrot.slane %v4421, 4
      %v4423 = vmax.f32 %v4421, %v4422
      %v4424 = vrot.slane %v4423, 2
      %v4425 = vmax.f32 %v4423, %v4424
      %v4426 = vrot.slane %v4425, 1
      %v4427 = vmax.f32 %v4425, %v4426
      %v4428 = vsel %vm4408, %v4064, -inf
      %v4429 = vsel %vm4410, %v4065, -inf
      %v4430 = vmax.f32 %v4428, %v4429
      %v4431 = vrot.slane %v4430, 4
      %v4432 = vmax.f32 %v4430, %v4431
      %v4433 = vrot.slane %v4432, 2
      %v4434 = vmax.f32 %v4432, %v4433
      %v4435 = vrot.slane %v4434, 1
      %v4436 = vmax.f32 %v4434, %v4435
      %v4437 = vsel %vm4408, %v4066, -inf
      %v4438 = vsel %vm4410, %v4067, -inf
      %v4439 = vmax.f32 %v4437, %v4438
      %v4440 = vrot.slane %v4439, 4
      %v4441 = vmax.f32 %v4439, %v4440
      %v4442 = vrot.slane %v4441, 2
      %v4443 = vmax.f32 %v4441, %v4442
      %v4444 = vrot.slane %v4443, 1
      %v4445 = vmax.f32 %v4443, %v4444
      %v4446 = vsel %vm4408, %v4068, -inf
      %v4447 = vsel %vm4410, %v4069, -inf
      %v4448 = vmax.f32 %v4446, %v4447
      %v4449 = vrot.slane %v4448, 4
      %v4450 = vmax.f32 %v4448, %v4449
      %v4451 = vrot.slane %v4450, 2
      %v4452 = vmax.f32 %v4450, %v4451
      %v4453 = vrot.slane %v4452, 1
      %v4454 = vmax.f32 %v4452, %v4453
      %v4455 = vsel %vm4408, %v4070, -inf
      %v4456 = vsel %vm4410, %v4071, -inf
      %v4457 = vmax.f32 %v4455, %v4456
      %v4458 = vrot.slane %v4457, 4
      %v4459 = vmax.f32 %v4457, %v4458
      %v4460 = vrot.slane %v4459, 2
      %v4461 = vmax.f32 %v4459, %v4460
      %v4462 = vrot.slane %v4461, 1
      %v4463 = vmax.f32 %v4461, %v4462
      %v4464 = vsel %vm4408, %v4072, -inf
      %v4465 = vsel %vm4410, %v4073, -inf
      %v4466 = vmax.f32 %v4464, %v4465
      %v4467 = vrot.slane %v4466, 4
      %v4468 = vmax.f32 %v4466, %v4467
      %v4469 = vrot.slane %v4468, 2
      %v4470 = vmax.f32 %v4468, %v4469
      %v4471 = vrot.slane %v4470, 1
      %v4472 = vmax.f32 %v4470, %v4471
      %v4473 = vsel %vm4408, %v4074, -inf
      %v4474 = vsel %vm4410, %v4075, -inf
      %v4475 = vmax.f32 %v4473, %v4474
      %v4476 = vrot.slane %v4475, 4
      %v4477 = vmax.f32 %v4475, %v4476
      %v4478 = vrot.slane %v4477, 2
      %v4479 = vmax.f32 %v4477, %v4478
      %v4480 = vrot.slane %v4479, 1
      %v4481 = vmax.f32 %v4479, %v4480
      %v4482 = vsel %vm4408, %v4076, -inf
      %v4483 = vsel %vm4410, %v4077, -inf
      %v4484 = vmax.f32 %v4482, %v4483
      %v4485 = vrot.slane %v4484, 4
      %v4486 = vmax.f32 %v4484, %v4485
      %v4487 = vrot.slane %v4486, 2
      %v4488 = vmax.f32 %v4486, %v4487
      %v4489 = vrot.slane %v4488, 1
      %v4490 = vmax.f32 %v4488, %v4489
      %v4491 = vsel %vm4408, %v4078, -inf
      %v4492 = vsel %vm4410, %v4079, -inf
      %v4493 = vmax.f32 %v4491, %v4492
      %v4494 = vrot.slane %v4493, 4
      %v4495 = vmax.f32 %v4493, %v4494
      %v4496 = vrot.slane %v4495, 2
      %v4497 = vmax.f32 %v4495, %v4496
      %v4498 = vrot.slane %v4497, 1
      %v4499 = vmax.f32 %v4497, %v4498
      %v4500 = vsel %vm4408, %v4080, -inf
      %v4501 = vsel %vm4410, %v4081, -inf
      %v4502 = vmax.f32 %v4500, %v4501
      %v4503 = vrot.slane %v4502, 4
      %v4504 = vmax.f32 %v4502, %v4503
      %v4505 = vrot.slane %v4504, 2
      %v4506 = vmax.f32 %v4504, %v4505
      %v4507 = vrot.slane %v4506, 1
      %v4508 = vmax.f32 %v4506, %v4507
      %v4509 = vsel %vm4408, %v4082, -inf
      %v4510 = vsel %vm4410, %v4083, -inf
      %v4511 = vmax.f32 %v4509, %v4510
      %v4512 = vrot.slane %v4511, 4
      %v4513 = vmax.f32 %v4511, %v4512
      %v4514 = vrot.slane %v4513, 2
      %v4515 = vmax.f32 %v4513, %v4514
      %v4516 = vrot.slane %v4515, 1
      %v4517 = vmax.f32 %v4515, %v4516
      %v4518 = vsel %vm4408, %v4084, -inf
      %v4519 = vsel %vm4410, %v4085, -inf
      %v4520 = vmax.f32 %v4518, %v4519
      %v4521 = vrot.slane %v4520, 4
      %v4522 = vmax.f32 %v4520, %v4521
      %v4523 = vrot.slane %v4522, 2
      %v4524 = vmax.f32 %v4522, %v4523
      %v4525 = vrot.slane %v4524, 1
      %v4526 = vmax.f32 %v4524, %v4525
      %v4527 = vsel %vm4408, %v4086, -inf
      %v4528 = vsel %vm4410, %v4087, -inf
      %v4529 = vmax.f32 %v4527, %v4528
      %v4530 = vrot.slane %v4529, 4
      %v4531 = vmax.f32 %v4529, %v4530
      %v4532 = vrot.slane %v4531, 2
      %v4533 = vmax.f32 %v4531, %v4532
      %v4534 = vrot.slane %v4533, 1
      %v4535 = vmax.f32 %v4533, %v4534
      %v4536 = vsel %vm4408, %v4088, -inf
      %v4537 = vsel %vm4410, %v4089, -inf
      %v4538 = vmax.f32 %v4536, %v4537
      %v4539 = vrot.slane %v4538, 4
      %v4540 = vmax.f32 %v4538, %v4539
      %v4541 = vrot.slane %v4540, 2
      %v4542 = vmax.f32 %v4540, %v4541
      %v4543 = vrot.slane %v4542, 1
      %v4544 = vmax.f32 %v4542, %v4543
      %v4545 = vsel %vm4090, %v4061, -inf
      %v4546 = vrot.slane %v4545, 4
      %v4547 = vmax.f32 %v4545, %v4546
      %v4548 = vrot.slane %v4547, 2
      %v4549 = vmax.f32 %v4547, %v4548
      %v4550 = vrot.slane %v4549, 1
      %v4551 = vmax.f32 %v4549, %v4550
      %v4552 = vsel %vm4090, %v4063, -inf
      %v4553 = vrot.slane %v4552, 4
      %v4554 = vmax.f32 %v4552, %v4553
      %v4555 = vrot.slane %v4554, 2
      %v4556 = vmax.f32 %v4554, %v4555
      %v4557 = vrot.slane %v4556, 1
      %v4558 = vmax.f32 %v4556, %v4557
      %v4559 = vsel %vm4090, %v4065, -inf
      %v4560 = vrot.slane %v4559, 4
      %v4561 = vmax.f32 %v4559, %v4560
      %v4562 = vrot.slane %v4561, 2
      %v4563 = vmax.f32 %v4561, %v4562
      %v4564 = vrot.slane %v4563, 1
      %v4565 = vmax.f32 %v4563, %v4564
      %v4566 = vsel %vm4090, %v4067, -inf
      %v4567 = vrot.slane %v4566, 4
      %v4568 = vmax.f32 %v4566, %v4567
      %v4569 = vrot.slane %v4568, 2
      %v4570 = vmax.f32 %v4568, %v4569
      %v4571 = vrot.slane %v4570, 1
      %v4572 = vmax.f32 %v4570, %v4571
      %v4573 = vsel %vm4090, %v4069, -inf
      %v4574 = vrot.slane %v4573, 4
      %v4575 = vmax.f32 %v4573, %v4574
      %v4576 = vrot.slane %v4575, 2
      %v4577 = vmax.f32 %v4575, %v4576
      %v4578 = vrot.slane %v4577, 1
      %v4579 = vmax.f32 %v4577, %v4578
      %v4580 = vsel %vm4090, %v4071, -inf
      %v4581 = vrot.slane %v4580, 4
      %v4582 = vmax.f32 %v4580, %v4581
      %v4583 = vrot.slane %v4582, 2
      %v4584 = vmax.f32 %v4582, %v4583
      %v4585 = vrot.slane %v4584, 1
      %v4586 = vmax.f32 %v4584, %v4585
      %v4587 = vsel %vm4090, %v4073, -inf
      %v4588 = vrot.slane %v4587, 4
      %v4589 = vmax.f32 %v4587, %v4588
      %v4590 = vrot.slane %v4589, 2
      %v4591 = vmax.f32 %v4589, %v4590
      %v4592 = vrot.slane %v4591, 1
      %v4593 = vmax.f32 %v4591, %v4592
      %v4594 = vsel %vm4090, %v4075, -inf
      %v4595 = vrot.slane %v4594, 4
      %v4596 = vmax.f32 %v4594, %v4595
      %v4597 = vrot.slane %v4596, 2
      %v4598 = vmax.f32 %v4596, %v4597
      %v4599 = vrot.slane %v4598, 1
      %v4600 = vmax.f32 %v4598, %v4599
      %v4601 = vsel %vm4090, %v4077, -inf
      %v4602 = vrot.slane %v4601, 4
      %v4603 = vmax.f32 %v4601, %v4602
      %v4604 = vrot.slane %v4603, 2
      %v4605 = vmax.f32 %v4603, %v4604
      %v4606 = vrot.slane %v4605, 1
      %v4607 = vmax.f32 %v4605, %v4606
      %v4608 = vsel %vm4090, %v4079, -inf
      %v4609 = vrot.slane %v4608, 4
      %v4610 = vmax.f32 %v4608, %v4609
      %v4611 = vrot.slane %v4610, 2
      %v4612 = vmax.f32 %v4610, %v4611
      %v4613 = vrot.slane %v4612, 1
      %v4614 = vmax.f32 %v4612, %v4613
      %v4615 = vsel %vm4090, %v4081, -inf
      %v4616 = vrot.slane %v4615, 4
      %v4617 = vmax.f32 %v4615, %v4616
      %v4618 = vrot.slane %v4617, 2
      %v4619 = vmax.f32 %v4617, %v4618
      %v4620 = vrot.slane %v4619, 1
      %v4621 = vmax.f32 %v4619, %v4620
      %v4622 = vsel %vm4090, %v4083, -inf
      %v4623 = vrot.slane %v4622, 4
      %v4624 = vmax.f32 %v4622, %v4623
      %v4625 = vrot.slane %v4624, 2
      %v4626 = vmax.f32 %v4624, %v4625
      %v4627 = vrot.slane %v4626, 1
      %v4628 = vmax.f32 %v4626, %v4627
      %v4629 = vsel %vm4090, %v4085, -inf
      %v4630 = vrot.slane %v4629, 4
      %v4631 = vmax.f32 %v4629, %v4630
      %v4632 = vrot.slane %v4631, 2
      %v4633 = vmax.f32 %v4631, %v4632
      %v4634 = vrot.slane %v4633, 1
      %v4635 = vmax.f32 %v4633, %v4634
      %v4636 = vsel %vm4090, %v4087, -inf
      %v4637 = vrot.slane %v4636, 4
      %v4638 = vmax.f32 %v4636, %v4637
      %v4639 = vrot.slane %v4638, 2
      %v4640 = vmax.f32 %v4638, %v4639
      %v4641 = vrot.slane %v4640, 1
      %v4642 = vmax.f32 %v4640, %v4641
      %v4643 = vsel %vm4090, %v4089, -inf
      %v4644 = vrot.slane %v4643, 4
      %v4645 = vmax.f32 %v4643, %v4644
      %v4646 = vrot.slane %v4645, 2
      %v4647 = vmax.f32 %v4645, %v4646
      %v4648 = vrot.slane %v4647, 1
      %v4649 = vmax.f32 %v4647, %v4648
      %v4650 = vsel %vm4196, %v4061, -inf
      %v4651 = vrot.slane %v4650, 4
      %v4652 = vmax.f32 %v4650, %v4651
      %v4653 = vrot.slane %v4652, 2
      %v4654 = vmax.f32 %v4652, %v4653
      %v4655 = vrot.slane %v4654, 1
      %v4656 = vmax.f32 %v4654, %v4655
      %v4657 = vsel %vm4196, %v4063, -inf
      %v4658 = vrot.slane %v4657, 4
      %v4659 = vmax.f32 %v4657, %v4658
      %v4660 = vrot.slane %v4659, 2
      %v4661 = vmax.f32 %v4659, %v4660
      %v4662 = vrot.slane %v4661, 1
      %v4663 = vmax.f32 %v4661, %v4662
      %v4664 = vsel %vm4196, %v4065, -inf
      %v4665 = vrot.slane %v4664, 4
      %v4666 = vmax.f32 %v4664, %v4665
      %v4667 = vrot.slane %v4666, 2
      %v4668 = vmax.f32 %v4666, %v4667
      %v4669 = vrot.slane %v4668, 1
      %v4670 = vmax.f32 %v4668, %v4669
      %v4671 = vsel %vm4196, %v4067, -inf
      %v4672 = vrot.slane %v4671, 4
      %v4673 = vmax.f32 %v4671, %v4672
      %v4674 = vrot.slane %v4673, 2
      %v4675 = vmax.f32 %v4673, %v4674
      %v4676 = vrot.slane %v4675, 1
      %v4677 = vmax.f32 %v4675, %v4676
      %v4678 = vsel %vm4196, %v4069, -inf
      %v4679 = vrot.slane %v4678, 4
      %v4680 = vmax.f32 %v4678, %v4679
      %v4681 = vrot.slane %v4680, 2
      %v4682 = vmax.f32 %v4680, %v4681
      %v4683 = vrot.slane %v4682, 1
      %v4684 = vmax.f32 %v4682, %v4683
      %v4685 = vsel %vm4196, %v4071, -inf
      %v4686 = vrot.slane %v4685, 4
      %v4687 = vmax.f32 %v4685, %v4686
      %v4688 = vrot.slane %v4687, 2
      %v4689 = vmax.f32 %v4687, %v4688
      %v4690 = vrot.slane %v4689, 1
      %v4691 = vmax.f32 %v4689, %v4690
      %v4692 = vsel %vm4196, %v4073, -inf
      %v4693 = vrot.slane %v4692, 4
      %v4694 = vmax.f32 %v4692, %v4693
      %v4695 = vrot.slane %v4694, 2
      %v4696 = vmax.f32 %v4694, %v4695
      %v4697 = vrot.slane %v4696, 1
      %v4698 = vmax.f32 %v4696, %v4697
      %v4699 = vsel %vm4196, %v4075, -inf
      %v4700 = vrot.slane %v4699, 4
      %v4701 = vmax.f32 %v4699, %v4700
      %v4702 = vrot.slane %v4701, 2
      %v4703 = vmax.f32 %v4701, %v4702
      %v4704 = vrot.slane %v4703, 1
      %v4705 = vmax.f32 %v4703, %v4704
      %v4706 = vsel %vm4196, %v4077, -inf
      %v4707 = vrot.slane %v4706, 4
      %v4708 = vmax.f32 %v4706, %v4707
      %v4709 = vrot.slane %v4708, 2
      %v4710 = vmax.f32 %v4708, %v4709
      %v4711 = vrot.slane %v4710, 1
      %v4712 = vmax.f32 %v4710, %v4711
      %v4713 = vsel %vm4196, %v4079, -inf
      %v4714 = vrot.slane %v4713, 4
      %v4715 = vmax.f32 %v4713, %v4714
      %v4716 = vrot.slane %v4715, 2
      %v4717 = vmax.f32 %v4715, %v4716
      %v4718 = vrot.slane %v4717, 1
      %v4719 = vmax.f32 %v4717, %v4718
      %v4720 = vsel %vm4196, %v4081, -inf
      %v4721 = vrot.slane %v4720, 4
      %v4722 = vmax.f32 %v4720, %v4721
      %v4723 = vrot.slane %v4722, 2
      %v4724 = vmax.f32 %v4722, %v4723
      %v4725 = vrot.slane %v4724, 1
      %v4726 = vmax.f32 %v4724, %v4725
      %v4727 = vsel %vm4196, %v4083, -inf
      %v4728 = vrot.slane %v4727, 4
      %v4729 = vmax.f32 %v4727, %v4728
      %v4730 = vrot.slane %v4729, 2
      %v4731 = vmax.f32 %v4729, %v4730
      %v4732 = vrot.slane %v4731, 1
      %v4733 = vmax.f32 %v4731, %v4732
      %v4734 = vsel %vm4196, %v4085, -inf
      %v4735 = vrot.slane %v4734, 4
      %v4736 = vmax.f32 %v4734, %v4735
      %v4737 = vrot.slane %v4736, 2
      %v4738 = vmax.f32 %v4736, %v4737
      %v4739 = vrot.slane %v4738, 1
      %v4740 = vmax.f32 %v4738, %v4739
      %v4741 = vsel %vm4196, %v4087, -inf
      %v4742 = vrot.slane %v4741, 4
      %v4743 = vmax.f32 %v4741, %v4742
      %v4744 = vrot.slane %v4743, 2
      %v4745 = vmax.f32 %v4743, %v4744
      %v4746 = vrot.slane %v4745, 1
      %v4747 = vmax.f32 %v4745, %v4746
      %v4748 = vsel %vm4196, %v4089, -inf
      %v4749 = vrot.slane %v4748, 4
      %v4750 = vmax.f32 %v4748, %v4749
      %v4751 = vrot.slane %v4750, 2
      %v4752 = vmax.f32 %v4750, %v4751
      %v4753 = vrot.slane %v4752, 1
      %v4754 = vmax.f32 %v4752, %v4753
      %v4755 = vsel %vm4302, %v4061, -inf
      %v4756 = vrot.slane %v4755, 4
      %v4757 = vmax.f32 %v4755, %v4756
      %v4758 = vrot.slane %v4757, 2
      %v4759 = vmax.f32 %v4757, %v4758
      %v4760 = vrot.slane %v4759, 1
      %v4761 = vmax.f32 %v4759, %v4760
      %v4762 = vsel %vm4302, %v4063, -inf
      %v4763 = vrot.slane %v4762, 4
      %v4764 = vmax.f32 %v4762, %v4763
      %v4765 = vrot.slane %v4764, 2
      %v4766 = vmax.f32 %v4764, %v4765
      %v4767 = vrot.slane %v4766, 1
      %v4768 = vmax.f32 %v4766, %v4767
      %v4769 = vsel %vm4302, %v4065, -inf
      %v4770 = vrot.slane %v4769, 4
      %v4771 = vmax.f32 %v4769, %v4770
      %v4772 = vrot.slane %v4771, 2
      %v4773 = vmax.f32 %v4771, %v4772
      %v4774 = vrot.slane %v4773, 1
      %v4775 = vmax.f32 %v4773, %v4774
      %v4776 = vsel %vm4302, %v4067, -inf
      %v4777 = vrot.slane %v4776, 4
      %v4778 = vmax.f32 %v4776, %v4777
      %v4779 = vrot.slane %v4778, 2
      %v4780 = vmax.f32 %v4778, %v4779
      %v4781 = vrot.slane %v4780, 1
      %v4782 = vmax.f32 %v4780, %v4781
      %v4783 = vsel %vm4302, %v4069, -inf
      %v4784 = vrot.slane %v4783, 4
      %v4785 = vmax.f32 %v4783, %v4784
      %v4786 = vrot.slane %v4785, 2
      %v4787 = vmax.f32 %v4785, %v4786
      %v4788 = vrot.slane %v4787, 1
      %v4789 = vmax.f32 %v4787, %v4788
      %v4790 = vsel %vm4302, %v4071, -inf
      %v4791 = vrot.slane %v4790, 4
      %v4792 = vmax.f32 %v4790, %v4791
      %v4793 = vrot.slane %v4792, 2
      %v4794 = vmax.f32 %v4792, %v4793
      %v4795 = vrot.slane %v4794, 1
      %v4796 = vmax.f32 %v4794, %v4795
      %v4797 = vsel %vm4302, %v4073, -inf
      %v4798 = vrot.slane %v4797, 4
      %v4799 = vmax.f32 %v4797, %v4798
      %v4800 = vrot.slane %v4799, 2
      %v4801 = vmax.f32 %v4799, %v4800
      %v4802 = vrot.slane %v4801, 1
      %v4803 = vmax.f32 %v4801, %v4802
      %v4804 = vsel %vm4302, %v4075, -inf
      %v4805 = vrot.slane %v4804, 4
      %v4806 = vmax.f32 %v4804, %v4805
      %v4807 = vrot.slane %v4806, 2
      %v4808 = vmax.f32 %v4806, %v4807
      %v4809 = vrot.slane %v4808, 1
      %v4810 = vmax.f32 %v4808, %v4809
      %v4811 = vsel %vm4302, %v4077, -inf
      %v4812 = vrot.slane %v4811, 4
      %v4813 = vmax.f32 %v4811, %v4812
      %v4814 = vrot.slane %v4813, 2
      %v4815 = vmax.f32 %v4813, %v4814
      %v4816 = vrot.slane %v4815, 1
      %v4817 = vmax.f32 %v4815, %v4816
      %v4818 = vsel %vm4302, %v4079, -inf
      %v4819 = vrot.slane %v4818, 4
      %v4820 = vmax.f32 %v4818, %v4819
      %v4821 = vrot.slane %v4820, 2
      %v4822 = vmax.f32 %v4820, %v4821
      %v4823 = vrot.slane %v4822, 1
      %v4824 = vmax.f32 %v4822, %v4823
      %v4825 = vsel %vm4302, %v4081, -inf
      %v4826 = vrot.slane %v4825, 4
      %v4827 = vmax.f32 %v4825, %v4826
      %v4828 = vrot.slane %v4827, 2
      %v4829 = vmax.f32 %v4827, %v4828
      %v4830 = vrot.slane %v4829, 1
      %v4831 = vmax.f32 %v4829, %v4830
      %v4832 = vsel %vm4302, %v4083, -inf
      %v4833 = vrot.slane %v4832, 4
      %v4834 = vmax.f32 %v4832, %v4833
      %v4835 = vrot.slane %v4834, 2
      %v4836 = vmax.f32 %v4834, %v4835
      %v4837 = vrot.slane %v4836, 1
      %v4838 = vmax.f32 %v4836, %v4837
      %v4839 = vsel %vm4302, %v4085, -inf
      %v4840 = vrot.slane %v4839, 4
      %v4841 = vmax.f32 %v4839, %v4840
      %v4842 = vrot.slane %v4841, 2
      %v4843 = vmax.f32 %v4841, %v4842
      %v4844 = vrot.slane %v4843, 1
      %v4845 = vmax.f32 %v4843, %v4844
      %v4846 = vsel %vm4302, %v4087, -inf
      %v4847 = vrot.slane %v4846, 4
      %v4848 = vmax.f32 %v4846, %v4847
      %v4849 = vrot.slane %v4848, 2
      %v4850 = vmax.f32 %v4848, %v4849
      %v4851 = vrot.slane %v4850, 1
      %v4852 = vmax.f32 %v4850, %v4851
      %v4853 = vsel %vm4302, %v4089, -inf
      %v4854 = vrot.slane %v4853, 4
      %v4855 = vmax.f32 %v4853, %v4854
      %v4856 = vrot.slane %v4855, 2
      %v4857 = vmax.f32 %v4855, %v4856
      %v4858 = vrot.slane %v4857, 1
      %v4859 = vmax.f32 %v4857, %v4858
      %v4860 = vsel %vm4410, %v4097, %v4203
      %v4861 = vsel %vm4410, %v4104, %v4210
      %v4862 = vsel %vm4410, %v4111, %v4217
      %v4863 = vsel %vm4410, %v4118, %v4224
      %v4864 = vsel %vm4410, %v4125, %v4231
      %v4865 = vsel %vm4410, %v4132, %v4238
      %v4866 = vsel %vm4410, %v4139, %v4245
      %v4867 = vsel %vm4410, %v4146, %v4252
      %v4868 = vsel %vm4410, %v4153, %v4259
      %v4869 = vsel %vm4410, %v4160, %v4266
      %v4870 = vsel %vm4410, %v4167, %v4273
      %v4871 = vsel %vm4410, %v4174, %v4280
      %v4872 = vsel %vm4410, %v4181, %v4287
      %v4873 = vsel %vm4410, %v4188, %v4294
      %v4874 = vsel %vm4410, %v4195, %v4301
      %vm4875 = vcmask 1041408
      %v4876 = vsel %vm4875, %v4860, %v4309
      %v4877 = vsel %vm4875, %v4861, %v4316
      %v4878 = vsel %vm4875, %v4862, %v4323
      %v4879 = vsel %vm4875, %v4863, %v4330
      %v4880 = vsel %vm4875, %v4864, %v4337
      %v4881 = vsel %vm4875, %v4865, %v4344
      %v4882 = vsel %vm4875, %v4866, %v4351
      %v4883 = vsel %vm4875, %v4867, %v4358
      %v4884 = vsel %vm4875, %v4868, %v4365
      %v4885 = vsel %vm4875, %v4869, %v4372
      %v4886 = vsel %vm4875, %v4870, %v4379
      %v4887 = vsel %vm4875, %v4871, %v4386
      %v4888 = vsel %vm4875, %v4872, %v4393
      %v4889 = vsel %vm4875, %v4873, %v4400
      %v4890 = vsel %vm4875, %v4874, %v4407
      %v4891 = vsel %vm4090, %v4876, %v4418
      %v4892 = vsel %vm4090, %v4877, %v4427
      %v4893 = vsel %vm4090, %v4878, %v4436
      %v4894 = vsel %vm4090, %v4879, %v4445
      %v4895 = vsel %vm4090, %v4880, %v4454
      %v4896 = vsel %vm4090, %v4881, %v4463
      %v4897 = vsel %vm4090, %v4882, %v4472
      %v4898 = vsel %vm4090, %v4883, %v4481
      %v4899 = vsel %vm4090, %v4884, %v4490
      %v4900 = vsel %vm4090, %v4885, %v4499
      %v4901 = vsel %vm4090, %v4886, %v4508
      %v4902 = vsel %vm4090, %v4887, %v4517
      %v4903 = vsel %vm4090, %v4888, %v4526
      %v4904 = vsel %vm4090, %v4889, %v4535
      %v4905 = vsel %vm4090, %v4890, %v4544
      %vm4906 = vcmask 1043456
      %v4907 = vsel %vm4906, %v4891, %v4551
      %v4908 = vsel %vm4906, %v4892, %v4558
      %v4909 = vsel %vm4906, %v4893, %v4565
      %v4910 = vsel %vm4906, %v4894, %v4572
      %v4911 = vsel %vm4906, %v4895, %v4579
      %v4912 = vsel %vm4906, %v4896, %v4586
      %v4913 = vsel %vm4906, %v4897, %v4593
      %v4914 = vsel %vm4906, %v4898, %v4600
      %v4915 = vsel %vm4906, %v4899, %v4607
      %v4916 = vsel %vm4906, %v4900, %v4614
      %v4917 = vsel %vm4906, %v4901, %v4621
      %v4918 = vsel %vm4906, %v4902, %v4628
      %v4919 = vsel %vm4906, %v4903, %v4635
      %v4920 = vsel %vm4906, %v4904, %v4642
      %v4921 = vsel %vm4906, %v4905, %v4649
      %vm4922 = vcmask 1044480
      %v4923 = vsel %vm4922, %v4907, %v4656
      %v4924 = vsel %vm4922, %v4908, %v4663
      %v4925 = vsel %vm4922, %v4909, %v4670
      %v4926 = vsel %vm4922, %v4910, %v4677
      %v4927 = vsel %vm4922, %v4911, %v4684
      %v4928 = vsel %vm4922, %v4912, %v4691
      %v4929 = vsel %vm4922, %v4913, %v4698
      %v4930 = vsel %vm4922, %v4914, %v4705
      %v4931 = vsel %vm4922, %v4915, %v4712
      %v4932 = vsel %vm4922, %v4916, %v4719
      %v4933 = vsel %vm4922, %v4917, %v4726
      %v4934 = vsel %vm4922, %v4918, %v4733
      %v4935 = vsel %vm4922, %v4919, %v4740
      %v4936 = vsel %vm4922, %v4920, %v4747
      %v4937 = vsel %vm4922, %v4921, %v4754
      %vm4938 = vcmask 1045504
      %v4939 = vsel %vm4938, %v4923, %v4761
      %v4940 = vsel %vm4938, %v4924, %v4768
      %v4941 = vsel %vm4938, %v4925, %v4775
      %v4942 = vsel %vm4938, %v4926, %v4782
      %v4943 = vsel %vm4938, %v4927, %v4789
      %v4944 = vsel %vm4938, %v4928, %v4796
      %v4945 = vsel %vm4938, %v4929, %v4803
      %v4946 = vsel %vm4938, %v4930, %v4810
      %v4947 = vsel %vm4938, %v4931, %v4817
      %v4948 = vsel %vm4938, %v4932, %v4824
      %v4949 = vsel %vm4938, %v4933, %v4831
      %v4950 = vsel %vm4938, %v4934, %v4838
      %v4951 = vsel %vm4938, %v4935, %v4845
      %v4952 = vsel %vm4938, %v4936, %v4852
      %v4953 = vsel %vm4938, %v4937, %v4859
      %vm4954 = vcmask 1046528
      %v4955 = vsel %vm4954, %v4939, -inf
      %v4956 = vsel %vm4954, %v4940, -inf
      %v4957 = vsel %vm4954, %v4941, -inf
      %v4958 = vmax.f32 %v4955, %v4956
      %v4959 = vmax.f32 %v4958, %v4957
      %v4960 = vsel %vm4954, %v4942, -inf
      %v4961 = vsel %vm4954, %v4943, -inf
      %v4962 = vmax.f32 %v4957, %v4960
      %v4963 = vmax.f32 %v4962, %v4961
      %v4964 = vsel %vm4954, %v4944, -inf
      %v4965 = vsel %vm4954, %v4945, -inf
      %v4966 = vmax.f32 %v4961, %v4964
      %v4967 = vmax.f32 %v4966, %v4965
      %v4968 = vsel %vm4954, %v4946, -inf
      %v4969 = vsel %vm4954, %v4947, -inf
      %v4970 = vmax.f32 %v4965, %v4968
      %v4971 = vmax.f32 %v4970, %v4969
      %v4972 = vsel %vm4954, %v4948, -inf
      %v4973 = vsel %vm4954, %v4949, -inf
      %v4974 = vmax.f32 %v4969, %v4972
      %v4975 = vmax.f32 %v4974, %v4973
      %v4976 = vsel %vm4954, %v4950, -inf
      %v4977 = vsel %vm4954, %v4951, -inf
      %v4978 = vmax.f32 %v4973, %v4976
      %v4979 = vmax.f32 %v4978, %v4977
      %v4980 = vsel %vm4954, %v4952, -inf
      %v4981 = vsel %vm4954, %v4953, -inf
      %v4982 = vmax.f32 %v4977, %v4980
      %v4983 = vmax.f32 %v4982, %v4981
      %v4991 = vrot.slane %v4959, 1
      %v4992 = vrot.slane %v4959, 2
      %v4993 = vrot.slane %v4959, 3
      %v4994 = vrot.slane %v4959, 4
      %v4995 = vrot.slane %v4959, 5
      %v4996 = vrot.slane %v4959, 6
      %v4997 = vrot.slane %v4963, 1
      %v4998 = vrot.slane %v4963, 2
      %v4999 = vrot.slane %v4963, 3
      %v5000 = vrot.slane %v4963, 4
      %v5001 = vrot.slane %v4963, 5
      %v5002 = vrot.slane %v4963, 6
      %v5003 = vrot.slane %v4967, 1
      %v5004 = vrot.slane %v4967, 2
      %v5005 = vrot.slane %v4967, 3
      %v5006 = vrot.slane %v4967, 4
      %v5007 = vrot.slane %v4967, 5
      %v5008 = vrot.slane %v4967, 6
      %v5009 = vrot.slane %v4971, 1
      %v5010 = vrot.slane %v4971, 2
      %v5011 = vrot.slane %v4971, 3
      %v5012 = vrot.slane %v4971, 4
      %v5013 = vrot.slane %v4971, 5
      %v5014 = vrot.slane %v4971, 6
      %v5015 = vrot.slane %v4975, 1
      %v5016 = vrot.slane %v4975, 2
      %v5017 = vrot.slane %v4975, 3
      %v5018 = vrot.slane %v4975, 4
      %v5019 = vrot.slane %v4975, 5
      %v5020 = vrot.slane %v4975, 6
      %v5021 = vrot.slane %v4979, 1
      %v5022 = vrot.slane %v4979, 2
      %v5023 = vrot.slane %v4979, 3
      %v5024 = vrot.slane %v4979, 4
      %v5025 = vrot.slane %v4979, 5
      %v5026 = vrot.slane %v4979, 6
      %v5027 = vrot.slane %v4983, 1
      %v5028 = vrot.slane %v4983, 2
      %v5029 = vrot.slane %v4983, 3
      %v5030 = vrot.slane %v4983, 4
      %v5031 = vrot.slane %v4983, 5
      %v5032 = vrot.slane %v4983, 6
      %5033 = vst [vmem:[#allocation1] ss:$9 sm:$0xff] %v4959
      %s5034 = scalar_lea.vmem [#allocation1], 1
      %5035 = vst [vmem:[%s5034] ss:$9 sm:$0xff] %v4991
      %s5036 = scalar_lea.vmem [#allocation1], 2
      %5037 = vst [vmem:[%s5036] ss:$9 sm:$0xff] %v4992
      %s5038 = scalar_lea.vmem [#allocation1], 3
      %5039 = vst [vmem:[%s5038] ss:$9 sm:$0xff] %v4993
      %s5040 = scalar_lea.vmem [#allocation1], 4
      %5041 = vst [vmem:[%s5040] ss:$9 sm:$0xff] %v4994
      %s5042 = scalar_lea.vmem [#allocation1], 5
      %5043 = vst [vmem:[%s5042] ss:$9 sm:$0xff] %v4995
      %s5044 = scalar_lea.vmem [#allocation1], 6
      %5045 = vst [vmem:[%s5044] ss:$9 sm:$0xff] %v4996
      %s5046 = scalar_lea.vmem [#allocation1], 7
      %5047 = vst [vmem:[%s5046] ss:$9 sm:$0xff] %v4963
      %v5048 = vld [vmem:[#allocation1] sm:$0xff]
      %5049 = vst [vmem:[#allocation1] ss:$9 sm:$0xff] %v4997
      %5050 = vst [vmem:[%s5034] ss:$9 sm:$0xff] %v4998
      %5051 = vst [vmem:[%s5036] ss:$9 sm:$0xff] %v4999
      %5052 = vst [vmem:[%s5038] ss:$9 sm:$0xff] %v5000
      %5053 = vst [vmem:[%s5040] ss:$9 sm:$0xff] %v5001
      %5054 = vst [vmem:[%s5042] ss:$9 sm:$0xff] %v5002
      %5055 = vst [vmem:[%s5044] ss:$9 sm:$0xff] %v4967
      %5056 = vst [vmem:[%s5046] ss:$9 sm:$0xff] %v5003
      %v5057 = vld [vmem:[#allocation1] sm:$0xff]
      %5058 = vst [vmem:[#allocation1] ss:$9 sm:$0xff] %v5004
      %5059 = vst [vmem:[%s5034] ss:$9 sm:$0xff] %v5005
      %5060 = vst [vmem:[%s5036] ss:$9 sm:$0xff] %v5006
      %5061 = vst [vmem:[%s5038] ss:$9 sm:$0xff] %v5007
      %5062 = vst [vmem:[%s5040] ss:$9 sm:$0xff] %v5008
      %5063 = vst [vmem:[%s5042] ss:$9 sm:$0xff] %v4971
      %5064 = vst [vmem:[%s5044] ss:$9 sm:$0xff] %v5009
      %5065 = vst [vmem:[%s5046] ss:$9 sm:$0xff] %v5010
      %v5066 = vld [vmem:[#allocation1] sm:$0xff]
      %5067 = vst [vmem:[#allocation1] ss:$9 sm:$0xff] %v5011
      %5068 = vst [vmem:[%s5034] ss:$9 sm:$0xff] %v5012
      %5069 = vst [vmem:[%s5036] ss:$9 sm:$0xff] %v5013
      %5070 = vst [vmem:[%s5038] ss:$9 sm:$0xff] %v5014
      %5071 = vst [vmem:[%s5040] ss:$9 sm:$0xff] %v4975
      %5072 = vst [vmem:[%s5042] ss:$9 sm:$0xff] %v5015
      %5073 = vst [vmem:[%s5044] ss:$9 sm:$0xff] %v5016
      %5074 = vst [vmem:[%s5046] ss:$9 sm:$0xff] %v5017
      %v5075 = vld [vmem:[#allocation1] sm:$0xff]
      %5076 = vst [vmem:[#allocation1] ss:$9 sm:$0xff] %v5018
      %5077 = vst [vmem:[%s5034] ss:$9 sm:$0xff] %v5019
      %5078 = vst [vmem:[%s5036] ss:$9 sm:$0xff] %v5020
      %5079 = vst [vmem:[%s5038] ss:$9 sm:$0xff] %v4979
      %5080 = vst [vmem:[%s5040] ss:$9 sm:$0xff] %v5021
      %5081 = vst [vmem:[%s5042] ss:$9 sm:$0xff] %v5022
      %5082 = vst [vmem:[%s5044] ss:$9 sm:$0xff] %v5023
      %5083 = vst [vmem:[%s5046] ss:$9 sm:$0xff] %v5024
      %v5084 = vld [vmem:[#allocation1] sm:$0xff]
      %5085 = vst [vmem:[#allocation1] ss:$9 sm:$0xff] %v5025
      %5086 = vst [vmem:[%s5034] ss:$9 sm:$0xff] %v5026
      %5087 = vst [vmem:[%s5036] ss:$9 sm:$0xff] %v4983
      %5088 = vst [vmem:[%s5038] ss:$9 sm:$0xff] %v5027
      %5089 = vst [vmem:[%s5040] ss:$9 sm:$0xff] %v5028
      %5090 = vst [vmem:[%s5042] ss:$9 sm:$0xff] %v5029
      %5091 = vst [vmem:[%s5044] ss:$9 sm:$0xff] %v5030
      %5092 = vst [vmem:[%s5046] ss:$9 sm:$0xff] %v5031
      %v5093 = vld [vmem:[#allocation1] sm:$0xff]
      %5094 = vst [vmem:[#allocation1] ss:$9 sm:$0xff] %v5032
      %v5095 = vld [vmem:[#allocation1] sm:$0xff]
      %5103 = vxpose.xlu0.b32.start [1/16] %v5048, 128
      %5104 = vxpose.xlu0.b32.cont [2/16] %v5057, 128
      %5105 = vxpose.xlu0.b32.cont [3/16] %v5066, 128
      %5106 = vxpose.xlu0.b32.cont [4/16] %v5075, 128
      %5107 = vxpose.xlu0.b32.cont [5/16] %v5084, 128
      %5108 = vxpose.xlu0.b32.cont [6/16] %v5093, 128
      %5109 = vxpose.xlu0.b32.cont [7/16] %v5095, 128
      %5110 = vxpose.xlu0.b32.cont [8/16] 0.0, 128
      %5111 = vxpose.xlu0.b32.cont [9/16] 0.0, 128
      %5112 = vxpose.xlu0.b32.cont [10/16] 0.0, 128
      %5113 = vxpose.xlu0.b32.cont [11/16] 0.0, 128
      %5114 = vxpose.xlu0.b32.cont [12/16] 0.0, 128
      %5115 = vxpose.xlu0.b32.cont [13/16] 0.0, 128
      %5116 = vxpose.xlu0.b32.cont [14/16] 0.0, 128
      %5117 = vxpose.xlu0.b32.cont [15/16] 0.0, 128
      %5118 = vxpose.xlu0.b32.end [16/16] 0.0, 128
      %v5119 = vpop.trf.xlu0
      %v5120 = vpop.trf.xlu0
      %v5121 = vpop.trf.xlu0
      %v5122 = vpop.trf.xlu0
      %v5123 = vpop.trf.xlu0
      %v5124 = vpop.trf.xlu0
      %v5125 = vpop.trf.xlu0
      %v5126 = vpop.trf.xlu0
      %v5127 = vpop.trf.xlu0
      %v5128 = vpop.trf.xlu0
      %v5129 = vpop.trf.xlu0
      %v5130 = vpop.trf.xlu0
      %v5131 = vpop.trf.xlu0
      %v5132 = vpop.trf.xlu0
      %v5133 = vpop.trf.xlu0
      %v5134 = vpop.trf.xlu0
      %vm5135 = vcmask 400384
      %5136 = vst.msk [vmem:[%s170] sm:$0xff] %vm5135, %v5119
      %5137 = vst.msk [vmem:[%s170 + $0x8] sm:$0xff] %vm5135, %v5120
      %5138 = vst.msk [vmem:[%s170 + $0x10] sm:$0xff] %vm5135, %v5121
      %5139 = vst.msk [vmem:[%s170 + $0x18] sm:$0xff] %vm5135, %v5122
      %5140 = vst.msk [vmem:[%s170 + $0x20] sm:$0xff] %vm5135, %v5123
      %5141 = vst.msk [vmem:[%s170 + $0x28] sm:$0xff] %vm5135, %v5124
      %5142 = vst.msk [vmem:[%s170 + $0x30] sm:$0xff] %vm5135, %v5125
      %5143 = vst.msk [vmem:[%s170 + $0x38] sm:$0xff] %vm5135, %v5126
      %p5144 = scmp.lt.s32.totalorder %s14, 1
      %s5145 = scalar_select %p5144, %s14, 1
      %s5146 = smul.addr %s5145, 8
      %s5147 = smul.addr %s5146, 8
      %s5148 = scalar_lea.vmem %s3, %s5147
      // Predicated region
      $region33: #{model_forward.1} parent=31 // pred_check
        %p5149 = pneg %p100
      $region34: #{model_forward.1} parent=31 // pred_check_branch
        %5151 = sbr.rel (%p5149) target = $region36
      $region35: #{model_forward.1} parent=31 // pred_region
        _
      $region36: #{model_forward.1} parent=31 // pred_fallthru
        _
    $region32: #{model_forward.1} parent=5 // pred_fallthru
      _
    %p5152 = scmp.le.s32.totalorder 2, %s9
    // Predicated region
    $region37: #{model_forward.1} parent=5 // pred_check
      %p5153 = pneg %p5152
    $region38: #{model_forward.1} parent=5 // pred_check_branch
      %5155 = sbr.rel (%p5153) target = $region40
    $region39: #{model_forward.1} parent=5 // pred_region
      %s5156 = ssub.s32 %s9, 2
      // Predicated region
      $region41: #{model_forward.1} parent=39 // pred_check
        %p5157 = pneg %p106
      $region42: #{model_forward.1} parent=39 // pred_check_branch
        %5159 = sbr.rel (%p5157) target = $region44
      $region43: #{model_forward.1} parent=39 // pred_region
        %p5160 = scmp.lt.s32.totalorder %s15, 1
        %s5161 = scalar_select %p5160, %s15, 1
        %s5162 = smul.addr %s5161, 8
        %s5163 = smul.addr %s5162, 8
        %s5164 = scalar_lea.vmem %s3, %s5163
      $region44: #{model_forward.1} parent=39 // pred_fallthru
        _
    $region40: #{model_forward.1} parent=5 // pred_fallthru
      _
  $region6: #{model_forward.1} parent=0 // loop_footer
    %s13 = sadd.s32 1, %s9
  $region7: #{model_forward.1} parent=0 // loop_footer_branch
    %8 = sbr.rel target = $region3
  $region8: #{model_forward.1} parent=0 // loop_exit
    _

</llo_original>
